<compile_context>
chip_gen: v6e
topology: v6e:2x2x1
jax: 0.10.0
libtpu: 0.0.40
codegen_flags: <defaults>
</compile_context>

<pallas_src>
import jax
import jax.numpy as jnp
from jax import lax
from jax.experimental import pallas as pl
from jax.experimental.pallas import tpu as pltpu


# ----------------------------- static tap plan ----------------------------- #

def _branch_plan(h, w, dilations):
    """Static description of which 3x3 taps are alive for each dilated branch.

    Branch indices: 0 = pooled, 1 = conv2 (1x1), 2 + j = conv(3 + j).
    A +/-d row (col) tap only ever reads zero padding when d >= H (W), so it
    is dropped from both the weights and the compute.
    """
    centre_branches = [1]           # branches served by the fused centre matmul
    stacked = []                    # (branch, d, groups=((dx, (dy, ...)), ...))
    for j, d in enumerate(dilations):
        dys = tuple([-d, 0, d] if d < h else [0])
        dxs = tuple([-d, 0, d] if d < w else [0])
        if len(dys) == 1 and len(dxs) == 1:
            centre_branches.append(2 + j)        # degenerates to a 1x1 conv
        else:
            stacked.append((2 + j, d, tuple((dx, dys) for dx in dxs)))
    pad_r = max([d for d in dilations if d < h], default=0)
    pad_c = max([d for d in dilations if d < w], default=0)
    return centre_branches, stacked, pad_r, pad_c


# ----------------------------- Pallas kernel ------------------------------ #

def _make_aspp_kernel(th, h, w, cin, cout, pad_r, pad_c,
                      centre_branches, stacked, compute_dtype):
    tile_m = th * w
    hp, wp = h + 2 * pad_r, w + 2 * pad_c
    n_stacked = len(stacked)
    n_conv = len(centre_branches) + n_stacked    # conv2 .. conv5

    def kernel(f1_ref, ximg_ref, wc_ref, *rest):
        wo_refs = rest[:n_stacked]
        bias_ref = rest[n_stacked]
        out_ref = rest[n_stacked + 1]
        xpad = rest[n_stacked + 2]
        slab = rest[n_stacked + 3] if n_stacked else None

        i = pl.program_id(1)
        r0 = pl.multiple_of(i * th, th)

        # (Re)build the zero-padded image in VMEM once per batch element.  The
        # HBM->VMEM copy of the image itself is done by the Pallas pipeline
        # (block index depends only on the batch axis -> one fetch per image,
        # prefetched behind the previous image's last row tile).
        @pl.when(i == 0)
        def _():
            zdt = compute_dtype
            if pad_r > 0:
                xpad[pl.ds(0, pad_r), :, :] = jnp.zeros((pad_r, wp, cin), zdt)
                xpad[pl.ds(pad_r + h, pad_r), :, :] = jnp.zeros((pad_r, wp, cin), zdt)
            if pad_c > 0:
                xpad[:, pl.ds(0, pad_c), :] = jnp.zeros((hp, pad_c, cin), zdt)
                xpad[:, pl.ds(pad_c + w, pad_c), :] = jnp.zeros((hp, pad_c, cin), zdt)
            xpad[pl.ds(pad_r, h), pl.ds(pad_c, w), :] = ximg_ref[0]

        # Centre view shared by conv2 and every "centre only" dilated branch.
        x_c = xpad[pl.ds(pad_r + r0, th), pl.ds(pad_c, w), :].reshape(tile_m, cin)

        results = {}

        # conv2 (1x1) + all centre-only dilated convs in ONE wide-N MXU dot.
        y_c = jnp.dot(x_c, wc_ref[...], preferred_element_type=jnp.float32)
        for col, bi in enumerate(centre_branches):
            results[bi] = y_c[:, col * cout:(col + 1) * cout]

        # Dilated branches with live off-centre taps: K-stack all live taps of
        # one dilation (centre included) into a single MXU matmul.  The column
        # shift (dx) is hoisted once per dx; row taps are slices of that block.
        for s_idx, (bi, _, groups) in enumerate(stacked):
            t = 0
            for dx, dys in groups:
                lo, hi = min(dys), max(dys)
                colblk = xpad[pl.ds(pad_r + r0 + lo, th + hi - lo),
                              pl.ds(pad_c + dx, w), :]
                for dy in dys:
                    a = dy - lo
                    slab[:, t * cin:(t + 1) * cin] = (
                        colblk[a:a + th].reshape(tile_m, cin))
                    t += 1
            k_j = t * cin
            results[bi] = jnp.dot(slab[:, 0:k_j], wo_refs[s_idx][...],
                                  preferred_element_type=jnp.float32)

        # Epilogue: pooled-branch broadcast + (folded-BN bias, ReLU) per conv
        # branch, each written to its 128-aligned column slice of the slab.
        out_ref[0, :, :, 0:cout] = jnp.broadcast_to(
            f1_ref[...], (th, w, cout)).astype(out_ref.dtype)
        for bi in range(1, 1 + n_conv):
            y = results[bi] + bias_ref[:, (bi - 1) * cout:bi * cout]
            y = jnp.maximum(y, 0.0)
            out_ref[0, :, :, bi * cout:(bi + 1) * cout] = (
                y.reshape(th, w, cout).astype(out_ref.dtype))

    return kernel


# ------------------------------ host glue --------------------------------- #

def _bn_fold(bn, eps=1e-5):
    scale = bn["gamma"] / jnp.sqrt(bn["var"] + eps)
    bias = bn["beta"] - bn["mean"] * scale
    return scale.astype(jnp.float32), bias.astype(jnp.float32)


def _folded_weights(params, cin, cout, dilations, centre_branches, stacked, dtype):
    """BN-scale-folded conv2..conv5 weights in the kernel's stacked layouts."""
    names = ["conv2"] + ["conv%d" % (3 + j) for j in range(len(dilations))]
    scales, biases = [], []
    for name in names:
        s, b = _bn_fold(params[name]["bn"])
        scales.append(s)
        biases.append(b)
    bias_all = jnp.concatenate(biases).reshape(1, len(names) * cout).astype(jnp.float32)

    def tap(bi, ky, kx):
        wt = params[names[bi - 1]]["w"]
        m = wt.reshape(cout, cin) if wt.shape[-1] == 1 else wt[:, :, ky, kx]
        return m.T * scales[bi - 1][None, :]                    # (cin, cout) f32

    wc = jnp.concatenate([tap(bi, 1, 1) for bi in centre_branches],
                         axis=1).astype(dtype)                  # (cin, n_c*cout)
    wo_list = []
    for bi, d, groups in stacked:
        parts = [tap(bi, dy // d + 1, dx // d + 1)
                 for dx, dys in groups for dy in dys]
        wo_list.append(jnp.concatenate(parts, axis=0).astype(dtype))  # (K_j, cout)
    return wc, wo_list, bias_all


def _pick_tile_h(n, h, w):
    """Row-tile height: >= 4 grid steps (>= 2 per megacore TC), MXU-friendly M."""
    divs = [d for d in range(1, h + 1) if h % d == 0]
    cands = [d for d in divs if n * (h // d) >= 4] or divs
    good = ([d for d in cands if 128 <= d * w <= 4096]
            or [d for d in cands if d * w <= 4096] or cands)
    return max(good)


def aspp_forward(x_nchw, params, dilations=(12, 24, 36),
                 compute_dtype=jnp.bfloat16, out_dtype=jnp.bfloat16):
    n, cin, h, w = x_nchw.shape
    cout = params["conv2"]["w"].shape[0]
    n_conv = 1 + len(dilations)
    n_branch = 1 + n_conv
    assert w % 8 == 0 and cout % 128 == 0, "demo kernel assumes lane/sublane-friendly W, Cout"

    x_f32 = jnp.transpose(x_nchw, (0, 2, 3, 1)).astype(jnp.float32)     # NHWC

    # Branch 1 (global avg pool -> 1x1 conv -> BN -> ReLU): M = batch rows only,
    # done in plain JAX.  align_corners bilinear upsampling from a 1x1 source is
    # a pure broadcast, folded into the kernel's output write.
    s1, b1 = _bn_fold(params["conv1"]["bn"])
    w1f = params["conv1"]["w"].reshape(cout, cin).T * s1[None, :]
    pooled = jnp.mean(x_f32, axis=(1, 2))
    f1 = jnp.maximum(jnp.dot(pooled, w1f, precision=lax.Precision.HIGHEST)
                     + b1[None, :], 0.0).reshape(n, 1, cout)

    centre_branches, stacked, pad_r, pad_c = _branch_plan(h, w, dilations)
    wc, wo_list, bias_all = _folded_weights(
        params, cin, cout, dilations, centre_branches, stacked, compute_dtype)

    x_nhwc = x_f32.astype(compute_dtype)
    th = _pick_tile_h(n, h, w)
    tile_m = th * w
    hp, wp = h + 2 * pad_r, w + 2 * pad_c

    kernel = _make_aspp_kernel(th, h, w, cin, cout, pad_r, pad_c,
                               centre_branches, stacked, compute_dtype)

    in_specs = [
        pl.BlockSpec((1, 1, cout), lambda b, i: (b, 0, 0)),               # f1 (pooled branch)
        pl.BlockSpec((1, h, w, cin), lambda b, i: (b, 0, 0, 0)),          # image: 1 fetch / batch
        pl.BlockSpec(wc.shape, lambda b, i: (0, 0)),                      # fused centre weights
    ]
    # TODO(synk): single-buffer constant weight inputs (pl.Buffered(1)) for very
    #             large Cin so the footprint still fits v7x's 64 MiB VMEM.
    for wo in wo_list:
        in_specs.append(pl.BlockSpec(wo.shape, lambda b, i: (0, 0)))      # K-stacked tap weights
    in_specs.append(pl.BlockSpec(bias_all.shape, lambda b, i: (0, 0)))    # folded BN biases

    scratch_shapes = [pltpu.VMEM((hp, wp, cin), compute_dtype)]           # zero-padded image
    if stacked:
        max_k = max(wo.shape[0] for wo in wo_list)
        scratch_shapes.append(pltpu.VMEM((tile_m, max_k), compute_dtype))  # K-stack staging slab

    out_nhwc = pl.pallas_call(
        kernel,
        out_shape=jax.ShapeDtypeStruct((n, h, w, n_branch * cout), out_dtype),
        grid_spec=pltpu.PrefetchScalarGridSpec(
            num_scalar_prefetch=0,
            grid=(n, h // th),
            in_specs=in_specs,
            out_specs=pl.BlockSpec((1, th, w, n_branch * cout),
                                   lambda b, i: (b, i, 0, 0)),
            scratch_shapes=scratch_shapes,
        ),
        compiler_params=pltpu.CompilerParams(
            # Batch axis may be split across megacore TCs; the row-tile axis is
            # sequential so the per-image padded scratch can be reused.
            dimension_semantics=("parallel", "arbitrary"),
            vmem_limit_bytes=32 * 1024 * 1024,   # generation-safe (<= v7x 64 MiB); ~1 MiB used here
        ),
    )(f1, x_nhwc, wc, *wo_list, bias_all)

    return jnp.transpose(out_nhwc, (0, 3, 1, 2))   # NHWC -> NCHW (module returns NCHW)


# --------------------------- parameter setup ------------------------------ #

def init_params(key, in_planes, inner_planes):
    ks = jax.random.split(key, 10)

    def bn(k):
        k1, k2, k3, k4 = jax.random.split(k, 4)
        return dict(
            gamma=jax.random.uniform(k1, (inner_planes,), minval=0.5, maxval=1.5),
            beta=jax.random.normal(k2, (inner_planes,)) * 0.1,
            mean=jax.random.normal(k3, (inner_planes,)) * 0.1,
            var=jax.random.uniform(k4, (inner_planes,), minval=0.5, maxval=1.5),
        )

    p = {}
    p["conv1"] = dict(w=jax.random.normal(ks[0], (inner_planes, in_planes, 1, 1)) * 0.1, bn=bn(ks[1]))
    p["conv2"] = dict(w=jax.random.normal(ks[2], (inner_planes, in_planes, 1, 1)) * 0.1, bn=bn(ks[3]))
    p["conv3"] = dict(w=jax.random.normal(ks[4], (inner_planes, in_planes, 3, 3)) * 0.1, bn=bn(ks[5]))
    p["conv4"] = dict(w=jax.random.normal(ks[6], (inner_planes, in_planes, 3, 3)) * 0.1, bn=bn(ks[7]))
    p["conv5"] = dict(w=jax.random.normal(ks[8], (inner_planes, in_planes, 3, 3)) * 0.1, bn=bn(ks[9]))
    return p


# --------------------------- pure-JAX reference ---------------------------- #

def reference_forward(x, params, dilations=(12, 24, 36)):
    def bn_relu(y, bn, eps=1e-5):
        scale = bn["gamma"] / jnp.sqrt(bn["var"] + eps)
        bias = bn["beta"] - bn["mean"] * scale
        y = y * scale[None, :, None, None] + bias[None, :, None, None]
        return jnp.maximum(y, 0.0)

    def conv(x_, w_, dil, pad_):
        return lax.conv_general_dilated(
            x_, w_, (1, 1), [(pad_, pad_), (pad_, pad_)], rhs_dilation=(dil, dil),
            dimension_numbers=("NCHW", "OIHW", "NCHW"),
            precision=lax.Precision.HIGHEST)

    n, c, h, w_ = x.shape
    pooled = jnp.mean(x, axis=(2, 3), keepdims=True)
    f1 = bn_relu(conv(pooled, params["conv1"]["w"], 1, 0), params["conv1"]["bn"])
    f1 = jnp.broadcast_to(f1, (n, f1.shape[1], h, w_))
    f2 = bn_relu(conv(x, params["conv2"]["w"], 1, 0), params["conv2"]["bn"])
    feats = [f1, f2]
    for name, d in zip(("conv3", "conv4", "conv5"), dilations):
        feats.append(bn_relu(conv(x, params[name]["w"], d, d), params[name]["bn"]))
    return jnp.concatenate(feats, axis=1)


# --------------------------------- main ------------------------------------ #

if __name__ == "__main__":
    B, C_IN, H, W = 2, 32, 16, 16
    INNER = 128
    DILATIONS = (12, 24, 36)

    key = jax.random.PRNGKey(0)
    kx, kp = jax.random.split(key)
    x = jax.random.normal(kx, (B, C_IN, H, W), dtype=jnp.float32)
    params = init_params(kp, C_IN, INNER)

    fwd = jax.jit(lambda xx: aspp_forward(xx, params, DILATIONS))
    out = jax.block_until_ready(fwd(x))

    expected_shape = (B, (len(DILATIONS) + 2) * INNER, H, W)
    assert out.shape == expected_shape, (out.shape, expected_shape)

    ref = jax.block_until_ready(reference_forward(x, params, DILATIONS))
    out_f32 = out.astype(jnp.float32)
    max_err = float(jnp.max(jnp.abs(out_f32 - ref)))
    # bf16 activations/weights on the MXU (f32 accumulation) + bf16 output slab
    # -> compare against the f32 reference with bf16-appropriate tolerance.
    assert jnp.allclose(out_f32, ref, rtol=5e-2, atol=5e-2), max_err

    print("KERNEL_OK")
</pallas_src>

<mosaic_0001>
module attributes {stable_mosaic.version = 11 : i64} {
  func.func @kernel(%arg0: i32, %arg1: i32, %arg2: memref<1x1x128xf32, #tpu.memory_space<vmem>>, %arg3: memref<1x16x16x32xbf16, #tpu.memory_space<vmem>>, %arg4: memref<32x384xbf16, #tpu.memory_space<vmem>>, %arg5: memref<288x128xbf16, #tpu.memory_space<vmem>>, %arg6: memref<1x512xf32, #tpu.memory_space<vmem>>, %arg7: memref<1x8x16x640xbf16, #tpu.memory_space<vmem>>, %arg8: memref<40x40x32xbf16, #tpu.memory_space<vmem>>, %arg9: memref<128x288xbf16, #tpu.memory_space<vmem>>) attributes {dimension_semantics = [#tpu.dimension_semantics<parallel>, #tpu.dimension_semantics<arbitrary>], iteration_bounds = array<i64: 2, 2>, scalar_prefetch = 0 : i64, scratch_operands = 2 : i64, tpu.core_type = #tpu.core_type<tc>, window_params = [{transform_indices = @transform_0, window_bounds = array<i64: 1, 1, 128>}, {transform_indices = @transform_1, window_bounds = array<i64: 1, 16, 16, 32>}, {pipeline_mode = #tpu.pipeline_mode<synchronous>, transform_indices = @transform_2, window_bounds = array<i64: 32, 384>}, {pipeline_mode = #tpu.pipeline_mode<synchronous>, transform_indices = @transform_3, window_bounds = array<i64: 288, 128>}, {pipeline_mode = #tpu.pipeline_mode<synchronous>, transform_indices = @transform_4, window_bounds = array<i64: 1, 512>}, {transform_indices = @transform_5, window_bounds = array<i64: 1, 8, 16, 640>}]} {
    %c8_i32 = arith.constant 8 : i32
    %0 = arith.muli %arg1, %c8_i32 : i32
    %1 = tpu.assume_multiple %0, 8 : i32
    %c0_i32 = arith.constant 0 : i32
    %2 = arith.cmpi eq, %arg1, %c0_i32 : i32
    %3 = arith.extui %2 : i1 to i32
    %c0_i32_0 = arith.constant 0 : i32
    %4 = arith.cmpi ne, %3, %c0_i32_0 : i32
    scf.if %4 {
      %cst_61 = arith.constant 0.000000e+00 : bf16
      %103 = vector.broadcast %cst_61 : bf16 to vector<12x40x32xbf16>
      %c0_62 = arith.constant 0 : index
      %c0_63 = arith.constant 0 : index
      %c0_64 = arith.constant 0 : index
      %104 = vector.load %arg8[%c0_62, %c0_63, %c0_64] : memref<40x40x32xbf16, #tpu.memory_space<vmem>>, vector<12x40x32xbf16>
      tpu.vector_store %arg8[%c0_62, %c0_63, %c0_64], %103 {strides = array<i32>} : memref<40x40x32xbf16, #tpu.memory_space<vmem>>, vector<12x40x32xbf16>,
      %cst_65 = arith.constant 0.000000e+00 : bf16
      %105 = vector.broadcast %cst_65 : bf16 to vector<12x40x32xbf16>
      %c28 = arith.constant 28 : index
      %c0_66 = arith.constant 0 : index
      %c0_67 = arith.constant 0 : index
      %106 = vector.load %arg8[%c28, %c0_66, %c0_67] : memref<40x40x32xbf16, #tpu.memory_space<vmem>>, vector<12x40x32xbf16>
      tpu.vector_store %arg8[%c28, %c0_66, %c0_67], %105 {strides = array<i32>} : memref<40x40x32xbf16, #tpu.memory_space<vmem>>, vector<12x40x32xbf16>,
      %cst_68 = arith.constant 0.000000e+00 : bf16
      %107 = vector.broadcast %cst_68 : bf16 to vector<40x12x32xbf16>
      %c0_69 = arith.constant 0 : index
      %c0_70 = arith.constant 0 : index
      %c0_71 = arith.constant 0 : index
      %108 = vector.load %arg8[%c0_69, %c0_70, %c0_71] : memref<40x40x32xbf16, #tpu.memory_space<vmem>>, vector<40x12x32xbf16>
      tpu.vector_store %arg8[%c0_69, %c0_70, %c0_71], %107 {strides = array<i32>} : memref<40x40x32xbf16, #tpu.memory_space<vmem>>, vector<40x12x32xbf16>,
      %cst_72 = arith.constant 0.000000e+00 : bf16
      %109 = vector.broadcast %cst_72 : bf16 to vector<40x12x32xbf16>
      %c0_73 = arith.constant 0 : index
      %c28_74 = arith.constant 28 : index
      %c0_75 = arith.constant 0 : index
      %110 = vector.load %arg8[%c0_73, %c28_74, %c0_75] : memref<40x40x32xbf16, #tpu.memory_space<vmem>>, vector<40x12x32xbf16>
      tpu.vector_store %arg8[%c0_73, %c28_74, %c0_75], %109 {strides = array<i32>} : memref<40x40x32xbf16, #tpu.memory_space<vmem>>, vector<40x12x32xbf16>,
      %c0_76 = arith.constant 0 : index
      %c0_77 = arith.constant 0 : index
      %c0_78 = arith.constant 0 : index
      %c0_79 = arith.constant 0 : index
      %111 = vector.load %arg3[%c0_76, %c0_77, %c0_78, %c0_79] : memref<1x16x16x32xbf16, #tpu.memory_space<vmem>>, vector<1x16x16x32xbf16>
      %112 = vector.shape_cast %111 : vector<1x16x16x32xbf16> to vector<16x16x32xbf16>
      %c12_80 = arith.constant 12 : index
      %c12_81 = arith.constant 12 : index
      %c0_82 = arith.constant 0 : index
      %113 = vector.load %arg8[%c12_80, %c12_81, %c0_82] : memref<40x40x32xbf16, #tpu.memory_space<vmem>>, vector<16x16x32xbf16>
      tpu.vector_store %arg8[%c12_80, %c12_81, %c0_82], %112 {strides = array<i32>} : memref<40x40x32xbf16, #tpu.memory_space<vmem>>, vector<16x16x32xbf16>,
    } else {
    }
    %c12_i32 = arith.constant 12 : i32
    %5 = arith.addi %c12_i32, %1 : i32
    %6 = arith.index_cast %5 : i32 to index
    %c12 = arith.constant 12 : index
    %c0 = arith.constant 0 : index
    %7 = vector.load %arg8[%6, %c12, %c0] : memref<40x40x32xbf16, #tpu.memory_space<vmem>>, vector<8x16x32xbf16>
    %8 = vector.shape_cast %7 : vector<8x16x32xbf16> to vector<128x32xbf16>
    %c0_1 = arith.constant 0 : index
    %c0_2 = arith.constant 0 : index
    %9 = vector.load %arg4[%c0_1, %c0_2] : memref<32x384xbf16, #tpu.memory_space<vmem>>, vector<32x384xbf16>
    %cst = arith.constant dense<0.000000e+00> : vector<128x384xf32>
    %10 = tpu.matmul %8, %9, %cst {dimension_numbers = #tpu.dot_dimension_numbers<[1], [0], [0], [1], [0, 0, 1, 1], [], []>} : vector<128x32xbf16>, vector<32x384xbf16>, vector<128x384xf32> -> vector<128x384xf32>
    %11 = vector.extract_strided_slice %10 {offsets = [0, 0], sizes = [128, 128], strides = [1, 1]} : vector<128x384xf32> to vector<128x128xf32>
    %12 = vector.extract_strided_slice %10 {offsets = [0, 128], sizes = [128, 128], strides = [1, 1]} : vector<128x384xf32> to vector<128x128xf32>
    %13 = vector.extract_strided_slice %10 {offsets = [0, 256], sizes = [128, 128], strides = [1, 1]} : vector<128x384xf32> to vector<128x128xf32>
    %c12_i32_3 = arith.constant 12 : i32
    %14 = arith.addi %c12_i32_3, %1 : i32
    %c-12_i32 = arith.constant -12 : i32
    %15 = arith.addi %14, %c-12_i32 : i32
    %16 = arith.index_cast %15 : i32 to index
    %c0_4 = arith.constant 0 : index
    %c0_5 = arith.constant 0 : index
    %17 = vector.load %arg8[%16, %c0_4, %c0_5] : memref<40x40x32xbf16, #tpu.memory_space<vmem>>, vector<32x16x32xbf16>
    %18 = vector.extract_strided_slice %17 {offsets = [0, 0, 0], sizes = [8, 16, 32], strides = [1, 1, 1]} : vector<32x16x32xbf16> to vector<8x16x32xbf16>
    %19 = vector.shape_cast %18 : vector<8x16x32xbf16> to vector<128x32xbf16>
    %c0_6 = arith.constant 0 : index
    %c0_7 = arith.constant 0 : index
    %20 = vector.load %arg9[%c0_6, %c0_7] : memref<128x288xbf16, #tpu.memory_space<vmem>>, vector<128x32xbf16>
    tpu.vector_store %arg9[%c0_6, %c0_7], %19 {strides = array<i32>} : memref<128x288xbf16, #tpu.memory_space<vmem>>, vector<128x32xbf16>,
    %21 = vector.extract_strided_slice %17 {offsets = [12, 0, 0], sizes = [8, 16, 32], strides = [1, 1, 1]} : vector<32x16x32xbf16> to vector<8x16x32xbf16>
    %22 = vector.shape_cast %21 : vector<8x16x32xbf16> to vector<128x32xbf16>
    %c0_8 = arith.constant 0 : index
    %c32 = arith.constant 32 : index
    %23 = vector.load %arg9[%c0_8, %c32] : memref<128x288xbf16, #tpu.memory_space<vmem>>, vector<128x32xbf16>
    tpu.vector_store %arg9[%c0_8, %c32], %22 {strides = array<i32>} : memref<128x288xbf16, #tpu.memory_space<vmem>>, vector<128x32xbf16>,
    %24 = vector.extract_strided_slice %17 {offsets = [24, 0, 0], sizes = [8, 16, 32], strides = [1, 1, 1]} : vector<32x16x32xbf16> to vector<8x16x32xbf16>
    %25 = vector.shape_cast %24 : vector<8x16x32xbf16> to vector<128x32xbf16>
    %c0_9 = arith.constant 0 : index
    %c64 = arith.constant 64 : index
    %26 = vector.load %arg9[%c0_9, %c64] : memref<128x288xbf16, #tpu.memory_space<vmem>>, vector<128x32xbf16>
    tpu.vector_store %arg9[%c0_9, %c64], %25 {strides = array<i32>} : memref<128x288xbf16, #tpu.memory_space<vmem>>, vector<128x32xbf16>,
    %c12_i32_10 = arith.constant 12 : i32
    %27 = arith.addi %c12_i32_10, %1 : i32
    %c-12_i32_11 = arith.constant -12 : i32
    %28 = arith.addi %27, %c-12_i32_11 : i32
    %29 = arith.index_cast %28 : i32 to index
    %c12_12 = arith.constant 12 : index
    %c0_13 = arith.constant 0 : index
    %30 = vector.load %arg8[%29, %c12_12, %c0_13] : memref<40x40x32xbf16, #tpu.memory_space<vmem>>, vector<32x16x32xbf16>
    %31 = vector.extract_strided_slice %30 {offsets = [0, 0, 0], sizes = [8, 16, 32], strides = [1, 1, 1]} : vector<32x16x32xbf16> to vector<8x16x32xbf16>
    %32 = vector.shape_cast %31 : vector<8x16x32xbf16> to vector<128x32xbf16>
    %c0_14 = arith.constant 0 : index
    %c96 = arith.constant 96 : index
    %33 = vector.load %arg9[%c0_14, %c96] : memref<128x288xbf16, #tpu.memory_space<vmem>>, vector<128x32xbf16>
    tpu.vector_store %arg9[%c0_14, %c96], %32 {strides = array<i32>} : memref<128x288xbf16, #tpu.memory_space<vmem>>, vector<128x32xbf16>,
    %34 = vector.extract_strided_slice %30 {offsets = [12, 0, 0], sizes = [8, 16, 32], strides = [1, 1, 1]} : vector<32x16x32xbf16> to vector<8x16x32xbf16>
    %35 = vector.shape_cast %34 : vector<8x16x32xbf16> to vector<128x32xbf16>
    %c0_15 = arith.constant 0 : index
    %c128 = arith.constant 128 : index
    %36 = vector.load %arg9[%c0_15, %c128] : memref<128x288xbf16, #tpu.memory_space<vmem>>, vector<128x32xbf16>
    tpu.vector_store %arg9[%c0_15, %c128], %35 {strides = array<i32>} : memref<128x288xbf16, #tpu.memory_space<vmem>>, vector<128x32xbf16>,
    %37 = vector.extract_strided_slice %30 {offsets = [24, 0, 0], sizes = [8, 16, 32], strides = [1, 1, 1]} : vector<32x16x32xbf16> to vector<8x16x32xbf16>
    %38 = vector.shape_cast %37 : vector<8x16x32xbf16> to vector<128x32xbf16>
    %c0_16 = arith.constant 0 : index
    %c160 = arith.constant 160 : index
    %39 = vector.load %arg9[%c0_16, %c160] : memref<128x288xbf16, #tpu.memory_space<vmem>>, vector<128x32xbf16>
    tpu.vector_store %arg9[%c0_16, %c160], %38 {strides = array<i32>} : memref<128x288xbf16, #tpu.memory_space<vmem>>, vector<128x32xbf16>,
    %c12_i32_17 = arith.constant 12 : i32
    %40 = arith.addi %c12_i32_17, %1 : i32
    %c-12_i32_18 = arith.constant -12 : i32
    %41 = arith.addi %40, %c-12_i32_18 : i32
    %42 = arith.index_cast %41 : i32 to index
    %c24 = arith.constant 24 : index
    %c0_19 = arith.constant 0 : index
    %43 = vector.load %arg8[%42, %c24, %c0_19] : memref<40x40x32xbf16, #tpu.memory_space<vmem>>, vector<32x16x32xbf16>
    %44 = vector.extract_strided_slice %43 {offsets = [0, 0, 0], sizes = [8, 16, 32], strides = [1, 1, 1]} : vector<32x16x32xbf16> to vector<8x16x32xbf16>
    %45 = vector.shape_cast %44 : vector<8x16x32xbf16> to vector<128x32xbf16>
    %c0_20 = arith.constant 0 : index
    %c192 = arith.constant 192 : index
    %46 = vector.load %arg9[%c0_20, %c192] : memref<128x288xbf16, #tpu.memory_space<vmem>>, vector<128x32xbf16>
    tpu.vector_store %arg9[%c0_20, %c192], %45 {strides = array<i32>} : memref<128x288xbf16, #tpu.memory_space<vmem>>, vector<128x32xbf16>,
    %47 = vector.extract_strided_slice %43 {offsets = [12, 0, 0], sizes = [8, 16, 32], strides = [1, 1, 1]} : vector<32x16x32xbf16> to vector<8x16x32xbf16>
    %48 = vector.shape_cast %47 : vector<8x16x32xbf16> to vector<128x32xbf16>
    %c0_21 = arith.constant 0 : index
    %c224 = arith.constant 224 : index
    %49 = vector.load %arg9[%c0_21, %c224] : memref<128x288xbf16, #tpu.memory_space<vmem>>, vector<128x32xbf16>
    tpu.vector_store %arg9[%c0_21, %c224], %48 {strides = array<i32>} : memref<128x288xbf16, #tpu.memory_space<vmem>>, vector<128x32xbf16>,
    %50 = vector.extract_strided_slice %43 {offsets = [24, 0, 0], sizes = [8, 16, 32], strides = [1, 1, 1]} : vector<32x16x32xbf16> to vector<8x16x32xbf16>
    %51 = vector.shape_cast %50 : vector<8x16x32xbf16> to vector<128x32xbf16>
    %c0_22 = arith.constant 0 : index
    %c256 = arith.constant 256 : index
    %52 = vector.load %arg9[%c0_22, %c256] : memref<128x288xbf16, #tpu.memory_space<vmem>>, vector<128x32xbf16>
    tpu.vector_store %arg9[%c0_22, %c256], %51 {strides = array<i32>} : memref<128x288xbf16, #tpu.memory_space<vmem>>, vector<128x32xbf16>,
    %c0_23 = arith.constant 0 : index
    %c0_24 = arith.constant 0 : index
    %53 = vector.load %arg9[%c0_23, %c0_24] : memref<128x288xbf16, #tpu.memory_space<vmem>>, vector<128x288xbf16>
    %c0_25 = arith.constant 0 : index
    %c0_26 = arith.constant 0 : index
    %54 = vector.load %arg5[%c0_25, %c0_26] : memref<288x128xbf16, #tpu.memory_space<vmem>>, vector<288x128xbf16>
    %cst_27 = arith.constant dense<0.000000e+00> : vector<128x128xf32>
    %55 = tpu.matmul %53, %54, %cst_27 {dimension_numbers = #tpu.dot_dimension_numbers<[1], [0], [0], [1], [0, 0, 1, 1], [], []>} : vector<128x288xbf16>, vector<288x128xbf16>, vector<128x128xf32> -> vector<128x128xf32>
    %c0_28 = arith.constant 0 : index
    %c0_29 = arith.constant 0 : index
    %c0_30 = arith.constant 0 : index
    %56 = vector.load %arg2[%c0_28, %c0_29, %c0_30] : memref<1x1x128xf32, #tpu.memory_space<vmem>>, vector<1x1x128xf32>
    %57 = vector.shape_cast %56 : vector<1x1x128xf32> to vector<1x1x128xf32>
    %58 = vector.broadcast %57 : vector<1x1x128xf32> to vector<8x16x128xf32>
    %59 = arith.truncf %58 : vector<8x16x128xf32> to vector<8x16x128xbf16>
    %c0_31 = arith.constant 0 : index
    %c0_32 = arith.constant 0 : index
    %c0_33 = arith.constant 0 : index
    %c0_34 = arith.constant 0 : index
    %60 = vector.load %arg7[%c0_31, %c0_32, %c0_33, %c0_34] : memref<1x8x16x640xbf16, #tpu.memory_space<vmem>>, vector<1x8x16x128xbf16>
    %61 = vector.shape_cast %60 : vector<1x8x16x128xbf16> to vector<8x16x128xbf16>
    %62 = vector.shape_cast %59 : vector<8x16x128xbf16> to vector<1x8x16x128xbf16>
    tpu.vector_store %arg7[%c0_31, %c0_32, %c0_33, %c0_34], %62 {strides = array<i32>} : memref<1x8x16x640xbf16, #tpu.memory_space<vmem>>, vector<1x8x16x128xbf16>,
    %c0_35 = arith.constant 0 : index
    %c0_36 = arith.constant 0 : index
    %63 = vector.load %arg6[%c0_35, %c0_36] : memref<1x512xf32, #tpu.memory_space<vmem>>, vector<1x128xf32>
    %64 = vector.broadcast %63 : vector<1x128xf32> to vector<128x128xf32>
    %65 = arith.addf %11, %64 : vector<128x128xf32>
    %cst_37 = arith.constant 0.000000e+00 : f32
    %66 = vector.broadcast %cst_37 : f32 to vector<128x128xf32>
    %67 = arith.maximumf %65, %66 : vector<128x128xf32>
    %68 = vector.shape_cast %67 : vector<128x128xf32> to vector<8x16x128xf32>
    %69 = arith.truncf %68 : vector<8x16x128xf32> to vector<8x16x128xbf16>
    %c0_38 = arith.constant 0 : index
    %c0_39 = arith.constant 0 : index
    %c0_40 = arith.constant 0 : index
    %c128_41 = arith.constant 128 : index
    %70 = vector.load %arg7[%c0_38, %c0_39, %c0_40, %c128_41] : memref<1x8x16x640xbf16, #tpu.memory_space<vmem>>, vector<1x8x16x128xbf16>
    %71 = vector.shape_cast %70 : vector<1x8x16x128xbf16> to vector<8x16x128xbf16>
    %72 = vector.shape_cast %69 : vector<8x16x128xbf16> to vector<1x8x16x128xbf16>
    tpu.vector_store %arg7[%c0_38, %c0_39, %c0_40, %c128_41], %72 {strides = array<i32>} : memref<1x8x16x640xbf16, #tpu.memory_space<vmem>>, vector<1x8x16x128xbf16>,
    %c0_42 = arith.constant 0 : index
    %c128_43 = arith.constant 128 : index
    %73 = vector.load %arg6[%c0_42, %c128_43] : memref<1x512xf32, #tpu.memory_space<vmem>>, vector<1x128xf32>
    %74 = vector.broadcast %73 : vector<1x128xf32> to vector<128x128xf32>
    %75 = arith.addf %55, %74 : vector<128x128xf32>
    %cst_44 = arith.constant 0.000000e+00 : f32
    %76 = vector.broadcast %cst_44 : f32 to vector<128x128xf32>
    %77 = arith.maximumf %75, %76 : vector<128x128xf32>
    %78 = vector.shape_cast %77 : vector<128x128xf32> to vector<8x16x128xf32>
    %79 = arith.truncf %78 : vector<8x16x128xf32> to vector<8x16x128xbf16>
    %c0_45 = arith.constant 0 : index
    %c0_46 = arith.constant 0 : index
    %c0_47 = arith.constant 0 : index
    %c256_48 = arith.constant 256 : index
    %80 = vector.load %arg7[%c0_45, %c0_46, %c0_47, %c256_48] : memref<1x8x16x640xbf16, #tpu.memory_space<vmem>>, vector<1x8x16x128xbf16>
    %81 = vector.shape_cast %80 : vector<1x8x16x128xbf16> to vector<8x16x128xbf16>
    %82 = vector.shape_cast %79 : vector<8x16x128xbf16> to vector<1x8x16x128xbf16>
    tpu.vector_store %arg7[%c0_45, %c0_46, %c0_47, %c256_48], %82 {strides = array<i32>} : memref<1x8x16x640xbf16, #tpu.memory_space<vmem>>, vector<1x8x16x128xbf16>,
    %c0_49 = arith.constant 0 : index
    %c256_50 = arith.constant 256 : index
    %83 = vector.load %arg6[%c0_49, %c256_50] : memref<1x512xf32, #tpu.memory_space<vmem>>, vector<1x128xf32>
    %84 = vector.broadcast %83 : vector<1x128xf32> to vector<128x128xf32>
    %85 = arith.addf %12, %84 : vector<128x128xf32>
    %cst_51 = arith.constant 0.000000e+00 : f32
    %86 = vector.broadcast %cst_51 : f32 to vector<128x128xf32>
    %87 = arith.maximumf %85, %86 : vector<128x128xf32>
    %88 = vector.shape_cast %87 : vector<128x128xf32> to vector<8x16x128xf32>
    %89 = arith.truncf %88 : vector<8x16x128xf32> to vector<8x16x128xbf16>
    %c0_52 = arith.constant 0 : index
    %c0_53 = arith.constant 0 : index
    %c0_54 = arith.constant 0 : index
    %c384 = arith.constant 384 : index
    %90 = vector.load %arg7[%c0_52, %c0_53, %c0_54, %c384] : memref<1x8x16x640xbf16, #tpu.memory_space<vmem>>, vector<1x8x16x128xbf16>
    %91 = vector.shape_cast %90 : vector<1x8x16x128xbf16> to vector<8x16x128xbf16>
    %92 = vector.shape_cast %89 : vector<8x16x128xbf16> to vector<1x8x16x128xbf16>
    tpu.vector_store %arg7[%c0_52, %c0_53, %c0_54, %c384], %92 {strides = array<i32>} : memref<1x8x16x640xbf16, #tpu.memory_space<vmem>>, vector<1x8x16x128xbf16>,
    %c0_55 = arith.constant 0 : index
    %c384_56 = arith.constant 384 : index
    %93 = vector.load %arg6[%c0_55, %c384_56] : memref<1x512xf32, #tpu.memory_space<vmem>>, vector<1x128xf32>
    %94 = vector.broadcast %93 : vector<1x128xf32> to vector<128x128xf32>
    %95 = arith.addf %13, %94 : vector<128x128xf32>
    %cst_57 = arith.constant 0.000000e+00 : f32
    %96 = vector.broadcast %cst_57 : f32 to vector<128x128xf32>
    %97 = arith.maximumf %95, %96 : vector<128x128xf32>
    %98 = vector.shape_cast %97 : vector<128x128xf32> to vector<8x16x128xf32>
    %99 = arith.truncf %98 : vector<8x16x128xf32> to vector<8x16x128xbf16>
    %c0_58 = arith.constant 0 : index
    %c0_59 = arith.constant 0 : index
    %c0_60 = arith.constant 0 : index
    %c512 = arith.constant 512 : index
    %100 = vector.load %arg7[%c0_58, %c0_59, %c0_60, %c512] : memref<1x8x16x640xbf16, #tpu.memory_space<vmem>>, vector<1x8x16x128xbf16>
    %101 = vector.shape_cast %100 : vector<1x8x16x128xbf16> to vector<8x16x128xbf16>
    %102 = vector.shape_cast %99 : vector<8x16x128xbf16> to vector<1x8x16x128xbf16>
    tpu.vector_store %arg7[%c0_58, %c0_59, %c0_60, %c512], %102 {strides = array<i32>} : memref<1x8x16x640xbf16, #tpu.memory_space<vmem>>, vector<1x8x16x128xbf16>,
    return
  }
  func.func @transform_0(%arg0: i32, %arg1: i32) -> (i32, i32, i32) {
    %c0_i32 = arith.constant 0 : i32
    %c0_i32_0 = arith.constant 0 : i32
    %c0_i32_1 = arith.constant 0 : i32
    return %arg0, %c0_i32, %c0_i32_0 : i32, i32, i32
  }
  func.func @transform_1(%arg0: i32, %arg1: i32) -> (i32, i32, i32, i32) {
    %c0_i32 = arith.constant 0 : i32
    %c0_i32_0 = arith.constant 0 : i32
    %c0_i32_1 = arith.constant 0 : i32
    %c0_i32_2 = arith.constant 0 : i32
    return %arg0, %c0_i32, %c0_i32_0, %c0_i32_1 : i32, i32, i32, i32
  }
  func.func @transform_2(%arg0: i32, %arg1: i32) -> (i32, i32) {
    %c0_i32 = arith.constant 0 : i32
    %c0_i32_0 = arith.constant 0 : i32
    %c0_i32_1 = arith.constant 0 : i32
    return %c0_i32, %c0_i32_0 : i32, i32
  }
  func.func @transform_3(%arg0: i32, %arg1: i32) -> (i32, i32) {
    %c0_i32 = arith.constant 0 : i32
    %c0_i32_0 = arith.constant 0 : i32
    %c0_i32_1 = arith.constant 0 : i32
    return %c0_i32, %c0_i32_0 : i32, i32
  }
  func.func @transform_4(%arg0: i32, %arg1: i32) -> (i32, i32) {
    %c0_i32 = arith.constant 0 : i32
    %c0_i32_0 = arith.constant 0 : i32
    %c0_i32_1 = arith.constant 0 : i32
    return %c0_i32, %c0_i32_0 : i32, i32
  }
  func.func @transform_5(%arg0: i32, %arg1: i32) -> (i32, i32, i32, i32) {
    %c0_i32 = arith.constant 0 : i32
    %c0_i32_0 = arith.constant 0 : i32
    %c0_i32_1 = arith.constant 0 : i32
    return %arg0, %arg1, %c0_i32, %c0_i32_0 : i32, i32, i32, i32
  }
}

</mosaic_0001>

<llo_original>
// kernel: _lambda_.1
$region0: #{_lambda_.1}
  #allocation0 [shape = 'u32[]', space=smem, size = 0x4, offset = 0x4, fixed_abs, tag = 'smem constant byte address 0x4 - core index']
  #allocation1 [shape = 'u32[144,128]{1,0:T(1,128)}', space=vmem, size = 0x12000, scoped, tag = 'internal scratch']
  #allocation2 [shape = 'bf16[40,40,32]{2,1,0:T(8,128)(2,1)}', space=vmem, size = 0x64000, scoped, tag = 'scratch operand']
  #allocation3 [shape = 'bf16[128,288]{1,0:T(8,128)(2,1)}', space=vmem, size = 0x18000, scoped, tag = 'scratch operand']
  %s0 = inlined_call_operand.vmem [shape: f32[2,1,128], index: 0, kind: input, shape index: {}]
  %s1 = inlined_call_operand.vmem [shape: bf16[2,16,16,32], index: 1, kind: input, shape index: {}]
  %s2 = inlined_call_operand.vmem [shape: bf16[32,384], index: 2, kind: input, shape index: {}]
  %s3 = inlined_call_operand.vmem [shape: bf16[288,128], index: 3, kind: input, shape index: {}]
  %s4 = inlined_call_operand.vmem [shape: f32[1,512], index: 4, kind: input, shape index: {}]
  %s5 = inlined_call_operand.hbm [shape: bf16[2,16,16,640], index: 5, kind: output, shape index: {}]
  %s6 = sld [smem:[#allocation0]]
  $region57: #{_lambda_.1} parent=0
    _
  %s8 = ssub.s32 1, %s6
  %s9 = scalar_select 0, %s8, %s6
  $region1: #{_lambda_.1} parent=0
    #allocation4 [shape = 'u8[327680]{0}', space=vmem, size = 0x50000, scoped, tag = 'output window, operand 0']
    #allocation5 [shape = 's32[2]{0}', space=sflag, size = 0x8, scoped, tag = 'scoped memory for _lambda_.1']
    %10 = vsyncpa [#allocation5], 0
    %s11 = scalar_lea.sflag [#allocation5], 1
    %12 = vsyncpa %s11, 0
    loop: start=0, step=1, limit=6
    $region2: #{_lambda_.1} parent=1 // loop_pre_header
      _
    $region3: #{_lambda_.1} parent=1 // loop_header
      %s14 = sphi 0, %s18
      %p15 = scmp.ge.s32.totalorder %s14, 6
      %s21 = sphi 0, %s33
      %s22 = sphi 0, %s29
      %s23 = sphi 0, %s21
      %s24 = sphi 0, %s22
      %s25 = sphi 0, %s23
      %s26 = sphi 0, %s24
      %s36 = sphi 0, %s38
      %s39 = sphi 0, %s36
      %s40 = sphi 0, %s39
      %s56 = sphi 0, %s40
      %s62 = sphi 0, %s64
      %s65 = sphi 0, %s62
      %s66 = sphi 0, %s65
      %s82 = sphi 0, %s66
      %s86 = sphi 0, %s86
      %s88 = sphi 0, %s86
      %s89 = sphi 0, %s88
      %s103 = sphi 0, %s89
      %s107 = sphi 0, %s107
      %s109 = sphi 0, %s107
      %s110 = sphi 0, %s109
      %s124 = sphi 0, %s110
      %s128 = sphi 0, %s128
      %s130 = sphi 0, %s128
      %s131 = sphi 0, %s130
      %s145 = sphi 0, %s131
      %s153 = sphi 0, %s155
      %s156 = sphi 0, %s153
      %s157 = sphi 0, %s156
      %s173 = sphi 0, %s157
    $region4: #{_lambda_.1} parent=1 // loop_header_branch
      %17 = sbr.rel (%p15) target = $region8
    $region5: #{_lambda_.1} parent=1 // loop_body
      %s19 = ssub.s32 %s14, 1
      %s20 = ssub.s32 %s14, 2
      %s27 = sadd.s32 1, %s22
      %p28 = scmp.ge.s32.totalorder %s27, 2
      %s29 = scalar_select %p28, 0, %s27
      %s30 = sadd.s32 1, %s21
      %s31 = scalar_select %p28, %s30, %s21
      %p32 = scmp.ge.s32.totalorder %s31, 2
      %s33 = scalar_select %p32, 0, %s31
      %s34 = ssub.s32 %s21, %s33
      %p35 = scmp.eq.s32.totalorder %s34, 0
      %s37 = sadd.s32 %s36, 1
      %s38 = scalar_select %p35, %s36, %s37
      %p41 = pneg %p35
      %p42 = scmp.eq.s32.totalorder %s14, 3
      %p43 = por %p41, %p42
      %p44 = scmp.ne.s32.totalorder %s36, %s39
      %p45 = scmp.eq.s32.totalorder %s14, 0
      %p46 = por %p44, %p45
      %p47 = scmp.ne.s32.totalorder %s36, %s39
      %p48 = scmp.eq.s32.totalorder %s19, 3
      %p49 = por %p47, %p48
      %p50 = scmp.ne.s32.totalorder %s39, %s40
      %p51 = scmp.eq.s32.totalorder %s19, 0
      %p52 = por %p50, %p51
      %p53 = scmp.ne.s32.totalorder %s39, %s40
      %p54 = scmp.eq.s32.totalorder %s20, 3
      %p55 = por %p53, %p54
      %p57 = scmp.ne.s32.totalorder %s40, %s56
      %p58 = scmp.eq.s32.totalorder %s20, 0
      %p59 = por %p57, %p58
      %s60 = ssub.s32 %s21, %s33
      %p61 = scmp.eq.s32.totalorder %s60, 0
      %s63 = sadd.s32 %s62, 1
      %s64 = scalar_select %p61, %s62, %s63
      %p67 = pneg %p61
      %p68 = scmp.eq.s32.totalorder %s14, 3
      %p69 = por %p67, %p68
      %p70 = scmp.ne.s32.totalorder %s62, %s65
      %p71 = scmp.eq.s32.totalorder %s14, 0
      %p72 = por %p70, %p71
      %p73 = scmp.ne.s32.totalorder %s62, %s65
      %p74 = scmp.eq.s32.totalorder %s19, 3
      %p75 = por %p73, %p74
      %p76 = scmp.ne.s32.totalorder %s65, %s66
      %p77 = scmp.eq.s32.totalorder %s19, 0
      %p78 = por %p76, %p77
      %p79 = scmp.ne.s32.totalorder %s65, %s66
      %p80 = scmp.eq.s32.totalorder %s20, 3
      %p81 = por %p79, %p80
      %p83 = scmp.ne.s32.totalorder %s66, %s82
      %p84 = scmp.eq.s32.totalorder %s20, 0
      %p85 = por %p83, %p84
      %s87 = sadd.s32 %s86, 1
      %p90 = scmp.eq.s32.totalorder %s14, 3
      %p91 = scmp.ne.s32.totalorder %s86, %s88
      %p92 = scmp.eq.s32.totalorder %s14, 0
      %p93 = por %p91, %p92
      %p94 = scmp.ne.s32.totalorder %s86, %s88
      %p95 = scmp.eq.s32.totalorder %s19, 3
      %p96 = por %p94, %p95
      %p97 = scmp.ne.s32.totalorder %s88, %s89
      %p98 = scmp.eq.s32.totalorder %s19, 0
      %p99 = por %p97, %p98
      %p100 = scmp.ne.s32.totalorder %s88, %s89
      %p101 = scmp.eq.s32.totalorder %s20, 3
      %p102 = por %p100, %p101
      %p104 = scmp.ne.s32.totalorder %s89, %s103
      %p105 = scmp.eq.s32.totalorder %s20, 0
      %p106 = por %p104, %p105
      %s108 = sadd.s32 %s107, 1
      %p111 = scmp.eq.s32.totalorder %s14, 3
      %p112 = scmp.ne.s32.totalorder %s107, %s109
      %p113 = scmp.eq.s32.totalorder %s14, 0
      %p114 = por %p112, %p113
      %p115 = scmp.ne.s32.totalorder %s107, %s109
      %p116 = scmp.eq.s32.totalorder %s19, 3
      %p117 = por %p115, %p116
      %p118 = scmp.ne.s32.totalorder %s109, %s110
      %p119 = scmp.eq.s32.totalorder %s19, 0
      %p120 = por %p118, %p119
      %p121 = scmp.ne.s32.totalorder %s109, %s110
      %p122 = scmp.eq.s32.totalorder %s20, 3
      %p123 = por %p121, %p122
      %p125 = scmp.ne.s32.totalorder %s110, %s124
      %p126 = scmp.eq.s32.totalorder %s20, 0
      %p127 = por %p125, %p126
      %s129 = sadd.s32 %s128, 1
      %p132 = scmp.eq.s32.totalorder %s14, 3
      %p133 = scmp.ne.s32.totalorder %s128, %s130
      %p134 = scmp.eq.s32.totalorder %s14, 0
      %p135 = por %p133, %p134
      %p136 = scmp.ne.s32.totalorder %s128, %s130
      %p137 = scmp.eq.s32.totalorder %s19, 3
      %p138 = por %p136, %p137
      %p139 = scmp.ne.s32.totalorder %s130, %s131
      %p140 = scmp.eq.s32.totalorder %s19, 0
      %p141 = por %p139, %p140
      %p142 = scmp.ne.s32.totalorder %s130, %s131
      %p143 = scmp.eq.s32.totalorder %s20, 3
      %p144 = por %p142, %p143
      %p146 = scmp.ne.s32.totalorder %s131, %s145
      %p147 = scmp.eq.s32.totalorder %s20, 0
      %p148 = por %p146, %p147
      %s149 = ssub.s32 %s21, %s33
      %s150 = ssub.s32 %s22, %s29
      %s151 = sor.u32 %s149, %s150
      %p152 = scmp.eq.s32.totalorder %s151, 0
      %s154 = sadd.s32 %s153, 1
      %s155 = scalar_select %p152, %s153, %s154
      %p158 = pneg %p152
      %p159 = scmp.eq.s32.totalorder %s14, 3
      %p160 = por %p158, %p159
      %p161 = scmp.ne.s32.totalorder %s153, %s156
      %p162 = scmp.eq.s32.totalorder %s14, 0
      %p163 = por %p161, %p162
      %p164 = scmp.ne.s32.totalorder %s153, %s156
      %p165 = scmp.eq.s32.totalorder %s19, 3
      %p166 = por %p164, %p165
      %p167 = scmp.ne.s32.totalorder %s156, %s157
      %p168 = scmp.eq.s32.totalorder %s19, 0
      %p169 = por %p167, %p168
      %p170 = scmp.ne.s32.totalorder %s156, %s157
      %p171 = scmp.eq.s32.totalorder %s20, 3
      %p172 = por %p170, %p171
      %p174 = scmp.ne.s32.totalorder %s157, %s173
      %p175 = scmp.eq.s32.totalorder %s20, 0
      %p176 = por %p174, %p175
      %p177 = scmp.le.s32.totalorder 1, %s14
      %p178 = scmp.lt.s32.totalorder %s14, 5
      %p179 = pnand %p177, %p178
      %p180 = pneg %p179
      // Predicated region
      $region9: #{_lambda_.1} parent=5 // pred_check
        _
      $region10: #{_lambda_.1} parent=5 // pred_check_branch
        %182 = sbr.rel (%p179) target = $region12
      $region11: #{_lambda_.1} parent=5 // pred_region
        %s183 = ssub.s32 %s14, 1
        // Predicated region
        $region13: #{_lambda_.1} parent=11 // pred_check
          %p184 = pneg %p99
        $region14: #{_lambda_.1} parent=11 // pred_check_branch
          %186 = sbr.rel (%p184) target = $region16
        $region15: #{_lambda_.1} parent=11 // pred_region
          _
        $region16: #{_lambda_.1} parent=11 // pred_fallthru
          _
        // Predicated region
        $region17: #{_lambda_.1} parent=11 // pred_check
          %p187 = pneg %p120
        $region18: #{_lambda_.1} parent=11 // pred_check_branch
          %189 = sbr.rel (%p187) target = $region20
        $region19: #{_lambda_.1} parent=11 // pred_region
          _
        $region20: #{_lambda_.1} parent=11 // pred_fallthru
          _
        // Predicated region
        $region21: #{_lambda_.1} parent=11 // pred_check
          %p190 = pneg %p141
        $region22: #{_lambda_.1} parent=11 // pred_check_branch
          %192 = sbr.rel (%p190) target = $region24
        $region23: #{_lambda_.1} parent=11 // pred_region
          _
        $region24: #{_lambda_.1} parent=11 // pred_fallthru
          _
      $region12: #{_lambda_.1} parent=5 // pred_fallthru
        _
      %p193 = scmp.lt.s32.totalorder %s14, 4
      // Predicated region
      $region25: #{_lambda_.1} parent=5 // pred_check
        %p194 = pneg %p193
      $region26: #{_lambda_.1} parent=5 // pred_check_branch
        %196 = sbr.rel (%p194) target = $region28
      $region27: #{_lambda_.1} parent=5 // pred_region
        // Predicated region
        $region29: #{_lambda_.1} parent=27 // pred_check
          %p197 = pneg %p46
        $region30: #{_lambda_.1} parent=27 // pred_check_branch
          %199 = sbr.rel (%p197) target = $region32
        $region31: #{_lambda_.1} parent=27 // pred_region
          %p200 = scmp.lt.s32.totalorder %s21, 1
          %s201 = scalar_select %p200, %s21, 1
          %s202 = scalar_lea.vmem %s0, %s201
        $region32: #{_lambda_.1} parent=27 // pred_fallthru
          _
        // Predicated region
        $region33: #{_lambda_.1} parent=27 // pred_check
          %p203 = pneg %p72
        $region34: #{_lambda_.1} parent=27 // pred_check_branch
          %205 = sbr.rel (%p203) target = $region36
        $region35: #{_lambda_.1} parent=27 // pred_region
          %p206 = scmp.lt.s32.totalorder %s21, 1
          %s207 = scalar_select %p206, %s21, 1
          %s208 = smul.addr %s207, 32
          %s209 = smul.addr %s208, 4
          %s210 = scalar_lea.vmem %s1, %s209
        $region36: #{_lambda_.1} parent=27 // pred_fallthru
          _
      $region28: #{_lambda_.1} parent=5 // pred_fallthru
        _
      %p211 = scmp.le.s32.totalorder 1, %s14
      %p212 = scmp.lt.s32.totalorder %s14, 5
      %p213 = pnand %p211, %p212
      %p214 = pneg %p213
      // Predicated region
      $region37: #{_lambda_.1} parent=5 // pred_check
        _
      $region38: #{_lambda_.1} parent=5 // pred_check_branch
        %216 = sbr.rel (%p213) target = $region40
      $region39: #{_lambda_.1} parent=5 // pred_region
        %s217 = ssub.s32 %s14, 1
        %p218 = scmp.lt.s32.totalorder %s23, 1
        %s219 = scalar_select %p218, %s23, 1
        %s220 = scalar_lea.vmem %s0, %s219
        %p221 = pneg %p52
        %p222 = pneg %p49
        %p223 = scmp.lt.s32.totalorder %s23, 1
        %s224 = scalar_select %p223, %s23, 1
        %s225 = smul.addr %s224, 32
        %s226 = smul.addr %s225, 4
        %s227 = scalar_lea.vmem %s1, %s226
        %p228 = pneg %p78
        %p229 = pneg %p75
        %p230 = pneg %p99
        %p231 = pneg %p96
        %p232 = pneg %p120
        %p233 = pneg %p117
        %p234 = pneg %p141
        %p235 = pneg %p138
        %p236 = pneg %p169
        %p237 = pneg %p166
        %s238 = sand.u32 %s156, 1
        %s239 = scalar_lea.sflag [#allocation5], %s238
        %s240 = sand.u32 %s156, 1
        %s241 = smul.addr %s240, 320
        %s242 = scalar_lea.vmem [#allocation4], %s241
        %p243 = scmp.lt.s32.totalorder %s23, 1
        %s244 = scalar_select %p243, %s23, 1
        %s245 = scalar_lea.vmem %s0, %s244
        %p246 = scmp.lt.s32.totalorder %s23, 1
        %s247 = scalar_select %p246, %s23, 1
        %s248 = smul.addr %s247, 32
        %s249 = smul.addr %s248, 4
        %s250 = scalar_lea.vmem %s1, %s249
        %s251 = smul.u32 8, %s24
        %s253 = smul.u32 %s24, 8
        %p254 = scmp.eq.s32.totalorder %s24, 0
        // Predicated region
        $region41: #{_lambda_.1} parent=39 // pred_check
          %p255 = pneg %p254
        $region42: #{_lambda_.1} parent=39 // pred_check_branch
          %257 = sbr.rel (%p255) target = $region44
        $region43: #{_lambda_.1} parent=39 // pred_region
          %vm258 = vcmask 257024
          %259 = vst.msk [vmem:[#allocation2] sm:$0xf] %vm258, 0
          %260 = vst.msk [vmem:[#allocation2 + $0x4] sm:$0xf] %vm258, 0
          %261 = vst.msk [vmem:[#allocation2 + $0x8] sm:$0xf] %vm258, 0
          %262 = vst.msk [vmem:[#allocation2 + $0xc] sm:$0xf] %vm258, 0
          %263 = vst.msk [vmem:[#allocation2 + $0x10] sm:$0xf] %vm258, 0
          %264 = vst.msk [vmem:[#allocation2 + $0x14] sm:$0xf] %vm258, 0
          %265 = vst.msk [vmem:[#allocation2 + $0x18] sm:$0xf] %vm258, 0
          %266 = vst.msk [vmem:[#allocation2 + $0x1c] sm:$0xf] %vm258, 0
          %267 = vst.msk [vmem:[#allocation2 + $0x20] sm:$0xf] %vm258, 0
          %268 = vst.msk [vmem:[#allocation2 + $0x24] sm:$0xf] %vm258, 0
          %269 = vst.msk [vmem:[#allocation2 + $0x28] sm:$0xf] %vm258, 0
          %270 = vst.msk [vmem:[#allocation2 + $0x2c] sm:$0xf] %vm258, 0
          %271 = vst.msk [vmem:[#allocation2 + $0x30] sm:$0xf] %vm258, 0
          %272 = vst.msk [vmem:[#allocation2 + $0x34] sm:$0xf] %vm258, 0
          %273 = vst.msk [vmem:[#allocation2 + $0x38] sm:$0xf] %vm258, 0
          %274 = vst.msk [vmem:[#allocation2 + $0x3c] sm:$0xf] %vm258, 0
          %275 = vst.msk [vmem:[#allocation2 + $0x40] sm:$0xf] %vm258, 0
          %276 = vst.msk [vmem:[#allocation2 + $0x44] sm:$0xf] %vm258, 0
          %277 = vst.msk [vmem:[#allocation2 + $0x48] sm:$0xf] %vm258, 0
          %278 = vst.msk [vmem:[#allocation2 + $0x4c] sm:$0xf] %vm258, 0
          %279 = vst.msk [vmem:[#allocation2 + $0x50] sm:$0xf] %vm258, 0
          %280 = vst.msk [vmem:[#allocation2 + $0x54] sm:$0xf] %vm258, 0
          %281 = vst.msk [vmem:[#allocation2 + $0x58] sm:$0xf] %vm258, 0
          %282 = vst.msk [vmem:[#allocation2 + $0x5c] sm:$0xf] %vm258, 0
          %283 = vst.msk [vmem:[#allocation2 + $0x60] sm:$0xf] %vm258, 0
          %284 = vst.msk [vmem:[#allocation2 + $0x64] sm:$0xf] %vm258, 0
          %285 = vst.msk [vmem:[#allocation2 + $0x68] sm:$0xf] %vm258, 0
          %286 = vst.msk [vmem:[#allocation2 + $0x6c] sm:$0xf] %vm258, 0
          %287 = vst.msk [vmem:[#allocation2 + $0x70] sm:$0xf] %vm258, 0
          %288 = vst.msk [vmem:[#allocation2 + $0x74] sm:$0xf] %vm258, 0
          %289 = vst.msk [vmem:[#allocation2 + $0x78] sm:$0xf] %vm258, 0
          %290 = vst.msk [vmem:[#allocation2 + $0x7c] sm:$0xf] %vm258, 0
          %291 = vst.msk [vmem:[#allocation2 + $0x80] sm:$0xf] %vm258, 0
          %292 = vst.msk [vmem:[#allocation2 + $0x84] sm:$0xf] %vm258, 0
          %293 = vst.msk [vmem:[#allocation2 + $0x88] sm:$0xf] %vm258, 0
          %294 = vst.msk [vmem:[#allocation2 + $0x8c] sm:$0xf] %vm258, 0
          %295 = vst.msk [vmem:[#allocation2 + $0x90] sm:$0xf] %vm258, 0
          %296 = vst.msk [vmem:[#allocation2 + $0x94] sm:$0xf] %vm258, 0
          %297 = vst.msk [vmem:[#allocation2 + $0x98] sm:$0xf] %vm258, 0
          %298 = vst.msk [vmem:[#allocation2 + $0x9c] sm:$0xf] %vm258, 0
          %299 = vst.msk [vmem:[#allocation2 + $0xa0] sm:$0xf] %vm258, 0
          %300 = vst.msk [vmem:[#allocation2 + $0xa4] sm:$0xf] %vm258, 0
          %301 = vst.msk [vmem:[#allocation2 + $0xa8] sm:$0xf] %vm258, 0
          %302 = vst.msk [vmem:[#allocation2 + $0xac] sm:$0xf] %vm258, 0
          %303 = vst.msk [vmem:[#allocation2 + $0xb0] sm:$0xf] %vm258, 0
          %304 = vst.msk [vmem:[#allocation2 + $0xb4] sm:$0xf] %vm258, 0
          %305 = vst.msk [vmem:[#allocation2 + $0xb8] sm:$0xf] %vm258, 0
          %306 = vst.msk [vmem:[#allocation2 + $0xbc] sm:$0xf] %vm258, 0
          %307 = vst.msk [vmem:[#allocation2 + $0xc0] sm:$0xf] %vm258, 0
          %308 = vst.msk [vmem:[#allocation2 + $0xc4] sm:$0xf] %vm258, 0
          %309 = vst.msk [vmem:[#allocation2 + $0xc8] sm:$0xf] %vm258, 0
          %310 = vst.msk [vmem:[#allocation2 + $0xcc] sm:$0xf] %vm258, 0
          %311 = vst.msk [vmem:[#allocation2 + $0xd0] sm:$0xf] %vm258, 0
          %312 = vst.msk [vmem:[#allocation2 + $0xd4] sm:$0xf] %vm258, 0
          %313 = vst.msk [vmem:[#allocation2 + $0xd8] sm:$0xf] %vm258, 0
          %314 = vst.msk [vmem:[#allocation2 + $0xdc] sm:$0xf] %vm258, 0
          %315 = vst.msk [vmem:[#allocation2 + $0xe0] sm:$0xf] %vm258, 0
          %316 = vst.msk [vmem:[#allocation2 + $0xe4] sm:$0xf] %vm258, 0
          %317 = vst.msk [vmem:[#allocation2 + $0xe8] sm:$0xf] %vm258, 0
          %318 = vst.msk [vmem:[#allocation2 + $0xec] sm:$0xf] %vm258, 0
          %s319 = scalar_lea.vmem [#allocation2], 560
          %320 = vst.msk [vmem:[%s319] sm:$0xf] %vm258, 0
          %321 = vst.msk [vmem:[%s319 + $0x4] sm:$0xf] %vm258, 0
          %322 = vst.msk [vmem:[%s319 + $0x8] sm:$0xf] %vm258, 0
          %323 = vst.msk [vmem:[%s319 + $0xc] sm:$0xf] %vm258, 0
          %324 = vst.msk [vmem:[%s319 + $0x10] sm:$0xf] %vm258, 0
          %325 = vst.msk [vmem:[%s319 + $0x14] sm:$0xf] %vm258, 0
          %326 = vst.msk [vmem:[%s319 + $0x18] sm:$0xf] %vm258, 0
          %327 = vst.msk [vmem:[%s319 + $0x1c] sm:$0xf] %vm258, 0
          %328 = vst.msk [vmem:[%s319 + $0x20] sm:$0xf] %vm258, 0
          %329 = vst.msk [vmem:[%s319 + $0x24] sm:$0xf] %vm258, 0
          %330 = vst.msk [vmem:[%s319 + $0x28] sm:$0xf] %vm258, 0
          %331 = vst.msk [vmem:[%s319 + $0x2c] sm:$0xf] %vm258, 0
          %332 = vst.msk [vmem:[%s319 + $0x30] sm:$0xf] %vm258, 0
          %333 = vst.msk [vmem:[%s319 + $0x34] sm:$0xf] %vm258, 0
          %334 = vst.msk [vmem:[%s319 + $0x38] sm:$0xf] %vm258, 0
          %335 = vst.msk [vmem:[%s319 + $0x3c] sm:$0xf] %vm258, 0
          %336 = vst.msk [vmem:[%s319 + $0x40] sm:$0xf] %vm258, 0
          %337 = vst.msk [vmem:[%s319 + $0x44] sm:$0xf] %vm258, 0
          %338 = vst.msk [vmem:[%s319 + $0x48] sm:$0xf] %vm258, 0
          %339 = vst.msk [vmem:[%s319 + $0x4c] sm:$0xf] %vm258, 0
          %340 = vst.msk [vmem:[%s319 + $0x50] sm:$0xf] %vm258, 0
          %341 = vst.msk [vmem:[%s319 + $0x54] sm:$0xf] %vm258, 0
          %342 = vst.msk [vmem:[%s319 + $0x58] sm:$0xf] %vm258, 0
          %343 = vst.msk [vmem:[%s319 + $0x5c] sm:$0xf] %vm258, 0
          %344 = vst.msk [vmem:[%s319 + $0x60] sm:$0xf] %vm258, 0
          %345 = vst.msk [vmem:[%s319 + $0x64] sm:$0xf] %vm258, 0
          %346 = vst.msk [vmem:[%s319 + $0x68] sm:$0xf] %vm258, 0
          %347 = vst.msk [vmem:[%s319 + $0x6c] sm:$0xf] %vm258, 0
          %348 = vst.msk [vmem:[%s319 + $0x70] sm:$0xf] %vm258, 0
          %349 = vst.msk [vmem:[%s319 + $0x74] sm:$0xf] %vm258, 0
          %350 = vst.msk [vmem:[%s319 + $0x78] sm:$0xf] %vm258, 0
          %351 = vst.msk [vmem:[%s319 + $0x7c] sm:$0xf] %vm258, 0
          %352 = vst.msk [vmem:[%s319 + $0x80] sm:$0xf] %vm258, 0
          %353 = vst.msk [vmem:[%s319 + $0x84] sm:$0xf] %vm258, 0
          %354 = vst.msk [vmem:[%s319 + $0x88] sm:$0xf] %vm258, 0
          %355 = vst.msk [vmem:[%s319 + $0x8c] sm:$0xf] %vm258, 0
          %356 = vst.msk [vmem:[%s319 + $0x90] sm:$0xf] %vm258, 0
          %357 = vst.msk [vmem:[%s319 + $0x94] sm:$0xf] %vm258, 0
          %358 = vst.msk [vmem:[%s319 + $0x98] sm:$0xf] %vm258, 0
          %359 = vst.msk [vmem:[%s319 + $0x9c] sm:$0xf] %vm258, 0
          %360 = vst.msk [vmem:[%s319 + $0xa0] sm:$0xf] %vm258, 0
          %361 = vst.msk [vmem:[%s319 + $0xa4] sm:$0xf] %vm258, 0
          %362 = vst.msk [vmem:[%s319 + $0xa8] sm:$0xf] %vm258, 0
          %363 = vst.msk [vmem:[%s319 + $0xac] sm:$0xf] %vm258, 0
          %364 = vst.msk [vmem:[%s319 + $0xb0] sm:$0xf] %vm258, 0
          %365 = vst.msk [vmem:[%s319 + $0xb4] sm:$0xf] %vm258, 0
          %366 = vst.msk [vmem:[%s319 + $0xb8] sm:$0xf] %vm258, 0
          %367 = vst.msk [vmem:[%s319 + $0xbc] sm:$0xf] %vm258, 0
          %368 = vst.msk [vmem:[%s319 + $0xc0] sm:$0xf] %vm258, 0
          %369 = vst.msk [vmem:[%s319 + $0xc4] sm:$0xf] %vm258, 0
          %370 = vst.msk [vmem:[%s319 + $0xc8] sm:$0xf] %vm258, 0
          %371 = vst.msk [vmem:[%s319 + $0xcc] sm:$0xf] %vm258, 0
          %372 = vst.msk [vmem:[%s319 + $0xd0] sm:$0xf] %vm258, 0
          %373 = vst.msk [vmem:[%s319 + $0xd4] sm:$0xf] %vm258, 0
          %374 = vst.msk [vmem:[%s319 + $0xd8] sm:$0xf] %vm258, 0
          %375 = vst.msk [vmem:[%s319 + $0xdc] sm:$0xf] %vm258, 0
          %376 = vst.msk [vmem:[%s319 + $0xe0] sm:$0xf] %vm258, 0
          %377 = vst.msk [vmem:[%s319 + $0xe4] sm:$0xf] %vm258, 0
          %378 = vst.msk [vmem:[%s319 + $0xe8] sm:$0xf] %vm258, 0
          %379 = vst.msk [vmem:[%s319 + $0xec] sm:$0xf] %vm258, 0
          %380 = vst.msk [vmem:[#allocation2] sm:$0xf] %vm258, 0
          %vm381 = vcmask 254976
          %382 = vst.msk [vmem:[#allocation2 + $0x4] sm:$0x3] %vm381, 0
          %383 = vst.msk [vmem:[#allocation2 + $0x14] sm:$0xf] %vm258, 0
          %384 = vst.msk [vmem:[#allocation2 + $0x18] sm:$0x3] %vm381, 0
          %385 = vst.msk [vmem:[#allocation2 + $0x28] sm:$0xf] %vm258, 0
          %386 = vst.msk [vmem:[#allocation2 + $0x2c] sm:$0x3] %vm381, 0
          %387 = vst.msk [vmem:[#allocation2 + $0x3c] sm:$0xf] %vm258, 0
          %388 = vst.msk [vmem:[#allocation2 + $0x40] sm:$0x3] %vm381, 0
          %389 = vst.msk [vmem:[#allocation2 + $0x50] sm:$0xf] %vm258, 0
          %390 = vst.msk [vmem:[#allocation2 + $0x54] sm:$0x3] %vm381, 0
          %391 = vst.msk [vmem:[#allocation2 + $0x64] sm:$0xf] %vm258, 0
          %392 = vst.msk [vmem:[#allocation2 + $0x68] sm:$0x3] %vm381, 0
          %393 = vst.msk [vmem:[#allocation2 + $0x78] sm:$0xf] %vm258, 0
          %394 = vst.msk [vmem:[#allocation2 + $0x7c] sm:$0x3] %vm381, 0
          %395 = vst.msk [vmem:[#allocation2 + $0x8c] sm:$0xf] %vm258, 0
          %396 = vst.msk [vmem:[#allocation2 + $0x90] sm:$0x3] %vm381, 0
          %397 = vst.msk [vmem:[#allocation2 + $0xa0] sm:$0xf] %vm258, 0
          %398 = vst.msk [vmem:[#allocation2 + $0xa4] sm:$0x3] %vm381, 0
          %399 = vst.msk [vmem:[#allocation2 + $0xb4] sm:$0xf] %vm258, 0
          %400 = vst.msk [vmem:[#allocation2 + $0xb8] sm:$0x3] %vm381, 0
          %401 = vst.msk [vmem:[#allocation2 + $0xc8] sm:$0xf] %vm258, 0
          %402 = vst.msk [vmem:[#allocation2 + $0xcc] sm:$0x3] %vm381, 0
          %403 = vst.msk [vmem:[#allocation2 + $0xdc] sm:$0xf] %vm258, 0
          %404 = vst.msk [vmem:[#allocation2 + $0xe0] sm:$0x3] %vm381, 0
          %405 = vst.msk [vmem:[#allocation2 + $0xf0] sm:$0xf] %vm258, 0
          %406 = vst.msk [vmem:[#allocation2 + $0xf4] sm:$0x3] %vm381, 0
          %407 = vst.msk [vmem:[#allocation2 + $0x104] sm:$0xf] %vm258, 0
          %408 = vst.msk [vmem:[#allocation2 + $0x108] sm:$0x3] %vm381, 0
          %409 = vst.msk [vmem:[#allocation2 + $0x118] sm:$0xf] %vm258, 0
          %410 = vst.msk [vmem:[#allocation2 + $0x11c] sm:$0x3] %vm381, 0
          %411 = vst.msk [vmem:[#allocation2 + $0x12c] sm:$0xf] %vm258, 0
          %412 = vst.msk [vmem:[#allocation2 + $0x130] sm:$0x3] %vm381, 0
          %413 = vst.msk [vmem:[#allocation2 + $0x140] sm:$0xf] %vm258, 0
          %414 = vst.msk [vmem:[#allocation2 + $0x144] sm:$0x3] %vm381, 0
          %415 = vst.msk [vmem:[#allocation2 + $0x154] sm:$0xf] %vm258, 0
          %416 = vst.msk [vmem:[#allocation2 + $0x158] sm:$0x3] %vm381, 0
          %417 = vst.msk [vmem:[#allocation2 + $0x168] sm:$0xf] %vm258, 0
          %418 = vst.msk [vmem:[#allocation2 + $0x16c] sm:$0x3] %vm381, 0
          %419 = vst.msk [vmem:[#allocation2 + $0x17c] sm:$0xf] %vm258, 0
          %420 = vst.msk [vmem:[#allocation2 + $0x180] sm:$0x3] %vm381, 0
          %421 = vst.msk [vmem:[#allocation2 + $0x190] sm:$0xf] %vm258, 0
          %422 = vst.msk [vmem:[#allocation2 + $0x194] sm:$0x3] %vm381, 0
          %423 = vst.msk [vmem:[#allocation2 + $0x1a4] sm:$0xf] %vm258, 0
          %424 = vst.msk [vmem:[#allocation2 + $0x1a8] sm:$0x3] %vm381, 0
          %425 = vst.msk [vmem:[#allocation2 + $0x1b8] sm:$0xf] %vm258, 0
          %426 = vst.msk [vmem:[#allocation2 + $0x1bc] sm:$0x3] %vm381, 0
          %427 = vst.msk [vmem:[#allocation2 + $0x1cc] sm:$0xf] %vm258, 0
          %428 = vst.msk [vmem:[#allocation2 + $0x1d0] sm:$0x3] %vm381, 0
          %429 = vst.msk [vmem:[#allocation2 + $0x1e0] sm:$0xf] %vm258, 0
          %430 = vst.msk [vmem:[#allocation2 + $0x1e4] sm:$0x3] %vm381, 0
          %431 = vst.msk [vmem:[#allocation2 + $0x1f4] sm:$0xf] %vm258, 0
          %432 = vst.msk [vmem:[#allocation2 + $0x1f8] sm:$0x3] %vm381, 0
          %433 = vst.msk [vmem:[#allocation2 + $0x208] sm:$0xf] %vm258, 0
          %434 = vst.msk [vmem:[#allocation2 + $0x20c] sm:$0x3] %vm381, 0
          %435 = vst.msk [vmem:[#allocation2 + $0x21c] sm:$0xf] %vm258, 0
          %436 = vst.msk [vmem:[#allocation2 + $0x220] sm:$0x3] %vm381, 0
          %437 = vst.msk [vmem:[#allocation2 + $0x230] sm:$0xf] %vm258, 0
          %438 = vst.msk [vmem:[#allocation2 + $0x234] sm:$0x3] %vm381, 0
          %439 = vst.msk [vmem:[#allocation2 + $0x244] sm:$0xf] %vm258, 0
          %440 = vst.msk [vmem:[#allocation2 + $0x248] sm:$0x3] %vm381, 0
          %441 = vst.msk [vmem:[#allocation2 + $0x258] sm:$0xf] %vm258, 0
          %442 = vst.msk [vmem:[#allocation2 + $0x25c] sm:$0x3] %vm381, 0
          %443 = vst.msk [vmem:[#allocation2 + $0x26c] sm:$0xf] %vm258, 0
          %444 = vst.msk [vmem:[#allocation2 + $0x270] sm:$0x3] %vm381, 0
          %445 = vst.msk [vmem:[#allocation2 + $0x280] sm:$0xf] %vm258, 0
          %446 = vst.msk [vmem:[#allocation2 + $0x284] sm:$0x3] %vm381, 0
          %447 = vst.msk [vmem:[#allocation2 + $0x294] sm:$0xf] %vm258, 0
          %448 = vst.msk [vmem:[#allocation2 + $0x298] sm:$0x3] %vm381, 0
          %449 = vst.msk [vmem:[#allocation2 + $0x2a8] sm:$0xf] %vm258, 0
          %450 = vst.msk [vmem:[#allocation2 + $0x2ac] sm:$0x3] %vm381, 0
          %451 = vst.msk [vmem:[#allocation2 + $0x2bc] sm:$0xf] %vm258, 0
          %452 = vst.msk [vmem:[#allocation2 + $0x2c0] sm:$0x3] %vm381, 0
          %453 = vst.msk [vmem:[#allocation2 + $0x2d0] sm:$0xf] %vm258, 0
          %454 = vst.msk [vmem:[#allocation2 + $0x2d4] sm:$0x3] %vm381, 0
          %455 = vst.msk [vmem:[#allocation2 + $0x2e4] sm:$0xf] %vm258, 0
          %456 = vst.msk [vmem:[#allocation2 + $0x2e8] sm:$0x3] %vm381, 0
          %457 = vst.msk [vmem:[#allocation2 + $0x2f8] sm:$0xf] %vm258, 0
          %458 = vst.msk [vmem:[#allocation2 + $0x2fc] sm:$0x3] %vm381, 0
          %459 = vst.msk [vmem:[#allocation2 + $0x30c] sm:$0xf] %vm258, 0
          %460 = vst.msk [vmem:[#allocation2 + $0x310] sm:$0x3] %vm381, 0
          %vm461 = vcmask 257026
          %462 = vst.msk [vmem:[#allocation2 + $0xc] sm:$0xc] %vm461, 0
          %463 = vst.msk [vmem:[#allocation2 + $0x10] sm:$0xf] %vm258, 0
          %464 = vst.msk [vmem:[#allocation2 + $0x20] sm:$0xc] %vm461, 0
          %465 = vst.msk [vmem:[#allocation2 + $0x24] sm:$0xf] %vm258, 0
          %466 = vst.msk [vmem:[#allocation2 + $0x34] sm:$0xc] %vm461, 0
          %467 = vst.msk [vmem:[#allocation2 + $0x38] sm:$0xf] %vm258, 0
          %468 = vst.msk [vmem:[#allocation2 + $0x48] sm:$0xc] %vm461, 0
          %469 = vst.msk [vmem:[#allocation2 + $0x4c] sm:$0xf] %vm258, 0
          %470 = vst.msk [vmem:[#allocation2 + $0x5c] sm:$0xc] %vm461, 0
          %471 = vst.msk [vmem:[#allocation2 + $0x60] sm:$0xf] %vm258, 0
          %472 = vst.msk [vmem:[#allocation2 + $0x70] sm:$0xc] %vm461, 0
          %473 = vst.msk [vmem:[#allocation2 + $0x74] sm:$0xf] %vm258, 0
          %474 = vst.msk [vmem:[#allocation2 + $0x84] sm:$0xc] %vm461, 0
          %475 = vst.msk [vmem:[#allocation2 + $0x88] sm:$0xf] %vm258, 0
          %476 = vst.msk [vmem:[#allocation2 + $0x98] sm:$0xc] %vm461, 0
          %477 = vst.msk [vmem:[#allocation2 + $0x9c] sm:$0xf] %vm258, 0
          %478 = vst.msk [vmem:[#allocation2 + $0xac] sm:$0xc] %vm461, 0
          %479 = vst.msk [vmem:[#allocation2 + $0xb0] sm:$0xf] %vm258, 0
          %480 = vst.msk [vmem:[#allocation2 + $0xc0] sm:$0xc] %vm461, 0
          %481 = vst.msk [vmem:[#allocation2 + $0xc4] sm:$0xf] %vm258, 0
          %482 = vst.msk [vmem:[#allocation2 + $0xd4] sm:$0xc] %vm461, 0
          %483 = vst.msk [vmem:[#allocation2 + $0xd8] sm:$0xf] %vm258, 0
          %484 = vst.msk [vmem:[#allocation2 + $0xe8] sm:$0xc] %vm461, 0
          %485 = vst.msk [vmem:[#allocation2 + $0xec] sm:$0xf] %vm258, 0
          %486 = vst.msk [vmem:[#allocation2 + $0xfc] sm:$0xc] %vm461, 0
          %487 = vst.msk [vmem:[#allocation2 + $0x100] sm:$0xf] %vm258, 0
          %488 = vst.msk [vmem:[#allocation2 + $0x110] sm:$0xc] %vm461, 0
          %489 = vst.msk [vmem:[#allocation2 + $0x114] sm:$0xf] %vm258, 0
          %490 = vst.msk [vmem:[#allocation2 + $0x124] sm:$0xc] %vm461, 0
          %491 = vst.msk [vmem:[#allocation2 + $0x128] sm:$0xf] %vm258, 0
          %492 = vst.msk [vmem:[#allocation2 + $0x138] sm:$0xc] %vm461, 0
          %493 = vst.msk [vmem:[#allocation2 + $0x13c] sm:$0xf] %vm258, 0
          %494 = vst.msk [vmem:[#allocation2 + $0x14c] sm:$0xc] %vm461, 0
          %495 = vst.msk [vmem:[#allocation2 + $0x150] sm:$0xf] %vm258, 0
          %496 = vst.msk [vmem:[#allocation2 + $0x160] sm:$0xc] %vm461, 0
          %497 = vst.msk [vmem:[#allocation2 + $0x164] sm:$0xf] %vm258, 0
          %498 = vst.msk [vmem:[#allocation2 + $0x174] sm:$0xc] %vm461, 0
          %499 = vst.msk [vmem:[#allocation2 + $0x178] sm:$0xf] %vm258, 0
          %500 = vst.msk [vmem:[#allocation2 + $0x188] sm:$0xc] %vm461, 0
          %501 = vst.msk [vmem:[#allocation2 + $0x18c] sm:$0xf] %vm258, 0
          %502 = vst.msk [vmem:[#allocation2 + $0x19c] sm:$0xc] %vm461, 0
          %503 = vst.msk [vmem:[#allocation2 + $0x1a0] sm:$0xf] %vm258, 0
          %504 = vst.msk [vmem:[#allocation2 + $0x1b0] sm:$0xc] %vm461, 0
          %505 = vst.msk [vmem:[#allocation2 + $0x1b4] sm:$0xf] %vm258, 0
          %506 = vst.msk [vmem:[#allocation2 + $0x1c4] sm:$0xc] %vm461, 0
          %507 = vst.msk [vmem:[#allocation2 + $0x1c8] sm:$0xf] %vm258, 0
          %508 = vst.msk [vmem:[#allocation2 + $0x1d8] sm:$0xc] %vm461, 0
          %509 = vst.msk [vmem:[#allocation2 + $0x1dc] sm:$0xf] %vm258, 0
          %510 = vst.msk [vmem:[#allocation2 + $0x1ec] sm:$0xc] %vm461, 0
          %511 = vst.msk [vmem:[#allocation2 + $0x1f0] sm:$0xf] %vm258, 0
          %512 = vst.msk [vmem:[#allocation2 + $0x200] sm:$0xc] %vm461, 0
          %513 = vst.msk [vmem:[#allocation2 + $0x204] sm:$0xf] %vm258, 0
          %514 = vst.msk [vmem:[#allocation2 + $0x214] sm:$0xc] %vm461, 0
          %515 = vst.msk [vmem:[#allocation2 + $0x218] sm:$0xf] %vm258, 0
          %516 = vst.msk [vmem:[#allocation2 + $0x228] sm:$0xc] %vm461, 0
          %517 = vst.msk [vmem:[#allocation2 + $0x22c] sm:$0xf] %vm258, 0
          %518 = vst.msk [vmem:[#allocation2 + $0x23c] sm:$0xc] %vm461, 0
          %519 = vst.msk [vmem:[#allocation2 + $0x240] sm:$0xf] %vm258, 0
          %520 = vst.msk [vmem:[#allocation2 + $0x250] sm:$0xc] %vm461, 0
          %521 = vst.msk [vmem:[#allocation2 + $0x254] sm:$0xf] %vm258, 0
          %522 = vst.msk [vmem:[#allocation2 + $0x264] sm:$0xc] %vm461, 0
          %523 = vst.msk [vmem:[#allocation2 + $0x268] sm:$0xf] %vm258, 0
          %524 = vst.msk [vmem:[#allocation2 + $0x278] sm:$0xc] %vm461, 0
          %525 = vst.msk [vmem:[#allocation2 + $0x27c] sm:$0xf] %vm258, 0
          %526 = vst.msk [vmem:[#allocation2 + $0x28c] sm:$0xc] %vm461, 0
          %527 = vst.msk [vmem:[#allocation2 + $0x290] sm:$0xf] %vm258, 0
          %528 = vst.msk [vmem:[#allocation2 + $0x2a0] sm:$0xc] %vm461, 0
          %529 = vst.msk [vmem:[#allocation2 + $0x2a4] sm:$0xf] %vm258, 0
          %530 = vst.msk [vmem:[#allocation2 + $0x2b4] sm:$0xc] %vm461, 0
          %531 = vst.msk [vmem:[#allocation2 + $0x2b8] sm:$0xf] %vm258, 0
          %532 = vst.msk [vmem:[#allocation2 + $0x2c8] sm:$0xc] %vm461, 0
          %533 = vst.msk [vmem:[#allocation2 + $0x2cc] sm:$0xf] %vm258, 0
          %534 = vst.msk [vmem:[#allocation2 + $0x2dc] sm:$0xc] %vm461, 0
          %535 = vst.msk [vmem:[#allocation2 + $0x2e0] sm:$0xf] %vm258, 0
          %536 = vst.msk [vmem:[#allocation2 + $0x2f0] sm:$0xc] %vm461, 0
          %537 = vst.msk [vmem:[#allocation2 + $0x2f4] sm:$0xf] %vm258, 0
          %538 = vst.msk [vmem:[#allocation2 + $0x304] sm:$0xc] %vm461, 0
          %539 = vst.msk [vmem:[#allocation2 + $0x308] sm:$0xf] %vm258, 0
          %540 = vst.msk [vmem:[#allocation2 + $0x318] sm:$0xc] %vm461, 0
          %541 = vst.msk [vmem:[#allocation2 + $0x31c] sm:$0xf] %vm258, 0
          %v542 = vld [vmem:[%s250] sm:$0xf]
          %v543 = vld [vmem:[%s250 + $0x4] sm:$0xf]
          %v544 = vld [vmem:[%s250 + $0x8] sm:$0xf]
          %v545 = vld [vmem:[%s250 + $0xc] sm:$0xf]
          %v546 = vld [vmem:[%s250 + $0x10] sm:$0xf]
          %v547 = vld [vmem:[%s250 + $0x14] sm:$0xf]
          %v548 = vld [vmem:[%s250 + $0x18] sm:$0xf]
          %v549 = vld [vmem:[%s250 + $0x1c] sm:$0xf]
          %v550 = vld [vmem:[%s250 + $0x20] sm:$0xf]
          %v551 = vld [vmem:[%s250 + $0x24] sm:$0xf]
          %v552 = vld [vmem:[%s250 + $0x28] sm:$0xf]
          %v553 = vld [vmem:[%s250 + $0x2c] sm:$0xf]
          %v554 = vld [vmem:[%s250 + $0x30] sm:$0xf]
          %v555 = vld [vmem:[%s250 + $0x34] sm:$0xf]
          %v556 = vld [vmem:[%s250 + $0x38] sm:$0xf]
          %v557 = vld [vmem:[%s250 + $0x3c] sm:$0xf]
          %v558 = vld [vmem:[%s250 + $0x40] sm:$0xf]
          %v559 = vld [vmem:[%s250 + $0x44] sm:$0xf]
          %v560 = vld [vmem:[%s250 + $0x48] sm:$0xf]
          %v561 = vld [vmem:[%s250 + $0x4c] sm:$0xf]
          %v562 = vld [vmem:[%s250 + $0x50] sm:$0xf]
          %v563 = vld [vmem:[%s250 + $0x54] sm:$0xf]
          %v564 = vld [vmem:[%s250 + $0x58] sm:$0xf]
          %v565 = vld [vmem:[%s250 + $0x5c] sm:$0xf]
          %v566 = vld [vmem:[%s250 + $0x60] sm:$0xf]
          %v567 = vld [vmem:[%s250 + $0x64] sm:$0xf]
          %v568 = vld [vmem:[%s250 + $0x68] sm:$0xf]
          %v569 = vld [vmem:[%s250 + $0x6c] sm:$0xf]
          %v570 = vld [vmem:[%s250 + $0x70] sm:$0xf]
          %v571 = vld [vmem:[%s250 + $0x74] sm:$0xf]
          %v572 = vld [vmem:[%s250 + $0x78] sm:$0xf]
          %v573 = vld [vmem:[%s250 + $0x7c] sm:$0xf]
          %vm606 = vcmask 1041408
          %vm607 = vcmask 1045508
          %vm608 = vmor %vm606, %vm607
          %v609 = vrot.slane %v542, 6
          %v610 = vrot.slane %v609, 4
          %v611 = vrot.slane %v543, 6
          %v612 = vsel %vm608, %v610, %v611
          %v613 = vrot.slane %v611, 4
          %v614 = vrot.slane %v544, 6
          %v615 = vrot.slane %v614, 4
          %v616 = vrot.slane %v545, 6
          %v617 = vsel %vm608, %v615, %v616
          %v618 = vrot.slane %v616, 4
          %v619 = vrot.slane %v546, 6
          %v620 = vrot.slane %v619, 4
          %v621 = vrot.slane %v547, 6
          %v622 = vsel %vm608, %v620, %v621
          %v623 = vrot.slane %v621, 4
          %v624 = vrot.slane %v548, 6
          %v625 = vrot.slane %v624, 4
          %v626 = vrot.slane %v549, 6
          %v627 = vsel %vm608, %v625, %v626
          %v628 = vrot.slane %v626, 4
          %v629 = vrot.slane %v550, 6
          %v630 = vrot.slane %v629, 4
          %v631 = vrot.slane %v551, 6
          %v632 = vsel %vm608, %v630, %v631
          %v633 = vrot.slane %v631, 4
          %v634 = vrot.slane %v552, 6
          %v635 = vrot.slane %v634, 4
          %v636 = vrot.slane %v553, 6
          %v637 = vsel %vm608, %v635, %v636
          %v638 = vrot.slane %v636, 4
          %v639 = vrot.slane %v554, 6
          %v640 = vrot.slane %v639, 4
          %v641 = vrot.slane %v555, 6
          %v642 = vsel %vm608, %v640, %v641
          %v643 = vrot.slane %v641, 4
          %v644 = vrot.slane %v556, 6
          %v645 = vrot.slane %v644, 4
          %v646 = vrot.slane %v557, 6
          %v647 = vsel %vm608, %v645, %v646
          %v648 = vrot.slane %v646, 4
          %v649 = vrot.slane %v558, 6
          %v650 = vrot.slane %v649, 4
          %v651 = vrot.slane %v559, 6
          %v652 = vsel %vm608, %v650, %v651
          %v653 = vrot.slane %v651, 4
          %v654 = vrot.slane %v560, 6
          %v655 = vrot.slane %v654, 4
          %v656 = vrot.slane %v561, 6
          %v657 = vsel %vm608, %v655, %v656
          %v658 = vrot.slane %v656, 4
          %v659 = vrot.slane %v562, 6
          %v660 = vrot.slane %v659, 4
          %v661 = vrot.slane %v563, 6
          %v662 = vsel %vm608, %v660, %v661
          %v663 = vrot.slane %v661, 4
          %v664 = vrot.slane %v564, 6
          %v665 = vrot.slane %v664, 4
          %v666 = vrot.slane %v565, 6
          %v667 = vsel %vm608, %v665, %v666
          %v668 = vrot.slane %v666, 4
          %v669 = vrot.slane %v566, 6
          %v670 = vrot.slane %v669, 4
          %v671 = vrot.slane %v567, 6
          %v672 = vsel %vm608, %v670, %v671
          %v673 = vrot.slane %v671, 4
          %v674 = vrot.slane %v568, 6
          %v675 = vrot.slane %v674, 4
          %v676 = vrot.slane %v569, 6
          %v677 = vsel %vm608, %v675, %v676
          %v678 = vrot.slane %v676, 4
          %v679 = vrot.slane %v570, 6
          %v680 = vrot.slane %v679, 4
          %v681 = vrot.slane %v571, 6
          %v682 = vsel %vm608, %v680, %v681
          %v683 = vrot.slane %v681, 4
          %v684 = vrot.slane %v572, 6
          %v685 = vrot.slane %v684, 4
          %v686 = vrot.slane %v573, 6
          %v687 = vsel %vm608, %v685, %v686
          %v688 = vrot.slane %v686, 4
          %s737 = scalar_lea.vmem [#allocation2], 240
          %738 = vst.msk [vmem:[%s737 + $0x4] sm:$0xc] %vm461, %v609
          %739 = vst.msk [vmem:[%s737 + $0x8] sm:$0xf] %vm258, %v612
          %740 = vst.msk [vmem:[%s737 + $0xc] sm:$0x3] %vm381, %v613
          %741 = vst.msk [vmem:[%s737 + $0x18] sm:$0xc] %vm461, %v614
          %742 = vst.msk [vmem:[%s737 + $0x1c] sm:$0xf] %vm258, %v617
          %743 = vst.msk [vmem:[%s737 + $0x20] sm:$0x3] %vm381, %v618
          %744 = vst.msk [vmem:[%s737 + $0x2c] sm:$0xc] %vm461, %v619
          %745 = vst.msk [vmem:[%s737 + $0x30] sm:$0xf] %vm258, %v622
          %746 = vst.msk [vmem:[%s737 + $0x34] sm:$0x3] %vm381, %v623
          %747 = vst.msk [vmem:[%s737 + $0x40] sm:$0xc] %vm461, %v624
          %748 = vst.msk [vmem:[%s737 + $0x44] sm:$0xf] %vm258, %v627
          %749 = vst.msk [vmem:[%s737 + $0x48] sm:$0x3] %vm381, %v628
          %750 = vst.msk [vmem:[%s737 + $0x54] sm:$0xc] %vm461, %v629
          %751 = vst.msk [vmem:[%s737 + $0x58] sm:$0xf] %vm258, %v632
          %752 = vst.msk [vmem:[%s737 + $0x5c] sm:$0x3] %vm381, %v633
          %753 = vst.msk [vmem:[%s737 + $0x68] sm:$0xc] %vm461, %v634
          %754 = vst.msk [vmem:[%s737 + $0x6c] sm:$0xf] %vm258, %v637
          %755 = vst.msk [vmem:[%s737 + $0x70] sm:$0x3] %vm381, %v638
          %756 = vst.msk [vmem:[%s737 + $0x7c] sm:$0xc] %vm461, %v639
          %757 = vst.msk [vmem:[%s737 + $0x80] sm:$0xf] %vm258, %v642
          %758 = vst.msk [vmem:[%s737 + $0x84] sm:$0x3] %vm381, %v643
          %759 = vst.msk [vmem:[%s737 + $0x90] sm:$0xc] %vm461, %v644
          %760 = vst.msk [vmem:[%s737 + $0x94] sm:$0xf] %vm258, %v647
          %761 = vst.msk [vmem:[%s737 + $0x98] sm:$0x3] %vm381, %v648
          %762 = vst.msk [vmem:[%s737 + $0xa4] sm:$0xc] %vm461, %v649
          %763 = vst.msk [vmem:[%s737 + $0xa8] sm:$0xf] %vm258, %v652
          %764 = vst.msk [vmem:[%s737 + $0xac] sm:$0x3] %vm381, %v653
          %765 = vst.msk [vmem:[%s737 + $0xb8] sm:$0xc] %vm461, %v654
          %766 = vst.msk [vmem:[%s737 + $0xbc] sm:$0xf] %vm258, %v657
          %767 = vst.msk [vmem:[%s737 + $0xc0] sm:$0x3] %vm381, %v658
          %768 = vst.msk [vmem:[%s737 + $0xcc] sm:$0xc] %vm461, %v659
          %769 = vst.msk [vmem:[%s737 + $0xd0] sm:$0xf] %vm258, %v662
          %770 = vst.msk [vmem:[%s737 + $0xd4] sm:$0x3] %vm381, %v663
          %771 = vst.msk [vmem:[%s737 + $0xe0] sm:$0xc] %vm461, %v664
          %772 = vst.msk [vmem:[%s737 + $0xe4] sm:$0xf] %vm258, %v667
          %773 = vst.msk [vmem:[%s737 + $0xe8] sm:$0x3] %vm381, %v668
          %774 = vst.msk [vmem:[%s737 + $0xf4] sm:$0xc] %vm461, %v669
          %775 = vst.msk [vmem:[%s737 + $0xf8] sm:$0xf] %vm258, %v672
          %776 = vst.msk [vmem:[%s737 + $0xfc] sm:$0x3] %vm381, %v673
          %777 = vst.msk [vmem:[%s737 + $0x108] sm:$0xc] %vm461, %v674
          %778 = vst.msk [vmem:[%s737 + $0x10c] sm:$0xf] %vm258, %v677
          %779 = vst.msk [vmem:[%s737 + $0x110] sm:$0x3] %vm381, %v678
          %780 = vst.msk [vmem:[%s737 + $0x11c] sm:$0xc] %vm461, %v679
          %781 = vst.msk [vmem:[%s737 + $0x120] sm:$0xf] %vm258, %v682
          %782 = vst.msk [vmem:[%s737 + $0x124] sm:$0x3] %vm381, %v683
          %783 = vst.msk [vmem:[%s737 + $0x130] sm:$0xc] %vm461, %v684
          %784 = vst.msk [vmem:[%s737 + $0x134] sm:$0xf] %vm258, %v687
          %785 = vst.msk [vmem:[%s737 + $0x138] sm:$0x3] %vm381, %v688
        $region44: #{_lambda_.1} parent=39 // pred_fallthru
          _
        %s786 = sadd.s32 %s253, 12
        %s787 = smul.u32 %s786, 5
        %s788 = smul.addr %s787, 4
        %s789 = scalar_lea.vmem [#allocation2], %s788
        %v790 = vld [vmem:[%s789 + $0x4] sm:$0xc]
        %v791 = vld [vmem:[%s789 + $0x8] sm:$0xf]
        %v792 = vld [vmem:[%s789 + $0xc] sm:$0x3]
        %v793 = vld [vmem:[%s789 + $0x18] sm:$0xc]
        %v794 = vld [vmem:[%s789 + $0x1c] sm:$0xf]
        %v795 = vld [vmem:[%s789 + $0x20] sm:$0x3]
        %v796 = vld [vmem:[%s789 + $0x2c] sm:$0xc]
        %v797 = vld [vmem:[%s789 + $0x30] sm:$0xf]
        %v798 = vld [vmem:[%s789 + $0x34] sm:$0x3]
        %v799 = vld [vmem:[%s789 + $0x40] sm:$0xc]
        %v800 = vld [vmem:[%s789 + $0x44] sm:$0xf]
        %v801 = vld [vmem:[%s789 + $0x48] sm:$0x3]
        %v802 = vld [vmem:[%s789 + $0x54] sm:$0xc]
        %v803 = vld [vmem:[%s789 + $0x58] sm:$0xf]
        %v804 = vld [vmem:[%s789 + $0x5c] sm:$0x3]
        %v805 = vld [vmem:[%s789 + $0x68] sm:$0xc]
        %v806 = vld [vmem:[%s789 + $0x6c] sm:$0xf]
        %v807 = vld [vmem:[%s789 + $0x70] sm:$0x3]
        %v808 = vld [vmem:[%s789 + $0x7c] sm:$0xc]
        %v809 = vld [vmem:[%s789 + $0x80] sm:$0xf]
        %v810 = vld [vmem:[%s789 + $0x84] sm:$0x3]
        %v811 = vld [vmem:[%s789 + $0x90] sm:$0xc]
        %v812 = vld [vmem:[%s789 + $0x94] sm:$0xf]
        %v813 = vld [vmem:[%s789 + $0x98] sm:$0x3]
        %vm838 = vcmask 1041408
        %vm839 = vcmask 1045508
        %vm840 = vmor %vm838, %vm839
        %v841 = vrot.slane %v790, 6
        %v842 = vrot.slane %v841, 4
        %v843 = vrot.slane %v791, 6
        %v844 = vsel %vm840, %v842, %v843
        %v845 = vrot.slane %v843, 4
        %v846 = vrot.slane %v792, 6
        %v847 = vsel %vm840, %v845, %v846
        %v848 = vrot.slane %v793, 6
        %v849 = vrot.slane %v848, 4
        %v850 = vrot.slane %v794, 6
        %v851 = vsel %vm840, %v849, %v850
        %v852 = vrot.slane %v850, 4
        %v853 = vrot.slane %v795, 6
        %v854 = vsel %vm840, %v852, %v853
        %v855 = vrot.slane %v796, 6
        %v856 = vrot.slane %v855, 4
        %v857 = vrot.slane %v797, 6
        %v858 = vsel %vm840, %v856, %v857
        %v859 = vrot.slane %v857, 4
        %v860 = vrot.slane %v798, 6
        %v861 = vsel %vm840, %v859, %v860
        %v862 = vrot.slane %v799, 6
        %v863 = vrot.slane %v862, 4
        %v864 = vrot.slane %v800, 6
        %v865 = vsel %vm840, %v863, %v864
        %v866 = vrot.slane %v864, 4
        %v867 = vrot.slane %v801, 6
        %v868 = vsel %vm840, %v866, %v867
        %v869 = vrot.slane %v802, 6
        %v870 = vrot.slane %v869, 4
        %v871 = vrot.slane %v803, 6
        %v872 = vsel %vm840, %v870, %v871
        %v873 = vrot.slane %v871, 4
        %v874 = vrot.slane %v804, 6
        %v875 = vsel %vm840, %v873, %v874
        %v876 = vrot.slane %v805, 6
        %v877 = vrot.slane %v876, 4
        %v878 = vrot.slane %v806, 6
        %v879 = vsel %vm840, %v877, %v878
        %v880 = vrot.slane %v878, 4
        %v881 = vrot.slane %v807, 6
        %v882 = vsel %vm840, %v880, %v881
        %v883 = vrot.slane %v808, 6
        %v884 = vrot.slane %v883, 4
        %v885 = vrot.slane %v809, 6
        %v886 = vsel %vm840, %v884, %v885
        %v887 = vrot.slane %v885, 4
        %v888 = vrot.slane %v810, 6
        %v889 = vsel %vm840, %v887, %v888
        %v890 = vrot.slane %v811, 6
        %v891 = vrot.slane %v890, 4
        %v892 = vrot.slane %v812, 6
        %v893 = vsel %vm840, %v891, %v892
        %v894 = vrot.slane %v892, 4
        %v895 = vrot.slane %v813, 6
        %v896 = vsel %vm840, %v894, %v895
        %v897 = vld [vmem:[%s2] sm:$0xff]
        %v898 = vld [vmem:[%s2 + $0x8] sm:$0xf]
        %v899 = vld [vmem:[%s2 + $0xc] sm:$0xff]
        %v900 = vld [vmem:[%s2 + $0x14] sm:$0xf]
        %v901 = vld [vmem:[%s2 + $0x18] sm:$0xff]
        %v902 = vld [vmem:[%s2 + $0x20] sm:$0xf]
        %v903 = vld [vmem:[%s2 + $0x24] sm:$0xff]
        %v904 = vld [vmem:[%s2 + $0x2c] sm:$0xf]
        %v905 = vunpack.c.l.b16 %v844
        %v906 = vunpack.c.l.b16 %v847
        %v907 = vunpack.c.l.b16 %v851
        %v908 = vunpack.c.l.b16 %v854
        %v909 = vunpack.c.l.b16 %v858
        %v910 = vunpack.c.l.b16 %v861
        %v911 = vunpack.c.l.b16 %v865
        %v912 = vunpack.c.l.b16 %v868
        %v913 = vunpack.c.l.b16 %v872
        %v914 = vunpack.c.l.b16 %v875
        %v915 = vunpack.c.l.b16 %v879
        %v916 = vunpack.c.l.b16 %v882
        %v917 = vunpack.c.l.b16 %v886
        %v918 = vunpack.c.l.b16 %v889
        %v919 = vunpack.c.l.b16 %v893
        %v920 = vunpack.c.l.b16 %v896
        %v921 = vpack.c.b16 %v906, %v905
        %v922 = vpack.c.b16 %v908, %v907
        %v923 = vpack.c.b16 %v910, %v909
        %v924 = vpack.c.b16 %v912, %v911
        %v925 = vpack.c.b16 %v914, %v913
        %v926 = vpack.c.b16 %v916, %v915
        %v927 = vpack.c.b16 %v918, %v917
        %v928 = vpack.c.b16 %v920, %v919
        %v937 = vunpack.c.l.b16 %v897
        %v938 = vunpack.c.h.b16 %v897
        %v939 = vunpack.c.l.b16 %v898
        %v940 = vunpack.c.l.b16 %v899
        %v941 = vunpack.c.h.b16 %v899
        %v942 = vunpack.c.l.b16 %v900
        %v943 = vunpack.c.l.b16 %v901
        %v944 = vunpack.c.h.b16 %v901
        %v945 = vunpack.c.l.b16 %v902
        %v946 = vunpack.c.l.b16 %v903
        %v947 = vunpack.c.h.b16 %v903
        %v948 = vunpack.c.l.b16 %v904
        %v949 = vpack.c.b16 %v940, %v937
        %v950 = vpack.c.b16 %v941, %v938
        %v951 = vpack.c.b16 %v942, %v939
        %v952 = vpack.c.b16 %v946, %v943
        %v953 = vpack.c.b16 %v947, %v944
        %v954 = vpack.c.b16 %v948, %v945
        %vm961 = vcmask 261120
        %v963 = vsel %vm961, %v921, 0
        %v966 = vsel %vm961, %v922, 0
        %v969 = vsel %vm961, %v923, 0
        %v972 = vsel %vm961, %v924, 0
        %v975 = vsel %vm961, %v925, 0
        %v978 = vsel %vm961, %v926, 0
        %v981 = vsel %vm961, %v927, 0
        %v984 = vsel %vm961, %v928, 0
        %986 = vmatprep.subr.bf16.mxu0 0
        %987 = vmatpush1.bf16.msra.mxu0 0
        %988 = vmatprep.subr.bf16.mxu0 0
        %989 = vmatpush1.bf16.msra.mxu0 0
        %990 = vmatprep.subr.bf16.mxu0 0
        %991 = vmatpush1.bf16.msra.mxu0 0
        %992 = vmatprep.subr.bf16.mxu0 0
        %993 = vmatpush1.bf16.msra.mxu0 0
        %994 = vmatprep.subr.bf16.mxu0 0
        %995 = vmatpush1.bf16.msra.mxu0 0
        %996 = vmatprep.subr.bf16.mxu0 0
        %997 = vmatpush1.bf16.msra.mxu0 0
        %998 = vmatprep.subr.bf16.mxu0 %v953
        %999 = vmatpush1.bf16.msra.mxu0 %v952
        %1000 = vmatprep.subr.bf16.mxu0 %v950
        %1001 = vmatpush1.bf16.msra.mxu0 %v949
        %1002 = vmatprep.subr.bf16.mxu0 0
        %1003 = vmatpush2.bf16.msra.mxu0 0
        %1004 = vmatprep.subr.bf16.mxu0 0
        %1005 = vmatpush2.bf16.msra.mxu0 0
        %1006 = vmatprep.subr.bf16.mxu0 0
        %1007 = vmatpush2.bf16.msra.mxu0 0
        %1008 = vmatprep.subr.bf16.mxu0 0
        %1009 = vmatpush2.bf16.msra.mxu0 0
        %1010 = vmatprep.subr.bf16.mxu0 0
        %1011 = vmatpush2.bf16.msra.mxu0 0
        %1012 = vmatprep.subr.bf16.mxu0 0
        %1013 = vmatpush2.bf16.msra.mxu0 0
        %1014 = vmatprep.subr.bf16.mxu0 0
        %1015 = vmatpush2.bf16.msra.mxu0 0
        %1016 = vmatprep.subr.bf16.mxu0 0
        %1017 = vmatpush2.bf16.msra.mxu0 0
        %1018 = vmatprep.mubr.bf16.mxu0 0
        %1019 = vmatmul.mubr.bf16.gmra.mxu0 %v963
        %v1020 = vpop.f32.mrf.mxu0
        %v1021 = vadd.f32 0.0, %v1020
        %v1022 = vpop.f32.mrf.mxu0
        %v1023 = vadd.f32 0.0, %v1022
        %v1024 = vpop.f32.mrf.mxu0
        %v1025 = vadd.f32 0.0, %v1024
        %v1026 = vpop.f32.mrf.mxu0
        %v1027 = vadd.f32 0.0, %v1026
        %1028 = vmatprep.mubr.bf16.mxu0 0
        %1029 = vmatmul.mubr.bf16.gmra.mxu0 %v966
        %v1030 = vpop.f32.mrf.mxu0
        %v1031 = vadd.f32 0.0, %v1030
        %v1032 = vpop.f32.mrf.mxu0
        %v1033 = vadd.f32 0.0, %v1032
        %v1034 = vpop.f32.mrf.mxu0
        %v1035 = vadd.f32 0.0, %v1034
        %v1036 = vpop.f32.mrf.mxu0
        %v1037 = vadd.f32 0.0, %v1036
        %1038 = vmatprep.mubr.bf16.mxu0 0
        %1039 = vmatmul.mubr.bf16.gmra.mxu0 %v969
        %v1040 = vpop.f32.mrf.mxu0
        %v1041 = vadd.f32 0.0, %v1040
        %v1042 = vpop.f32.mrf.mxu0
        %v1043 = vadd.f32 0.0, %v1042
        %v1044 = vpop.f32.mrf.mxu0
        %v1045 = vadd.f32 0.0, %v1044
        %v1046 = vpop.f32.mrf.mxu0
        %v1047 = vadd.f32 0.0, %v1046
        %1048 = vmatprep.mubr.bf16.mxu0 0
        %1049 = vmatmul.mubr.bf16.gmra.mxu0 %v972
        %v1050 = vpop.f32.mrf.mxu0
        %v1051 = vadd.f32 0.0, %v1050
        %v1052 = vpop.f32.mrf.mxu0
        %v1053 = vadd.f32 0.0, %v1052
        %v1054 = vpop.f32.mrf.mxu0
        %v1055 = vadd.f32 0.0, %v1054
        %v1056 = vpop.f32.mrf.mxu0
        %v1057 = vadd.f32 0.0, %v1056
        %1058 = vmatprep.mubr.bf16.mxu0 0
        %1059 = vmatmul.mubr.bf16.gmra.mxu0 %v975
        %v1060 = vpop.f32.mrf.mxu0
        %v1061 = vadd.f32 0.0, %v1060
        %v1062 = vpop.f32.mrf.mxu0
        %v1063 = vadd.f32 0.0, %v1062
        %v1064 = vpop.f32.mrf.mxu0
        %v1065 = vadd.f32 0.0, %v1064
        %v1066 = vpop.f32.mrf.mxu0
        %v1067 = vadd.f32 0.0, %v1066
        %1068 = vmatprep.mubr.bf16.mxu0 0
        %1069 = vmatmul.mubr.bf16.gmra.mxu0 %v978
        %v1070 = vpop.f32.mrf.mxu0
        %v1071 = vadd.f32 0.0, %v1070
        %v1072 = vpop.f32.mrf.mxu0
        %v1073 = vadd.f32 0.0, %v1072
        %v1074 = vpop.f32.mrf.mxu0
        %v1075 = vadd.f32 0.0, %v1074
        %v1076 = vpop.f32.mrf.mxu0
        %v1077 = vadd.f32 0.0, %v1076
        %1078 = vmatprep.mubr.bf16.mxu0 0
        %1079 = vmatmul.mubr.bf16.gmra.mxu0 %v981
        %v1080 = vpop.f32.mrf.mxu0
        %v1081 = vadd.f32 0.0, %v1080
        %v1082 = vpop.f32.mrf.mxu0
        %v1083 = vadd.f32 0.0, %v1082
        %v1084 = vpop.f32.mrf.mxu0
        %v1085 = vadd.f32 0.0, %v1084
        %v1086 = vpop.f32.mrf.mxu0
        %v1087 = vadd.f32 0.0, %v1086
        %1088 = vmatprep.mubr.bf16.mxu0 0
        %1089 = vmatmul.mubr.bf16.gmra.mxu0 %v984
        %v1090 = vpop.f32.mrf.mxu0
        %v1091 = vadd.f32 0.0, %v1090
        %v1092 = vpop.f32.mrf.mxu0
        %v1093 = vadd.f32 0.0, %v1092
        %v1094 = vpop.f32.mrf.mxu0
        %v1095 = vadd.f32 0.0, %v1094
        %v1096 = vpop.f32.mrf.mxu0
        %v1097 = vadd.f32 0.0, %v1096
        %1098 = vdwg.mxu0
        %1099 = vmatprep.subr.bf16.mxu0 0
        %1100 = vmatpush1.bf16.msra.mxu0 0
        %1101 = vmatprep.subr.bf16.mxu0 0
        %1102 = vmatpush1.bf16.msra.mxu0 0
        %1103 = vmatprep.subr.bf16.mxu0 0
        %1104 = vmatpush1.bf16.msra.mxu0 0
        %1105 = vmatprep.subr.bf16.mxu0 0
        %1106 = vmatpush1.bf16.msra.mxu0 0
        %1107 = vmatprep.subr.bf16.mxu0 0
        %1108 = vmatpush1.bf16.msra.mxu0 0
        %1109 = vmatprep.subr.bf16.mxu0 0
        %1110 = vmatpush1.bf16.msra.mxu0 0
        %1111 = vmatprep.subr.bf16.mxu0 0
        %1112 = vmatpush1.bf16.msra.mxu0 %v954
        %1113 = vmatprep.subr.bf16.mxu0 0
        %1114 = vmatpush1.bf16.msra.mxu0 %v951
        %1115 = vmatprep.subr.bf16.mxu0 0
        %1116 = vmatpush2.bf16.msra.mxu0 0
        %1117 = vmatprep.subr.bf16.mxu0 0
        %1118 = vmatpush2.bf16.msra.mxu0 0
        %1119 = vmatprep.subr.bf16.mxu0 0
        %1120 = vmatpush2.bf16.msra.mxu0 0
        %1121 = vmatprep.subr.bf16.mxu0 0
        %1122 = vmatpush2.bf16.msra.mxu0 0
        %1123 = vmatprep.subr.bf16.mxu0 0
        %1124 = vmatpush2.bf16.msra.mxu0 0
        %1125 = vmatprep.subr.bf16.mxu0 0
        %1126 = vmatpush2.bf16.msra.mxu0 0
        %1127 = vmatprep.subr.bf16.mxu0 0
        %1128 = vmatpush2.bf16.msra.mxu0 0
        %1129 = vmatprep.subr.bf16.mxu0 0
        %1130 = vmatpush2.bf16.msra.mxu0 0
        %1131 = vmatprep.mubr.bf16.mxu0 0
        %1132 = vmatmul.mubr.bf16.gmra.mxu0 %v963
        %v1133 = vpop.f32.mrf.mxu0
        %v1134 = vadd.f32 0.0, %v1133
        %v1135 = vpop.f32.mrf.mxu0
        %v1136 = vpop.f32.mrf.mxu0
        %v1137 = vadd.f32 0.0, %v1136
        %v1138 = vpop.f32.mrf.mxu0
        %1139 = vmatprep.mubr.bf16.mxu0 0
        %1140 = vmatmul.mubr.bf16.gmra.mxu0 %v966
        %v1141 = vpop.f32.mrf.mxu0
        %v1142 = vadd.f32 0.0, %v1141
        %v1143 = vpop.f32.mrf.mxu0
        %v1144 = vpop.f32.mrf.mxu0
        %v1145 = vadd.f32 0.0, %v1144
        %v1146 = vpop.f32.mrf.mxu0
        %1147 = vmatprep.mubr.bf16.mxu0 0
        %1148 = vmatmul.mubr.bf16.gmra.mxu0 %v969
        %v1149 = vpop.f32.mrf.mxu0
        %v1150 = vadd.f32 0.0, %v1149
        %v1151 = vpop.f32.mrf.mxu0
        %v1152 = vpop.f32.mrf.mxu0
        %v1153 = vadd.f32 0.0, %v1152
        %v1154 = vpop.f32.mrf.mxu0
        %1155 = vmatprep.mubr.bf16.mxu0 0
        %1156 = vmatmul.mubr.bf16.gmra.mxu0 %v972
        %v1157 = vpop.f32.mrf.mxu0
        %v1158 = vadd.f32 0.0, %v1157
        %v1159 = vpop.f32.mrf.mxu0
        %v1160 = vpop.f32.mrf.mxu0
        %v1161 = vadd.f32 0.0, %v1160
        %v1162 = vpop.f32.mrf.mxu0
        %1163 = vmatprep.mubr.bf16.mxu0 0
        %1164 = vmatmul.mubr.bf16.gmra.mxu0 %v975
        %v1165 = vpop.f32.mrf.mxu0
        %v1166 = vadd.f32 0.0, %v1165
        %v1167 = vpop.f32.mrf.mxu0
        %v1168 = vpop.f32.mrf.mxu0
        %v1169 = vadd.f32 0.0, %v1168
        %v1170 = vpop.f32.mrf.mxu0
        %1171 = vmatprep.mubr.bf16.mxu0 0
        %1172 = vmatmul.mubr.bf16.gmra.mxu0 %v978
        %v1173 = vpop.f32.mrf.mxu0
        %v1174 = vadd.f32 0.0, %v1173
        %v1175 = vpop.f32.mrf.mxu0
        %v1176 = vpop.f32.mrf.mxu0
        %v1177 = vadd.f32 0.0, %v1176
        %v1178 = vpop.f32.mrf.mxu0
        %1179 = vmatprep.mubr.bf16.mxu0 0
        %1180 = vmatmul.mubr.bf16.gmra.mxu0 %v981
        %v1181 = vpop.f32.mrf.mxu0
        %v1182 = vadd.f32 0.0, %v1181
        %v1183 = vpop.f32.mrf.mxu0
        %v1184 = vpop.f32.mrf.mxu0
        %v1185 = vadd.f32 0.0, %v1184
        %v1186 = vpop.f32.mrf.mxu0
        %1187 = vmatprep.mubr.bf16.mxu0 0
        %1188 = vmatmul.mubr.bf16.gmra.mxu0 %v984
        %v1189 = vpop.f32.mrf.mxu0
        %v1190 = vadd.f32 0.0, %v1189
        %v1191 = vpop.f32.mrf.mxu0
        %v1192 = vpop.f32.mrf.mxu0
        %v1193 = vadd.f32 0.0, %v1192
        %v1194 = vpop.f32.mrf.mxu0
        %1195 = vdwg.mxu0
        %s1196 = smul.u32 %s253, 5
        %s1197 = smul.addr %s1196, 4
        %s1198 = scalar_lea.vmem [#allocation2], %s1197
        %v1199 = vld [vmem:[%s1198] sm:$0xf]
        %v1200 = vld [vmem:[%s1198 + $0x4] sm:$0xf]
        %v1201 = vld [vmem:[%s1198 + $0x14] sm:$0xf]
        %v1202 = vld [vmem:[%s1198 + $0x18] sm:$0xf]
        %v1203 = vld [vmem:[%s1198 + $0x28] sm:$0xf]
        %v1204 = vld [vmem:[%s1198 + $0x2c] sm:$0xf]
        %v1205 = vld [vmem:[%s1198 + $0x3c] sm:$0xf]
        %v1206 = vld [vmem:[%s1198 + $0x40] sm:$0xf]
        %v1207 = vld [vmem:[%s1198 + $0x50] sm:$0xf]
        %v1208 = vld [vmem:[%s1198 + $0x54] sm:$0xf]
        %v1209 = vld [vmem:[%s1198 + $0x64] sm:$0xf]
        %v1210 = vld [vmem:[%s1198 + $0x68] sm:$0xf]
        %v1211 = vld [vmem:[%s1198 + $0x78] sm:$0xf]
        %v1212 = vld [vmem:[%s1198 + $0x7c] sm:$0xf]
        %v1213 = vld [vmem:[%s1198 + $0x8c] sm:$0xf]
        %v1214 = vld [vmem:[%s1198 + $0x90] sm:$0xf]
        %v1215 = vld [vmem:[%s1198 + $0xf0] sm:$0xf]
        %v1216 = vld [vmem:[%s1198 + $0xf4] sm:$0xf]
        %v1217 = vld [vmem:[%s1198 + $0x104] sm:$0xf]
        %v1218 = vld [vmem:[%s1198 + $0x108] sm:$0xf]
        %v1219 = vld [vmem:[%s1198 + $0x118] sm:$0xf]
        %v1220 = vld [vmem:[%s1198 + $0x11c] sm:$0xf]
        %v1221 = vld [vmem:[%s1198 + $0x12c] sm:$0xf]
        %v1222 = vld [vmem:[%s1198 + $0x130] sm:$0xf]
        %v1223 = vld [vmem:[%s1198 + $0x140] sm:$0xf]
        %v1224 = vld [vmem:[%s1198 + $0x144] sm:$0xf]
        %v1225 = vld [vmem:[%s1198 + $0x154] sm:$0xf]
        %v1226 = vld [vmem:[%s1198 + $0x158] sm:$0xf]
        %v1227 = vld [vmem:[%s1198 + $0x168] sm:$0xf]
        %v1228 = vld [vmem:[%s1198 + $0x16c] sm:$0xf]
        %v1229 = vld [vmem:[%s1198 + $0x17c] sm:$0xf]
        %v1230 = vld [vmem:[%s1198 + $0x180] sm:$0xf]
        %v1231 = vld [vmem:[%s1198 + $0x1e0] sm:$0xf]
        %v1232 = vld [vmem:[%s1198 + $0x1e4] sm:$0xf]
        %v1233 = vld [vmem:[%s1198 + $0x1f4] sm:$0xf]
        %v1234 = vld [vmem:[%s1198 + $0x1f8] sm:$0xf]
        %v1235 = vld [vmem:[%s1198 + $0x208] sm:$0xf]
        %v1236 = vld [vmem:[%s1198 + $0x20c] sm:$0xf]
        %v1237 = vld [vmem:[%s1198 + $0x21c] sm:$0xf]
        %v1238 = vld [vmem:[%s1198 + $0x220] sm:$0xf]
        %v1239 = vld [vmem:[%s1198 + $0x230] sm:$0xf]
        %v1240 = vld [vmem:[%s1198 + $0x234] sm:$0xf]
        %v1241 = vld [vmem:[%s1198 + $0x244] sm:$0xf]
        %v1242 = vld [vmem:[%s1198 + $0x248] sm:$0xf]
        %v1243 = vld [vmem:[%s1198 + $0x258] sm:$0xf]
        %v1244 = vld [vmem:[%s1198 + $0x25c] sm:$0xf]
        %v1245 = vld [vmem:[%s1198 + $0x26c] sm:$0xf]
        %v1246 = vld [vmem:[%s1198 + $0x270] sm:$0xf]
        %vm1247 = vcmask 257024
        %1248 = vst.msk [vmem:[#allocation3] sm:$0xf] %vm1247, %v1199
        %1249 = vst.msk [vmem:[#allocation3 + $0xc] sm:$0xf] %vm1247, %v1200
        %1250 = vst.msk [vmem:[#allocation3 + $0x18] sm:$0xf] %vm1247, %v1201
        %1251 = vst.msk [vmem:[#allocation3 + $0x24] sm:$0xf] %vm1247, %v1202
        %1252 = vst.msk [vmem:[#allocation3 + $0x30] sm:$0xf] %vm1247, %v1203
        %1253 = vst.msk [vmem:[#allocation3 + $0x3c] sm:$0xf] %vm1247, %v1204
        %1254 = vst.msk [vmem:[#allocation3 + $0x48] sm:$0xf] %vm1247, %v1205
        %1255 = vst.msk [vmem:[#allocation3 + $0x54] sm:$0xf] %vm1247, %v1206
        %1256 = vst.msk [vmem:[#allocation3 + $0x60] sm:$0xf] %vm1247, %v1207
        %1257 = vst.msk [vmem:[#allocation3 + $0x6c] sm:$0xf] %vm1247, %v1208
        %1258 = vst.msk [vmem:[#allocation3 + $0x78] sm:$0xf] %vm1247, %v1209
        %1259 = vst.msk [vmem:[#allocation3 + $0x84] sm:$0xf] %vm1247, %v1210
        %1260 = vst.msk [vmem:[#allocation3 + $0x90] sm:$0xf] %vm1247, %v1211
        %1261 = vst.msk [vmem:[#allocation3 + $0x9c] sm:$0xf] %vm1247, %v1212
        %1262 = vst.msk [vmem:[#allocation3 + $0xa8] sm:$0xf] %vm1247, %v1213
        %1263 = vst.msk [vmem:[#allocation3 + $0xb4] sm:$0xf] %vm1247, %v1214
        %1280 = vrot.lane.b32.xlu0 %v1215, 32
        %v1281 = vpop.permute.xlu0 %1280
        %1282 = vrot.lane.b32.xlu0 %v1216, 32
        %v1283 = vpop.permute.xlu0 %1282
        %1284 = vrot.lane.b32.xlu0 %v1217, 32
        %v1285 = vpop.permute.xlu0 %1284
        %1286 = vrot.lane.b32.xlu0 %v1218, 32
        %v1287 = vpop.permute.xlu0 %1286
        %1288 = vrot.lane.b32.xlu0 %v1219, 32
        %v1289 = vpop.permute.xlu0 %1288
        %1290 = vrot.lane.b32.xlu0 %v1220, 32
        %v1291 = vpop.permute.xlu0 %1290
        %1292 = vrot.lane.b32.xlu0 %v1221, 32
        %v1293 = vpop.permute.xlu0 %1292
        %1294 = vrot.lane.b32.xlu0 %v1222, 32
        %v1295 = vpop.permute.xlu0 %1294
        %1296 = vrot.lane.b32.xlu0 %v1223, 32
        %v1297 = vpop.permute.xlu0 %1296
        %1298 = vrot.lane.b32.xlu0 %v1224, 32
        %v1299 = vpop.permute.xlu0 %1298
        %1300 = vrot.lane.b32.xlu0 %v1225, 32
        %v1301 = vpop.permute.xlu0 %1300
        %1302 = vrot.lane.b32.xlu0 %v1226, 32
        %v1303 = vpop.permute.xlu0 %1302
        %1304 = vrot.lane.b32.xlu0 %v1227, 32
        %v1305 = vpop.permute.xlu0 %1304
        %1306 = vrot.lane.b32.xlu0 %v1228, 32
        %v1307 = vpop.permute.xlu0 %1306
        %1308 = vrot.lane.b32.xlu0 %v1229, 32
        %v1309 = vpop.permute.xlu0 %1308
        %1310 = vrot.lane.b32.xlu0 %v1230, 32
        %v1311 = vpop.permute.xlu0 %1310
        %vm1328 = vcmask 519424
        %1329 = vst.msk [vmem:[#allocation3] sm:$0xf] %vm1328, %v1281
        %1330 = vst.msk [vmem:[#allocation3 + $0xc] sm:$0xf] %vm1328, %v1283
        %1331 = vst.msk [vmem:[#allocation3 + $0x18] sm:$0xf] %vm1328, %v1285
        %1332 = vst.msk [vmem:[#allocation3 + $0x24] sm:$0xf] %vm1328, %v1287
        %1333 = vst.msk [vmem:[#allocation3 + $0x30] sm:$0xf] %vm1328, %v1289
        %1334 = vst.msk [vmem:[#allocation3 + $0x3c] sm:$0xf] %vm1328, %v1291
        %1335 = vst.msk [vmem:[#allocation3 + $0x48] sm:$0xf] %vm1328, %v1293
        %1336 = vst.msk [vmem:[#allocation3 + $0x54] sm:$0xf] %vm1328, %v1295
        %1337 = vst.msk [vmem:[#allocation3 + $0x60] sm:$0xf] %vm1328, %v1297
        %1338 = vst.msk [vmem:[#allocation3 + $0x6c] sm:$0xf] %vm1328, %v1299
        %1339 = vst.msk [vmem:[#allocation3 + $0x78] sm:$0xf] %vm1328, %v1301
        %1340 = vst.msk [vmem:[#allocation3 + $0x84] sm:$0xf] %vm1328, %v1303
        %1341 = vst.msk [vmem:[#allocation3 + $0x90] sm:$0xf] %vm1328, %v1305
        %1342 = vst.msk [vmem:[#allocation3 + $0x9c] sm:$0xf] %vm1328, %v1307
        %1343 = vst.msk [vmem:[#allocation3 + $0xa8] sm:$0xf] %vm1328, %v1309
        %1344 = vst.msk [vmem:[#allocation3 + $0xb4] sm:$0xf] %vm1328, %v1311
        %1361 = vrot.lane.b32.xlu0 %v1231, 64
        %v1362 = vpop.permute.xlu0 %1361
        %1363 = vrot.lane.b32.xlu0 %v1232, 64
        %v1364 = vpop.permute.xlu0 %1363
        %1365 = vrot.lane.b32.xlu0 %v1233, 64
        %v1366 = vpop.permute.xlu0 %1365
        %1367 = vrot.lane.b32.xlu0 %v1234, 64
        %v1368 = vpop.permute.xlu0 %1367
        %1369 = vrot.lane.b32.xlu0 %v1235, 64
        %v1370 = vpop.permute.xlu0 %1369
        %1371 = vrot.lane.b32.xlu0 %v1236, 64
        %v1372 = vpop.permute.xlu0 %1371
        %1373 = vrot.lane.b32.xlu0 %v1237, 64
        %v1374 = vpop.permute.xlu0 %1373
        %1375 = vrot.lane.b32.xlu0 %v1238, 64
        %v1376 = vpop.permute.xlu0 %1375
        %1377 = vrot.lane.b32.xlu0 %v1239, 64
        %v1378 = vpop.permute.xlu0 %1377
        %1379 = vrot.lane.b32.xlu0 %v1240, 64
        %v1380 = vpop.permute.xlu0 %1379
        %1381 = vrot.lane.b32.xlu0 %v1241, 64
        %v1382 = vpop.permute.xlu0 %1381
        %1383 = vrot.lane.b32.xlu0 %v1242, 64
        %v1384 = vpop.permute.xlu0 %1383
        %1385 = vrot.lane.b32.xlu0 %v1243, 64
        %v1386 = vpop.permute.xlu0 %1385
        %1387 = vrot.lane.b32.xlu0 %v1244, 64
        %v1388 = vpop.permute.xlu0 %1387
        %1389 = vrot.lane.b32.xlu0 %v1245, 64
        %v1390 = vpop.permute.xlu0 %1389
        %1391 = vrot.lane.b32.xlu0 %v1246, 64
        %v1392 = vpop.permute.xlu0 %1391
        %vm1409 = vcmask 781824
        %1410 = vst.msk [vmem:[#allocation3] sm:$0xf] %vm1409, %v1362
        %1411 = vst.msk [vmem:[#allocation3 + $0xc] sm:$0xf] %vm1409, %v1364
        %1412 = vst.msk [vmem:[#allocation3 + $0x18] sm:$0xf] %vm1409, %v1366
        %1413 = vst.msk [vmem:[#allocation3 + $0x24] sm:$0xf] %vm1409, %v1368
        %1414 = vst.msk [vmem:[#allocation3 + $0x30] sm:$0xf] %vm1409, %v1370
        %1415 = vst.msk [vmem:[#allocation3 + $0x3c] sm:$0xf] %vm1409, %v1372
        %1416 = vst.msk [vmem:[#allocation3 + $0x48] sm:$0xf] %vm1409, %v1374
        %1417 = vst.msk [vmem:[#allocation3 + $0x54] sm:$0xf] %vm1409, %v1376
        %1418 = vst.msk [vmem:[#allocation3 + $0x60] sm:$0xf] %vm1409, %v1378
        %1419 = vst.msk [vmem:[#allocation3 + $0x6c] sm:$0xf] %vm1409, %v1380
        %1420 = vst.msk [vmem:[#allocation3 + $0x78] sm:$0xf] %vm1409, %v1382
        %1421 = vst.msk [vmem:[#allocation3 + $0x84] sm:$0xf] %vm1409, %v1384
        %1422 = vst.msk [vmem:[#allocation3 + $0x90] sm:$0xf] %vm1409, %v1386
        %1423 = vst.msk [vmem:[#allocation3 + $0x9c] sm:$0xf] %vm1409, %v1388
        %1424 = vst.msk [vmem:[#allocation3 + $0xa8] sm:$0xf] %vm1409, %v1390
        %1425 = vst.msk [vmem:[#allocation3 + $0xb4] sm:$0xf] %vm1409, %v1392
        %v1426 = vld [vmem:[%s1198 + $0x4] sm:$0xc]
        %v1427 = vld [vmem:[%s1198 + $0x8] sm:$0xf]
        %v1428 = vld [vmem:[%s1198 + $0xc] sm:$0x3]
        %v1429 = vld [vmem:[%s1198 + $0x18] sm:$0xc]
        %v1430 = vld [vmem:[%s1198 + $0x1c] sm:$0xf]
        %v1431 = vld [vmem:[%s1198 + $0x20] sm:$0x3]
        %v1432 = vld [vmem:[%s1198 + $0x2c] sm:$0xc]
        %v1433 = vld [vmem:[%s1198 + $0x30] sm:$0xf]
        %v1434 = vld [vmem:[%s1198 + $0x34] sm:$0x3]
        %v1435 = vld [vmem:[%s1198 + $0x40] sm:$0xc]
        %v1436 = vld [vmem:[%s1198 + $0x44] sm:$0xf]
        %v1437 = vld [vmem:[%s1198 + $0x48] sm:$0x3]
        %v1438 = vld [vmem:[%s1198 + $0x54] sm:$0xc]
        %v1439 = vld [vmem:[%s1198 + $0x58] sm:$0xf]
        %v1440 = vld [vmem:[%s1198 + $0x5c] sm:$0x3]
        %v1441 = vld [vmem:[%s1198 + $0x68] sm:$0xc]
        %v1442 = vld [vmem:[%s1198 + $0x6c] sm:$0xf]
        %v1443 = vld [vmem:[%s1198 + $0x70] sm:$0x3]
        %v1444 = vld [vmem:[%s1198 + $0x7c] sm:$0xc]
        %v1445 = vld [vmem:[%s1198 + $0x80] sm:$0xf]
        %v1446 = vld [vmem:[%s1198 + $0x84] sm:$0x3]
        %v1447 = vld [vmem:[%s1198 + $0x90] sm:$0xc]
        %v1448 = vld [vmem:[%s1198 + $0x94] sm:$0xf]
        %v1449 = vld [vmem:[%s1198 + $0x98] sm:$0x3]
        %v1450 = vld [vmem:[%s1198 + $0xf4] sm:$0xc]
        %v1451 = vld [vmem:[%s1198 + $0xf8] sm:$0xf]
        %v1452 = vld [vmem:[%s1198 + $0xfc] sm:$0x3]
        %v1453 = vld [vmem:[%s1198 + $0x108] sm:$0xc]
        %v1454 = vld [vmem:[%s1198 + $0x10c] sm:$0xf]
        %v1455 = vld [vmem:[%s1198 + $0x110] sm:$0x3]
        %v1456 = vld [vmem:[%s1198 + $0x11c] sm:$0xc]
        %v1457 = vld [vmem:[%s1198 + $0x120] sm:$0xf]
        %v1458 = vld [vmem:[%s1198 + $0x124] sm:$0x3]
        %v1459 = vld [vmem:[%s1198 + $0x130] sm:$0xc]
        %v1460 = vld [vmem:[%s1198 + $0x134] sm:$0xf]
        %v1461 = vld [vmem:[%s1198 + $0x138] sm:$0x3]
        %v1462 = vld [vmem:[%s1198 + $0x144] sm:$0xc]
        %v1463 = vld [vmem:[%s1198 + $0x148] sm:$0xf]
        %v1464 = vld [vmem:[%s1198 + $0x14c] sm:$0x3]
        %v1465 = vld [vmem:[%s1198 + $0x158] sm:$0xc]
        %v1466 = vld [vmem:[%s1198 + $0x15c] sm:$0xf]
        %v1467 = vld [vmem:[%s1198 + $0x160] sm:$0x3]
        %v1468 = vld [vmem:[%s1198 + $0x16c] sm:$0xc]
        %v1469 = vld [vmem:[%s1198 + $0x170] sm:$0xf]
        %v1470 = vld [vmem:[%s1198 + $0x174] sm:$0x3]
        %v1471 = vld [vmem:[%s1198 + $0x180] sm:$0xc]
        %v1472 = vld [vmem:[%s1198 + $0x184] sm:$0xf]
        %v1473 = vld [vmem:[%s1198 + $0x188] sm:$0x3]
        %v1474 = vld [vmem:[%s1198 + $0x1e4] sm:$0xc]
        %v1475 = vld [vmem:[%s1198 + $0x1e8] sm:$0xf]
        %v1476 = vld [vmem:[%s1198 + $0x1ec] sm:$0x3]
        %v1477 = vld [vmem:[%s1198 + $0x1f8] sm:$0xc]
        %v1478 = vld [vmem:[%s1198 + $0x1fc] sm:$0xf]
        %v1479 = vld [vmem:[%s1198 + $0x200] sm:$0x3]
        %v1480 = vld [vmem:[%s1198 + $0x20c] sm:$0xc]
        %v1481 = vld [vmem:[%s1198 + $0x210] sm:$0xf]
        %v1482 = vld [vmem:[%s1198 + $0x214] sm:$0x3]
        %v1483 = vld [vmem:[%s1198 + $0x220] sm:$0xc]
        %v1484 = vld [vmem:[%s1198 + $0x224] sm:$0xf]
        %v1485 = vld [vmem:[%s1198 + $0x228] sm:$0x3]
        %v1486 = vld [vmem:[%s1198 + $0x234] sm:$0xc]
        %v1487 = vld [vmem:[%s1198 + $0x238] sm:$0xf]
        %v1488 = vld [vmem:[%s1198 + $0x23c] sm:$0x3]
        %v1489 = vld [vmem:[%s1198 + $0x248] sm:$0xc]
        %v1490 = vld [vmem:[%s1198 + $0x24c] sm:$0xf]
        %v1491 = vld [vmem:[%s1198 + $0x250] sm:$0x3]
        %v1492 = vld [vmem:[%s1198 + $0x25c] sm:$0xc]
        %v1493 = vld [vmem:[%s1198 + $0x260] sm:$0xf]
        %v1494 = vld [vmem:[%s1198 + $0x264] sm:$0x3]
        %v1495 = vld [vmem:[%s1198 + $0x270] sm:$0xc]
        %v1496 = vld [vmem:[%s1198 + $0x274] sm:$0xf]
        %v1497 = vld [vmem:[%s1198 + $0x278] sm:$0x3]
        %v1522 = vrot.slane %v1426, 6
        %v1523 = vrot.slane %v1522, 4
        %v1524 = vrot.slane %v1427, 6
        %v1525 = vsel %vm840, %v1523, %v1524
        %v1526 = vrot.slane %v1524, 4
        %v1527 = vrot.slane %v1428, 6
        %v1528 = vsel %vm840, %v1526, %v1527
        %v1529 = vrot.slane %v1429, 6
        %v1530 = vrot.slane %v1529, 4
        %v1531 = vrot.slane %v1430, 6
        %v1532 = vsel %vm840, %v1530, %v1531
        %v1533 = vrot.slane %v1531, 4
        %v1534 = vrot.slane %v1431, 6
        %v1535 = vsel %vm840, %v1533, %v1534
        %v1536 = vrot.slane %v1432, 6
        %v1537 = vrot.slane %v1536, 4
        %v1538 = vrot.slane %v1433, 6
        %v1539 = vsel %vm840, %v1537, %v1538
        %v1540 = vrot.slane %v1538, 4
        %v1541 = vrot.slane %v1434, 6
        %v1542 = vsel %vm840, %v1540, %v1541
        %v1543 = vrot.slane %v1435, 6
        %v1544 = vrot.slane %v1543, 4
        %v1545 = vrot.slane %v1436, 6
        %v1546 = vsel %vm840, %v1544, %v1545
        %v1547 = vrot.slane %v1545, 4
        %v1548 = vrot.slane %v1437, 6
        %v1549 = vsel %vm840, %v1547, %v1548
        %v1550 = vrot.slane %v1438, 6
        %v1551 = vrot.slane %v1550, 4
        %v1552 = vrot.slane %v1439, 6
        %v1553 = vsel %vm840, %v1551, %v1552
        %v1554 = vrot.slane %v1552, 4
        %v1555 = vrot.slane %v1440, 6
        %v1556 = vsel %vm840, %v1554, %v1555
        %v1557 = vrot.slane %v1441, 6
        %v1558 = vrot.slane %v1557, 4
        %v1559 = vrot.slane %v1442, 6
        %v1560 = vsel %vm840, %v1558, %v1559
        %v1561 = vrot.slane %v1559, 4
        %v1562 = vrot.slane %v1443, 6
        %v1563 = vsel %vm840, %v1561, %v1562
        %v1564 = vrot.slane %v1444, 6
        %v1565 = vrot.slane %v1564, 4
        %v1566 = vrot.slane %v1445, 6
        %v1567 = vsel %vm840, %v1565, %v1566
        %v1568 = vrot.slane %v1566, 4
        %v1569 = vrot.slane %v1446, 6
        %v1570 = vsel %vm840, %v1568, %v1569
        %v1571 = vrot.slane %v1447, 6
        %v1572 = vrot.slane %v1571, 4
        %v1573 = vrot.slane %v1448, 6
        %v1574 = vsel %vm840, %v1572, %v1573
        %v1575 = vrot.slane %v1573, 4
        %v1576 = vrot.slane %v1449, 6
        %v1577 = vsel %vm840, %v1575, %v1576
        %1578 = vrot.lane.b32.xlu0 %v1525, 96
        %v1579 = vpop.permute.xlu0 %1578
        %1580 = vrot.lane.b32.xlu0 %v1528, 96
        %v1581 = vpop.permute.xlu0 %1580
        %1582 = vrot.lane.b32.xlu0 %v1532, 96
        %v1583 = vpop.permute.xlu0 %1582
        %1584 = vrot.lane.b32.xlu0 %v1535, 96
        %v1585 = vpop.permute.xlu0 %1584
        %1586 = vrot.lane.b32.xlu0 %v1539, 96
        %v1587 = vpop.permute.xlu0 %1586
        %1588 = vrot.lane.b32.xlu0 %v1542, 96
        %v1589 = vpop.permute.xlu0 %1588
        %1590 = vrot.lane.b32.xlu0 %v1546, 96
        %v1591 = vpop.permute.xlu0 %1590
        %1592 = vrot.lane.b32.xlu0 %v1549, 96
        %v1593 = vpop.permute.xlu0 %1592
        %1594 = vrot.lane.b32.xlu0 %v1553, 96
        %v1595 = vpop.permute.xlu0 %1594
        %1596 = vrot.lane.b32.xlu0 %v1556, 96
        %v1597 = vpop.permute.xlu0 %1596
        %1598 = vrot.lane.b32.xlu0 %v1560, 96
        %v1599 = vpop.permute.xlu0 %1598
        %1600 = vrot.lane.b32.xlu0 %v1563, 96
        %v1601 = vpop.permute.xlu0 %1600
        %1602 = vrot.lane.b32.xlu0 %v1567, 96
        %v1603 = vpop.permute.xlu0 %1602
        %1604 = vrot.lane.b32.xlu0 %v1570, 96
        %v1605 = vpop.permute.xlu0 %1604
        %1606 = vrot.lane.b32.xlu0 %v1574, 96
        %v1607 = vpop.permute.xlu0 %1606
        %1608 = vrot.lane.b32.xlu0 %v1577, 96
        %v1609 = vpop.permute.xlu0 %1608
        %vm1626 = vcmask 1044224
        %1627 = vst.msk [vmem:[#allocation3] sm:$0xf] %vm1626, %v1579
        %1628 = vst.msk [vmem:[#allocation3 + $0xc] sm:$0xf] %vm1626, %v1581
        %1629 = vst.msk [vmem:[#allocation3 + $0x18] sm:$0xf] %vm1626, %v1583
        %1630 = vst.msk [vmem:[#allocation3 + $0x24] sm:$0xf] %vm1626, %v1585
        %1631 = vst.msk [vmem:[#allocation3 + $0x30] sm:$0xf] %vm1626, %v1587
        %1632 = vst.msk [vmem:[#allocation3 + $0x3c] sm:$0xf] %vm1626, %v1589
        %1633 = vst.msk [vmem:[#allocation3 + $0x48] sm:$0xf] %vm1626, %v1591
        %1634 = vst.msk [vmem:[#allocation3 + $0x54] sm:$0xf] %vm1626, %v1593
        %1635 = vst.msk [vmem:[#allocation3 + $0x60] sm:$0xf] %vm1626, %v1595
        %1636 = vst.msk [vmem:[#allocation3 + $0x6c] sm:$0xf] %vm1626, %v1597
        %1637 = vst.msk [vmem:[#allocation3 + $0x78] sm:$0xf] %vm1626, %v1599
        %1638 = vst.msk [vmem:[#allocation3 + $0x84] sm:$0xf] %vm1626, %v1601
        %1639 = vst.msk [vmem:[#allocation3 + $0x90] sm:$0xf] %vm1626, %v1603
        %1640 = vst.msk [vmem:[#allocation3 + $0x9c] sm:$0xf] %vm1626, %v1605
        %1641 = vst.msk [vmem:[#allocation3 + $0xa8] sm:$0xf] %vm1626, %v1607
        %1642 = vst.msk [vmem:[#allocation3 + $0xb4] sm:$0xf] %vm1626, %v1609
        %v1667 = vrot.slane %v1450, 6
        %v1668 = vrot.slane %v1667, 4
        %v1669 = vrot.slane %v1451, 6
        %v1670 = vsel %vm840, %v1668, %v1669
        %v1671 = vrot.slane %v1669, 4
        %v1672 = vrot.slane %v1452, 6
        %v1673 = vsel %vm840, %v1671, %v1672
        %v1674 = vrot.slane %v1453, 6
        %v1675 = vrot.slane %v1674, 4
        %v1676 = vrot.slane %v1454, 6
        %v1677 = vsel %vm840, %v1675, %v1676
        %v1678 = vrot.slane %v1676, 4
        %v1679 = vrot.slane %v1455, 6
        %v1680 = vsel %vm840, %v1678, %v1679
        %v1681 = vrot.slane %v1456, 6
        %v1682 = vrot.slane %v1681, 4
        %v1683 = vrot.slane %v1457, 6
        %v1684 = vsel %vm840, %v1682, %v1683
        %v1685 = vrot.slane %v1683, 4
        %v1686 = vrot.slane %v1458, 6
        %v1687 = vsel %vm840, %v1685, %v1686
        %v1688 = vrot.slane %v1459, 6
        %v1689 = vrot.slane %v1688, 4
        %v1690 = vrot.slane %v1460, 6
        %v1691 = vsel %vm840, %v1689, %v1690
        %v1692 = vrot.slane %v1690, 4
        %v1693 = vrot.slane %v1461, 6
        %v1694 = vsel %vm840, %v1692, %v1693
        %v1695 = vrot.slane %v1462, 6
        %v1696 = vrot.slane %v1695, 4
        %v1697 = vrot.slane %v1463, 6
        %v1698 = vsel %vm840, %v1696, %v1697
        %v1699 = vrot.slane %v1697, 4
        %v1700 = vrot.slane %v1464, 6
        %v1701 = vsel %vm840, %v1699, %v1700
        %v1702 = vrot.slane %v1465, 6
        %v1703 = vrot.slane %v1702, 4
        %v1704 = vrot.slane %v1466, 6
        %v1705 = vsel %vm840, %v1703, %v1704
        %v1706 = vrot.slane %v1704, 4
        %v1707 = vrot.slane %v1467, 6
        %v1708 = vsel %vm840, %v1706, %v1707
        %v1709 = vrot.slane %v1468, 6
        %v1710 = vrot.slane %v1709, 4
        %v1711 = vrot.slane %v1469, 6
        %v1712 = vsel %vm840, %v1710, %v1711
        %v1713 = vrot.slane %v1711, 4
        %v1714 = vrot.slane %v1470, 6
        %v1715 = vsel %vm840, %v1713, %v1714
        %v1716 = vrot.slane %v1471, 6
        %v1717 = vrot.slane %v1716, 4
        %v1718 = vrot.slane %v1472, 6
        %v1719 = vsel %vm840, %v1717, %v1718
        %v1720 = vrot.slane %v1718, 4
        %v1721 = vrot.slane %v1473, 6
        %v1722 = vsel %vm840, %v1720, %v1721
        %1739 = vst.msk [vmem:[#allocation3 + $0x4] sm:$0xf] %vm1247, %v1670
        %1740 = vst.msk [vmem:[#allocation3 + $0x10] sm:$0xf] %vm1247, %v1673
        %1741 = vst.msk [vmem:[#allocation3 + $0x1c] sm:$0xf] %vm1247, %v1677
        %1742 = vst.msk [vmem:[#allocation3 + $0x28] sm:$0xf] %vm1247, %v1680
        %1743 = vst.msk [vmem:[#allocation3 + $0x34] sm:$0xf] %vm1247, %v1684
        %1744 = vst.msk [vmem:[#allocation3 + $0x40] sm:$0xf] %vm1247, %v1687
        %1745 = vst.msk [vmem:[#allocation3 + $0x4c] sm:$0xf] %vm1247, %v1691
        %1746 = vst.msk [vmem:[#allocation3 + $0x58] sm:$0xf] %vm1247, %v1694
        %1747 = vst.msk [vmem:[#allocation3 + $0x64] sm:$0xf] %vm1247, %v1698
        %1748 = vst.msk [vmem:[#allocation3 + $0x70] sm:$0xf] %vm1247, %v1701
        %1749 = vst.msk [vmem:[#allocation3 + $0x7c] sm:$0xf] %vm1247, %v1705
        %1750 = vst.msk [vmem:[#allocation3 + $0x88] sm:$0xf] %vm1247, %v1708
        %1751 = vst.msk [vmem:[#allocation3 + $0x94] sm:$0xf] %vm1247, %v1712
        %1752 = vst.msk [vmem:[#allocation3 + $0xa0] sm:$0xf] %vm1247, %v1715
        %1753 = vst.msk [vmem:[#allocation3 + $0xac] sm:$0xf] %vm1247, %v1719
        %1754 = vst.msk [vmem:[#allocation3 + $0xb8] sm:$0xf] %vm1247, %v1722
        %v1779 = vrot.slane %v1474, 6
        %v1780 = vrot.slane %v1779, 4
        %v1781 = vrot.slane %v1475, 6
        %v1782 = vsel %vm840, %v1780, %v1781
        %v1783 = vrot.slane %v1781, 4
        %v1784 = vrot.slane %v1476, 6
        %v1785 = vsel %vm840, %v1783, %v1784
        %v1786 = vrot.slane %v1477, 6
        %v1787 = vrot.slane %v1786, 4
        %v1788 = vrot.slane %v1478, 6
        %v1789 = vsel %vm840, %v1787, %v1788
        %v1790 = vrot.slane %v1788, 4
        %v1791 = vrot.slane %v1479, 6
        %v1792 = vsel %vm840, %v1790, %v1791
        %v1793 = vrot.slane %v1480, 6
        %v1794 = vrot.slane %v1793, 4
        %v1795 = vrot.slane %v1481, 6
        %v1796 = vsel %vm840, %v1794, %v1795
        %v1797 = vrot.slane %v1795, 4
        %v1798 = vrot.slane %v1482, 6
        %v1799 = vsel %vm840, %v1797, %v1798
        %v1800 = vrot.slane %v1483, 6
        %v1801 = vrot.slane %v1800, 4
        %v1802 = vrot.slane %v1484, 6
        %v1803 = vsel %vm840, %v1801, %v1802
        %v1804 = vrot.slane %v1802, 4
        %v1805 = vrot.slane %v1485, 6
        %v1806 = vsel %vm840, %v1804, %v1805
        %v1807 = vrot.slane %v1486, 6
        %v1808 = vrot.slane %v1807, 4
        %v1809 = vrot.slane %v1487, 6
        %v1810 = vsel %vm840, %v1808, %v1809
        %v1811 = vrot.slane %v1809, 4
        %v1812 = vrot.slane %v1488, 6
        %v1813 = vsel %vm840, %v1811, %v1812
        %v1814 = vrot.slane %v1489, 6
        %v1815 = vrot.slane %v1814, 4
        %v1816 = vrot.slane %v1490, 6
        %v1817 = vsel %vm840, %v1815, %v1816
        %v1818 = vrot.slane %v1816, 4
        %v1819 = vrot.slane %v1491, 6
        %v1820 = vsel %vm840, %v1818, %v1819
        %v1821 = vrot.slane %v1492, 6
        %v1822 = vrot.slane %v1821, 4
        %v1823 = vrot.slane %v1493, 6
        %v1824 = vsel %vm840, %v1822, %v1823
        %v1825 = vrot.slane %v1823, 4
        %v1826 = vrot.slane %v1494, 6
        %v1827 = vsel %vm840, %v1825, %v1826
        %v1828 = vrot.slane %v1495, 6
        %v1829 = vrot.slane %v1828, 4
        %v1830 = vrot.slane %v1496, 6
        %v1831 = vsel %vm840, %v1829, %v1830
        %v1832 = vrot.slane %v1830, 4
        %v1833 = vrot.slane %v1497, 6
        %v1834 = vsel %vm840, %v1832, %v1833
        %1835 = vrot.lane.b32.xlu0 %v1782, 32
        %v1836 = vpop.permute.xlu0 %1835
        %1837 = vrot.lane.b32.xlu0 %v1785, 32
        %v1838 = vpop.permute.xlu0 %1837
        %1839 = vrot.lane.b32.xlu0 %v1789, 32
        %v1840 = vpop.permute.xlu0 %1839
        %1841 = vrot.lane.b32.xlu0 %v1792, 32
        %v1842 = vpop.permute.xlu0 %1841
        %1843 = vrot.lane.b32.xlu0 %v1796, 32
        %v1844 = vpop.permute.xlu0 %1843
        %1845 = vrot.lane.b32.xlu0 %v1799, 32
        %v1846 = vpop.permute.xlu0 %1845
        %1847 = vrot.lane.b32.xlu0 %v1803, 32
        %v1848 = vpop.permute.xlu0 %1847
        %1849 = vrot.lane.b32.xlu0 %v1806, 32
        %v1850 = vpop.permute.xlu0 %1849
        %1851 = vrot.lane.b32.xlu0 %v1810, 32
        %v1852 = vpop.permute.xlu0 %1851
        %1853 = vrot.lane.b32.xlu0 %v1813, 32
        %v1854 = vpop.permute.xlu0 %1853
        %1855 = vrot.lane.b32.xlu0 %v1817, 32
        %v1856 = vpop.permute.xlu0 %1855
        %1857 = vrot.lane.b32.xlu0 %v1820, 32
        %v1858 = vpop.permute.xlu0 %1857
        %1859 = vrot.lane.b32.xlu0 %v1824, 32
        %v1860 = vpop.permute.xlu0 %1859
        %1861 = vrot.lane.b32.xlu0 %v1827, 32
        %v1862 = vpop.permute.xlu0 %1861
        %1863 = vrot.lane.b32.xlu0 %v1831, 32
        %v1864 = vpop.permute.xlu0 %1863
        %1865 = vrot.lane.b32.xlu0 %v1834, 32
        %v1866 = vpop.permute.xlu0 %1865
        %1883 = vst.msk [vmem:[#allocation3 + $0x4] sm:$0xf] %vm1328, %v1836
        %1884 = vst.msk [vmem:[#allocation3 + $0x10] sm:$0xf] %vm1328, %v1838
        %1885 = vst.msk [vmem:[#allocation3 + $0x1c] sm:$0xf] %vm1328, %v1840
        %1886 = vst.msk [vmem:[#allocation3 + $0x28] sm:$0xf] %vm1328, %v1842
        %1887 = vst.msk [vmem:[#allocation3 + $0x34] sm:$0xf] %vm1328, %v1844
        %1888 = vst.msk [vmem:[#allocation3 + $0x40] sm:$0xf] %vm1328, %v1846
        %1889 = vst.msk [vmem:[#allocation3 + $0x4c] sm:$0xf] %vm1328, %v1848
        %1890 = vst.msk [vmem:[#allocation3 + $0x58] sm:$0xf] %vm1328, %v1850
        %1891 = vst.msk [vmem:[#allocation3 + $0x64] sm:$0xf] %vm1328, %v1852
        %1892 = vst.msk [vmem:[#allocation3 + $0x70] sm:$0xf] %vm1328, %v1854
        %1893 = vst.msk [vmem:[#allocation3 + $0x7c] sm:$0xf] %vm1328, %v1856
        %1894 = vst.msk [vmem:[#allocation3 + $0x88] sm:$0xf] %vm1328, %v1858
        %1895 = vst.msk [vmem:[#allocation3 + $0x94] sm:$0xf] %vm1328, %v1860
        %1896 = vst.msk [vmem:[#allocation3 + $0xa0] sm:$0xf] %vm1328, %v1862
        %1897 = vst.msk [vmem:[#allocation3 + $0xac] sm:$0xf] %vm1328, %v1864
        %1898 = vst.msk [vmem:[#allocation3 + $0xb8] sm:$0xf] %vm1328, %v1866
        %v1899 = vld [vmem:[%s1198 + $0xc] sm:$0xf]
        %v1900 = vld [vmem:[%s1198 + $0x10] sm:$0xf]
        %v1901 = vld [vmem:[%s1198 + $0x20] sm:$0xf]
        %v1902 = vld [vmem:[%s1198 + $0x24] sm:$0xf]
        %v1903 = vld [vmem:[%s1198 + $0x34] sm:$0xf]
        %v1904 = vld [vmem:[%s1198 + $0x38] sm:$0xf]
        %v1905 = vld [vmem:[%s1198 + $0x48] sm:$0xf]
        %v1906 = vld [vmem:[%s1198 + $0x4c] sm:$0xf]
        %v1907 = vld [vmem:[%s1198 + $0x5c] sm:$0xf]
        %v1908 = vld [vmem:[%s1198 + $0x60] sm:$0xf]
        %v1909 = vld [vmem:[%s1198 + $0x70] sm:$0xf]
        %v1910 = vld [vmem:[%s1198 + $0x74] sm:$0xf]
        %v1911 = vld [vmem:[%s1198 + $0x84] sm:$0xf]
        %v1912 = vld [vmem:[%s1198 + $0x88] sm:$0xf]
        %v1913 = vld [vmem:[%s1198 + $0x98] sm:$0xf]
        %v1914 = vld [vmem:[%s1198 + $0x9c] sm:$0xf]
        %v1915 = vld [vmem:[%s1198 + $0xfc] sm:$0xf]
        %v1916 = vld [vmem:[%s1198 + $0x100] sm:$0xf]
        %v1917 = vld [vmem:[%s1198 + $0x110] sm:$0xf]
        %v1918 = vld [vmem:[%s1198 + $0x114] sm:$0xf]
        %v1919 = vld [vmem:[%s1198 + $0x124] sm:$0xf]
        %v1920 = vld [vmem:[%s1198 + $0x128] sm:$0xf]
        %v1921 = vld [vmem:[%s1198 + $0x138] sm:$0xf]
        %v1922 = vld [vmem:[%s1198 + $0x13c] sm:$0xf]
        %v1923 = vld [vmem:[%s1198 + $0x14c] sm:$0xf]
        %v1924 = vld [vmem:[%s1198 + $0x150] sm:$0xf]
        %v1925 = vld [vmem:[%s1198 + $0x160] sm:$0xf]
        %v1926 = vld [vmem:[%s1198 + $0x164] sm:$0xf]
        %v1927 = vld [vmem:[%s1198 + $0x174] sm:$0xf]
        %v1928 = vld [vmem:[%s1198 + $0x178] sm:$0xf]
        %v1929 = vld [vmem:[%s1198 + $0x188] sm:$0xf]
        %v1930 = vld [vmem:[%s1198 + $0x18c] sm:$0xf]
        %v1931 = vld [vmem:[%s1198 + $0x1ec] sm:$0xf]
        %v1932 = vld [vmem:[%s1198 + $0x1f0] sm:$0xf]
        %v1933 = vld [vmem:[%s1198 + $0x200] sm:$0xf]
        %v1934 = vld [vmem:[%s1198 + $0x204] sm:$0xf]
        %v1935 = vld [vmem:[%s1198 + $0x214] sm:$0xf]
        %v1936 = vld [vmem:[%s1198 + $0x218] sm:$0xf]
        %v1937 = vld [vmem:[%s1198 + $0x228] sm:$0xf]
        %v1938 = vld [vmem:[%s1198 + $0x22c] sm:$0xf]
        %v1939 = vld [vmem:[%s1198 + $0x23c] sm:$0xf]
        %v1940 = vld [vmem:[%s1198 + $0x240] sm:$0xf]
        %v1941 = vld [vmem:[%s1198 + $0x250] sm:$0xf]
        %v1942 = vld [vmem:[%s1198 + $0x254] sm:$0xf]
        %v1943 = vld [vmem:[%s1198 + $0x264] sm:$0xf]
        %v1944 = vld [vmem:[%s1198 + $0x268] sm:$0xf]
        %v1945 = vld [vmem:[%s1198 + $0x278] sm:$0xf]
        %v1946 = vld [vmem:[%s1198 + $0x27c] sm:$0xf]
        %1963 = vrot.lane.b32.xlu0 %v1899, 64
        %v1964 = vpop.permute.xlu0 %1963
        %1965 = vrot.lane.b32.xlu0 %v1900, 64
        %v1966 = vpop.permute.xlu0 %1965
        %1967 = vrot.lane.b32.xlu0 %v1901, 64
        %v1968 = vpop.permute.xlu0 %1967
        %1969 = vrot.lane.b32.xlu0 %v1902, 64
        %v1970 = vpop.permute.xlu0 %1969
        %1971 = vrot.lane.b32.xlu0 %v1903, 64
        %v1972 = vpop.permute.xlu0 %1971
        %1973 = vrot.lane.b32.xlu0 %v1904, 64
        %v1974 = vpop.permute.xlu0 %1973
        %1975 = vrot.lane.b32.xlu0 %v1905, 64
        %v1976 = vpop.permute.xlu0 %1975
        %1977 = vrot.lane.b32.xlu0 %v1906, 64
        %v1978 = vpop.permute.xlu0 %1977
        %1979 = vrot.lane.b32.xlu0 %v1907, 64
        %v1980 = vpop.permute.xlu0 %1979
        %1981 = vrot.lane.b32.xlu0 %v1908, 64
        %v1982 = vpop.permute.xlu0 %1981
        %1983 = vrot.lane.b32.xlu0 %v1909, 64
        %v1984 = vpop.permute.xlu0 %1983
        %1985 = vrot.lane.b32.xlu0 %v1910, 64
        %v1986 = vpop.permute.xlu0 %1985
        %1987 = vrot.lane.b32.xlu0 %v1911, 64
        %v1988 = vpop.permute.xlu0 %1987
        %1989 = vrot.lane.b32.xlu0 %v1912, 64
        %v1990 = vpop.permute.xlu0 %1989
        %1991 = vrot.lane.b32.xlu0 %v1913, 64
        %v1992 = vpop.permute.xlu0 %1991
        %1993 = vrot.lane.b32.xlu0 %v1914, 64
        %v1994 = vpop.permute.xlu0 %1993
        %2011 = vst.msk [vmem:[#allocation3 + $0x4] sm:$0xf] %vm1409, %v1964
        %2012 = vst.msk [vmem:[#allocation3 + $0x10] sm:$0xf] %vm1409, %v1966
        %2013 = vst.msk [vmem:[#allocation3 + $0x1c] sm:$0xf] %vm1409, %v1968
        %2014 = vst.msk [vmem:[#allocation3 + $0x28] sm:$0xf] %vm1409, %v1970
        %2015 = vst.msk [vmem:[#allocation3 + $0x34] sm:$0xf] %vm1409, %v1972
        %2016 = vst.msk [vmem:[#allocation3 + $0x40] sm:$0xf] %vm1409, %v1974
        %2017 = vst.msk [vmem:[#allocation3 + $0x4c] sm:$0xf] %vm1409, %v1976
        %2018 = vst.msk [vmem:[#allocation3 + $0x58] sm:$0xf] %vm1409, %v1978
        %2019 = vst.msk [vmem:[#allocation3 + $0x64] sm:$0xf] %vm1409, %v1980
        %2020 = vst.msk [vmem:[#allocation3 + $0x70] sm:$0xf] %vm1409, %v1982
        %2021 = vst.msk [vmem:[#allocation3 + $0x7c] sm:$0xf] %vm1409, %v1984
        %2022 = vst.msk [vmem:[#allocation3 + $0x88] sm:$0xf] %vm1409, %v1986
        %2023 = vst.msk [vmem:[#allocation3 + $0x94] sm:$0xf] %vm1409, %v1988
        %2024 = vst.msk [vmem:[#allocation3 + $0xa0] sm:$0xf] %vm1409, %v1990
        %2025 = vst.msk [vmem:[#allocation3 + $0xac] sm:$0xf] %vm1409, %v1992
        %2026 = vst.msk [vmem:[#allocation3 + $0xb8] sm:$0xf] %vm1409, %v1994
        %2043 = vrot.lane.b32.xlu0 %v1915, 96
        %v2044 = vpop.permute.xlu0 %2043
        %2045 = vrot.lane.b32.xlu0 %v1916, 96
        %v2046 = vpop.permute.xlu0 %2045
        %2047 = vrot.lane.b32.xlu0 %v1917, 96
        %v2048 = vpop.permute.xlu0 %2047
        %2049 = vrot.lane.b32.xlu0 %v1918, 96
        %v2050 = vpop.permute.xlu0 %2049
        %2051 = vrot.lane.b32.xlu0 %v1919, 96
        %v2052 = vpop.permute.xlu0 %2051
        %2053 = vrot.lane.b32.xlu0 %v1920, 96
        %v2054 = vpop.permute.xlu0 %2053
        %2055 = vrot.lane.b32.xlu0 %v1921, 96
        %v2056 = vpop.permute.xlu0 %2055
        %2057 = vrot.lane.b32.xlu0 %v1922, 96
        %v2058 = vpop.permute.xlu0 %2057
        %2059 = vrot.lane.b32.xlu0 %v1923, 96
        %v2060 = vpop.permute.xlu0 %2059
        %2061 = vrot.lane.b32.xlu0 %v1924, 96
        %v2062 = vpop.permute.xlu0 %2061
        %2063 = vrot.lane.b32.xlu0 %v1925, 96
        %v2064 = vpop.permute.xlu0 %2063
        %2065 = vrot.lane.b32.xlu0 %v1926, 96
        %v2066 = vpop.permute.xlu0 %2065
        %2067 = vrot.lane.b32.xlu0 %v1927, 96
        %v2068 = vpop.permute.xlu0 %2067
        %2069 = vrot.lane.b32.xlu0 %v1928, 96
        %v2070 = vpop.permute.xlu0 %2069
        %2071 = vrot.lane.b32.xlu0 %v1929, 96
        %v2072 = vpop.permute.xlu0 %2071
        %2073 = vrot.lane.b32.xlu0 %v1930, 96
        %v2074 = vpop.permute.xlu0 %2073
        %2091 = vst.msk [vmem:[#allocation3 + $0x4] sm:$0xf] %vm1626, %v2044
        %2092 = vst.msk [vmem:[#allocation3 + $0x10] sm:$0xf] %vm1626, %v2046
        %2093 = vst.msk [vmem:[#allocation3 + $0x1c] sm:$0xf] %vm1626, %v2048
        %2094 = vst.msk [vmem:[#allocation3 + $0x28] sm:$0xf] %vm1626, %v2050
        %2095 = vst.msk [vmem:[#allocation3 + $0x34] sm:$0xf] %vm1626, %v2052
        %2096 = vst.msk [vmem:[#allocation3 + $0x40] sm:$0xf] %vm1626, %v2054
        %2097 = vst.msk [vmem:[#allocation3 + $0x4c] sm:$0xf] %vm1626, %v2056
        %2098 = vst.msk [vmem:[#allocation3 + $0x58] sm:$0xf] %vm1626, %v2058
        %2099 = vst.msk [vmem:[#allocation3 + $0x64] sm:$0xf] %vm1626, %v2060
        %2100 = vst.msk [vmem:[#allocation3 + $0x70] sm:$0xf] %vm1626, %v2062
        %2101 = vst.msk [vmem:[#allocation3 + $0x7c] sm:$0xf] %vm1626, %v2064
        %2102 = vst.msk [vmem:[#allocation3 + $0x88] sm:$0xf] %vm1626, %v2066
        %2103 = vst.msk [vmem:[#allocation3 + $0x94] sm:$0xf] %vm1626, %v2068
        %2104 = vst.msk [vmem:[#allocation3 + $0xa0] sm:$0xf] %vm1626, %v2070
        %2105 = vst.msk [vmem:[#allocation3 + $0xac] sm:$0xf] %vm1626, %v2072
        %2106 = vst.msk [vmem:[#allocation3 + $0xb8] sm:$0xf] %vm1626, %v2074
        %2107 = vst.msk [vmem:[#allocation3 + $0x8] sm:$0xf] %vm1247, %v1931
        %2108 = vst.msk [vmem:[#allocation3 + $0x14] sm:$0xf] %vm1247, %v1932
        %2109 = vst.msk [vmem:[#allocation3 + $0x20] sm:$0xf] %vm1247, %v1933
        %2110 = vst.msk [vmem:[#allocation3 + $0x2c] sm:$0xf] %vm1247, %v1934
        %2111 = vst.msk [vmem:[#allocation3 + $0x38] sm:$0xf] %vm1247, %v1935
        %2112 = vst.msk [vmem:[#allocation3 + $0x44] sm:$0xf] %vm1247, %v1936
        %2113 = vst.msk [vmem:[#allocation3 + $0x50] sm:$0xf] %vm1247, %v1937
        %2114 = vst.msk [vmem:[#allocation3 + $0x5c] sm:$0xf] %vm1247, %v1938
        %2115 = vst.msk [vmem:[#allocation3 + $0x68] sm:$0xf] %vm1247, %v1939
        %2116 = vst.msk [vmem:[#allocation3 + $0x74] sm:$0xf] %vm1247, %v1940
        %2117 = vst.msk [vmem:[#allocation3 + $0x80] sm:$0xf] %vm1247, %v1941
        %2118 = vst.msk [vmem:[#allocation3 + $0x8c] sm:$0xf] %vm1247, %v1942
        %2119 = vst.msk [vmem:[#allocation3 + $0x98] sm:$0xf] %vm1247, %v1943
        %2120 = vst.msk [vmem:[#allocation3 + $0xa4] sm:$0xf] %vm1247, %v1944
        %2121 = vst.msk [vmem:[#allocation3 + $0xb0] sm:$0xf] %vm1247, %v1945
        %2122 = vst.msk [vmem:[#allocation3 + $0xbc] sm:$0xf] %vm1247, %v1946
        %v2123 = vld [vmem:[#allocation3] sm:$0xff]
        %v2124 = vld [vmem:[#allocation3 + $0x8] sm:$0xf]
        %v2125 = vld [vmem:[#allocation3 + $0xc] sm:$0xff]
        %v2126 = vld [vmem:[#allocation3 + $0x14] sm:$0xf]
        %v2127 = vld [vmem:[#allocation3 + $0x18] sm:$0xff]
        %v2128 = vld [vmem:[#allocation3 + $0x20] sm:$0xf]
        %v2129 = vld [vmem:[#allocation3 + $0x24] sm:$0xff]
        %v2130 = vld [vmem:[#allocation3 + $0x2c] sm:$0xf]
        %v2131 = vld [vmem:[#allocation3 + $0x30] sm:$0xff]
        %v2132 = vld [vmem:[#allocation3 + $0x38] sm:$0xf]
        %v2133 = vld [vmem:[#allocation3 + $0x3c] sm:$0xff]
        %v2134 = vld [vmem:[#allocation3 + $0x44] sm:$0xf]
        %v2135 = vld [vmem:[#allocation3 + $0x48] sm:$0xff]
        %v2136 = vld [vmem:[#allocation3 + $0x50] sm:$0xf]
        %v2137 = vld [vmem:[#allocation3 + $0x54] sm:$0xff]
        %v2138 = vld [vmem:[#allocation3 + $0x5c] sm:$0xf]
        %v2139 = vld [vmem:[#allocation3 + $0x60] sm:$0xff]
        %v2140 = vld [vmem:[#allocation3 + $0x68] sm:$0xf]
        %v2141 = vld [vmem:[#allocation3 + $0x6c] sm:$0xff]
        %v2142 = vld [vmem:[#allocation3 + $0x74] sm:$0xf]
        %v2143 = vld [vmem:[#allocation3 + $0x78] sm:$0xff]
        %v2144 = vld [vmem:[#allocation3 + $0x80] sm:$0xf]
        %v2145 = vld [vmem:[#allocation3 + $0x84] sm:$0xff]
        %v2146 = vld [vmem:[#allocation3 + $0x8c] sm:$0xf]
        %v2147 = vld [vmem:[#allocation3 + $0x90] sm:$0xff]
        %v2148 = vld [vmem:[#allocation3 + $0x98] sm:$0xf]
        %v2149 = vld [vmem:[#allocation3 + $0x9c] sm:$0xff]
        %v2150 = vld [vmem:[#allocation3 + $0xa4] sm:$0xf]
        %v2151 = vld [vmem:[#allocation3 + $0xa8] sm:$0xff]
        %v2152 = vld [vmem:[#allocation3 + $0xb0] sm:$0xf]
        %v2153 = vld [vmem:[#allocation3 + $0xb4] sm:$0xff]
        %v2154 = vld [vmem:[#allocation3 + $0xbc] sm:$0xf]
        %v2155 = vld [vmem:[%s3] sm:$0xf]
        %v2156 = vld [vmem:[%s3 + $0x4] sm:$0xf]
        %v2157 = vld [vmem:[%s3 + $0x8] sm:$0xf]
        %v2158 = vld [vmem:[%s3 + $0xc] sm:$0xf]
        %v2159 = vld [vmem:[%s3 + $0x10] sm:$0xf]
        %v2160 = vld [vmem:[%s3 + $0x14] sm:$0xf]
        %v2161 = vld [vmem:[%s3 + $0x18] sm:$0xf]
        %v2162 = vld [vmem:[%s3 + $0x1c] sm:$0xf]
        %v2163 = vld [vmem:[%s3 + $0x20] sm:$0xf]
        %v2164 = vld [vmem:[%s3 + $0x24] sm:$0xf]
        %v2165 = vld [vmem:[%s3 + $0x28] sm:$0xf]
        %v2166 = vld [vmem:[%s3 + $0x2c] sm:$0xf]
        %v2167 = vld [vmem:[%s3 + $0x30] sm:$0xf]
        %v2168 = vld [vmem:[%s3 + $0x34] sm:$0xf]
        %v2169 = vld [vmem:[%s3 + $0x38] sm:$0xf]
        %v2170 = vld [vmem:[%s3 + $0x3c] sm:$0xf]
        %v2171 = vld [vmem:[%s3 + $0x40] sm:$0xf]
        %v2172 = vld [vmem:[%s3 + $0x44] sm:$0xf]
        %v2173 = vld [vmem:[%s3 + $0x48] sm:$0xf]
        %v2174 = vld [vmem:[%s3 + $0x4c] sm:$0xf]
        %v2175 = vld [vmem:[%s3 + $0x50] sm:$0xf]
        %v2176 = vld [vmem:[%s3 + $0x54] sm:$0xf]
        %v2177 = vld [vmem:[%s3 + $0x58] sm:$0xf]
        %v2178 = vld [vmem:[%s3 + $0x5c] sm:$0xf]
        %v2179 = vld [vmem:[%s3 + $0x60] sm:$0xf]
        %v2180 = vld [vmem:[%s3 + $0x64] sm:$0xf]
        %v2181 = vld [vmem:[%s3 + $0x68] sm:$0xf]
        %v2182 = vld [vmem:[%s3 + $0x6c] sm:$0xf]
        %v2183 = vld [vmem:[%s3 + $0x70] sm:$0xf]
        %v2184 = vld [vmem:[%s3 + $0x74] sm:$0xf]
        %v2185 = vld [vmem:[%s3 + $0x78] sm:$0xf]
        %v2186 = vld [vmem:[%s3 + $0x7c] sm:$0xf]
        %v2187 = vld [vmem:[%s3 + $0x80] sm:$0xf]
        %v2188 = vld [vmem:[%s3 + $0x84] sm:$0xf]
        %v2189 = vld [vmem:[%s3 + $0x88] sm:$0xf]
        %v2190 = vld [vmem:[%s3 + $0x8c] sm:$0xf]
        %v2191 = vld [vmem:[%s245] sm:$0x1]
        %v2193 = vlaneseq
        %v2194 = vshrl.u32 %v2193, 7
        %v2195 = vsub.s32 0, %v2194
        %v2196 = vrot.slane %v2191, %v2195
        %v2198 = vpack.c.bf16 %v2196, %v2196
        %v2200 = vunpack.c.l.b16 %v2198
        %v2201 = vpack.c.b16 %v2200, %v2200
        %2203 = vst [vmem:[%s242] sm:$0xf] %v2201
        %2204 = vst [vmem:[%s242 + $0x14] sm:$0xf] %v2201
        %2205 = vst [vmem:[%s242 + $0x28] sm:$0xf] %v2201
        %2206 = vst [vmem:[%s242 + $0x3c] sm:$0xf] %v2201
        %2207 = vst [vmem:[%s242 + $0x50] sm:$0xf] %v2201
        %2208 = vst [vmem:[%s242 + $0x64] sm:$0xf] %v2201
        %2209 = vst [vmem:[%s242 + $0x78] sm:$0xf] %v2201
        %2210 = vst [vmem:[%s242 + $0x8c] sm:$0xf] %v2201
        %2211 = vst [vmem:[%s242 + $0xa0] sm:$0xf] %v2201
        %2212 = vst [vmem:[%s242 + $0xb4] sm:$0xf] %v2201
        %2213 = vst [vmem:[%s242 + $0xc8] sm:$0xf] %v2201
        %2214 = vst [vmem:[%s242 + $0xdc] sm:$0xf] %v2201
        %2215 = vst [vmem:[%s242 + $0xf0] sm:$0xf] %v2201
        %2216 = vst [vmem:[%s242 + $0x104] sm:$0xf] %v2201
        %2217 = vst [vmem:[%s242 + $0x118] sm:$0xf] %v2201
        %2218 = vst [vmem:[%s242 + $0x12c] sm:$0xf] %v2201
        %v2219 = vld [vmem:[%s4] sm:$0x1]
        %v2221 = vlaneseq
        %v2222 = vshrl.u32 %v2221, 7
        %v2223 = vsub.s32 0, %v2222
        %v2224 = vrot.slane %v2219, %v2223
        %v2226 = vadd.f32 %v1021, %v2224
        %v2227 = vadd.f32 %v1025, %v2224
        %v2228 = vadd.f32 %v1031, %v2224
        %v2229 = vadd.f32 %v1035, %v2224
        %v2230 = vadd.f32 %v1041, %v2224
        %v2231 = vadd.f32 %v1045, %v2224
        %v2232 = vadd.f32 %v1051, %v2224
        %v2233 = vadd.f32 %v1055, %v2224
        %v2234 = vadd.f32 %v1061, %v2224
        %v2235 = vadd.f32 %v1065, %v2224
        %v2236 = vadd.f32 %v1071, %v2224
        %v2237 = vadd.f32 %v1075, %v2224
        %v2238 = vadd.f32 %v1081, %v2224
        %v2239 = vadd.f32 %v1085, %v2224
        %v2240 = vadd.f32 %v1091, %v2224
        %v2241 = vadd.f32 %v1095, %v2224
        %v2242 = vmax.f32 %v2226, 0.0
        %v2243 = vmax.f32 %v2227, 0.0
        %v2244 = vmax.f32 %v2228, 0.0
        %v2245 = vmax.f32 %v2229, 0.0
        %v2246 = vmax.f32 %v2230, 0.0
        %v2247 = vmax.f32 %v2231, 0.0
        %v2248 = vmax.f32 %v2232, 0.0
        %v2249 = vmax.f32 %v2233, 0.0
        %v2250 = vmax.f32 %v2234, 0.0
        %v2251 = vmax.f32 %v2235, 0.0
        %v2252 = vmax.f32 %v2236, 0.0
        %v2253 = vmax.f32 %v2237, 0.0
        %v2254 = vmax.f32 %v2238, 0.0
        %v2255 = vmax.f32 %v2239, 0.0
        %v2256 = vmax.f32 %v2240, 0.0
        %v2257 = vmax.f32 %v2241, 0.0
        %v2258 = vpack.c.bf16 %v2243, %v2242
        %v2259 = vpack.c.bf16 %v2245, %v2244
        %v2260 = vpack.c.bf16 %v2247, %v2246
        %v2261 = vpack.c.bf16 %v2249, %v2248
        %v2262 = vpack.c.bf16 %v2251, %v2250
        %v2263 = vpack.c.bf16 %v2253, %v2252
        %v2264 = vpack.c.bf16 %v2255, %v2254
        %v2265 = vpack.c.bf16 %v2257, %v2256
        %v2274 = vunpack.c.l.b16 %v2258
        %v2275 = vunpack.c.h.b16 %v2258
        %v2276 = vunpack.c.l.b16 %v2259
        %v2277 = vunpack.c.h.b16 %v2259
        %v2278 = vunpack.c.l.b16 %v2260
        %v2279 = vunpack.c.h.b16 %v2260
        %v2280 = vunpack.c.l.b16 %v2261
        %v2281 = vunpack.c.h.b16 %v2261
        %v2282 = vunpack.c.l.b16 %v2262
        %v2283 = vunpack.c.h.b16 %v2262
        %v2284 = vunpack.c.l.b16 %v2263
        %v2285 = vunpack.c.h.b16 %v2263
        %v2286 = vunpack.c.l.b16 %v2264
        %v2287 = vunpack.c.h.b16 %v2264
        %v2288 = vunpack.c.l.b16 %v2265
        %v2289 = vunpack.c.h.b16 %v2265
        %v2290 = vpack.c.b16 %v2274, %v2274
        %v2291 = vpack.c.b16 %v2275, %v2275
        %v2292 = vpack.c.b16 %v2276, %v2276
        %v2293 = vpack.c.b16 %v2277, %v2277
        %v2294 = vpack.c.b16 %v2278, %v2278
        %v2295 = vpack.c.b16 %v2279, %v2279
        %v2296 = vpack.c.b16 %v2280, %v2280
        %v2297 = vpack.c.b16 %v2281, %v2281
        %v2298 = vpack.c.b16 %v2282, %v2282
        %v2299 = vpack.c.b16 %v2283, %v2283
        %v2300 = vpack.c.b16 %v2284, %v2284
        %v2301 = vpack.c.b16 %v2285, %v2285
        %v2302 = vpack.c.b16 %v2286, %v2286
        %v2303 = vpack.c.b16 %v2287, %v2287
        %v2304 = vpack.c.b16 %v2288, %v2288
        %v2305 = vpack.c.b16 %v2289, %v2289
        %2322 = vst [vmem:[%s242 + $0x4] sm:$0xf] %v2290
        %2323 = vst [vmem:[%s242 + $0x18] sm:$0xf] %v2291
        %2324 = vst [vmem:[%s242 + $0x2c] sm:$0xf] %v2292
        %2325 = vst [vmem:[%s242 + $0x40] sm:$0xf] %v2293
        %2326 = vst [vmem:[%s242 + $0x54] sm:$0xf] %v2294
        %2327 = vst [vmem:[%s242 + $0x68] sm:$0xf] %v2295
        %2328 = vst [vmem:[%s242 + $0x7c] sm:$0xf] %v2296
        %2329 = vst [vmem:[%s242 + $0x90] sm:$0xf] %v2297
        %2330 = vst [vmem:[%s242 + $0xa4] sm:$0xf] %v2298
        %2331 = vst [vmem:[%s242 + $0xb8] sm:$0xf] %v2299
        %2332 = vst [vmem:[%s242 + $0xcc] sm:$0xf] %v2300
        %2333 = vst [vmem:[%s242 + $0xe0] sm:$0xf] %v2301
        %2334 = vst [vmem:[%s242 + $0xf4] sm:$0xf] %v2302
        %2335 = vst [vmem:[%s242 + $0x108] sm:$0xf] %v2303
        %2336 = vst [vmem:[%s242 + $0x11c] sm:$0xf] %v2304
        %2337 = vst [vmem:[%s242 + $0x130] sm:$0xf] %v2305
        %v2338 = vld [vmem:[%s4 + $0x1] sm:$0x1]
        %v2340 = vlaneseq
        %v2341 = vshrl.u32 %v2340, 7
        %v2342 = vsub.s32 0, %v2341
        %v2343 = vrot.slane %v2338, %v2342
        %v2377 = vunpack.c.l.b16 %v2123
        %v2378 = vunpack.c.h.b16 %v2123
        %v2379 = vunpack.c.l.b16 %v2124
        %v2380 = vunpack.c.l.b16 %v2125
        %v2381 = vunpack.c.h.b16 %v2125
        %v2382 = vunpack.c.l.b16 %v2126
        %v2383 = vunpack.c.l.b16 %v2127
        %v2384 = vunpack.c.h.b16 %v2127
        %v2385 = vunpack.c.l.b16 %v2128
        %v2386 = vunpack.c.l.b16 %v2129
        %v2387 = vunpack.c.h.b16 %v2129
        %v2388 = vunpack.c.l.b16 %v2130
        %v2389 = vunpack.c.l.b16 %v2131
        %v2390 = vunpack.c.h.b16 %v2131
        %v2391 = vunpack.c.l.b16 %v2132
        %v2392 = vunpack.c.l.b16 %v2133
        %v2393 = vunpack.c.h.b16 %v2133
        %v2394 = vunpack.c.l.b16 %v2134
        %v2395 = vunpack.c.l.b16 %v2135
        %v2396 = vunpack.c.h.b16 %v2135
        %v2397 = vunpack.c.l.b16 %v2136
        %v2398 = vunpack.c.l.b16 %v2137
        %v2399 = vunpack.c.h.b16 %v2137
        %v2400 = vunpack.c.l.b16 %v2138
        %v2401 = vunpack.c.l.b16 %v2139
        %v2402 = vunpack.c.h.b16 %v2139
        %v2403 = vunpack.c.l.b16 %v2140
        %v2404 = vunpack.c.l.b16 %v2141
        %v2405 = vunpack.c.h.b16 %v2141
        %v2406 = vunpack.c.l.b16 %v2142
        %v2407 = vunpack.c.l.b16 %v2143
        %v2408 = vunpack.c.h.b16 %v2143
        %v2409 = vunpack.c.l.b16 %v2144
        %v2410 = vunpack.c.l.b16 %v2145
        %v2411 = vunpack.c.h.b16 %v2145
        %v2412 = vunpack.c.l.b16 %v2146
        %v2413 = vunpack.c.l.b16 %v2147
        %v2414 = vunpack.c.h.b16 %v2147
        %v2415 = vunpack.c.l.b16 %v2148
        %v2416 = vunpack.c.l.b16 %v2149
        %v2417 = vunpack.c.h.b16 %v2149
        %v2418 = vunpack.c.l.b16 %v2150
        %v2419 = vunpack.c.l.b16 %v2151
        %v2420 = vunpack.c.h.b16 %v2151
        %v2421 = vunpack.c.l.b16 %v2152
        %v2422 = vunpack.c.l.b16 %v2153
        %v2423 = vunpack.c.h.b16 %v2153
        %v2424 = vunpack.c.l.b16 %v2154
        %v2425 = vpack.c.b16 %v2380, %v2377
        %v2426 = vpack.c.b16 %v2381, %v2378
        %v2427 = vpack.c.b16 %v2382, %v2379
        %v2428 = vpack.c.b16 %v2386, %v2383
        %v2429 = vpack.c.b16 %v2387, %v2384
        %v2430 = vpack.c.b16 %v2388, %v2385
        %v2431 = vpack.c.b16 %v2392, %v2389
        %v2432 = vpack.c.b16 %v2393, %v2390
        %v2433 = vpack.c.b16 %v2394, %v2391
        %v2434 = vpack.c.b16 %v2398, %v2395
        %v2435 = vpack.c.b16 %v2399, %v2396
        %v2436 = vpack.c.b16 %v2400, %v2397
        %v2437 = vpack.c.b16 %v2404, %v2401
        %v2438 = vpack.c.b16 %v2405, %v2402
        %v2439 = vpack.c.b16 %v2406, %v2403
        %v2440 = vpack.c.b16 %v2410, %v2407
        %v2441 = vpack.c.b16 %v2411, %v2408
        %v2442 = vpack.c.b16 %v2412, %v2409
        %v2443 = vpack.c.b16 %v2416, %v2413
        %v2444 = vpack.c.b16 %v2417, %v2414
        %v2445 = vpack.c.b16 %v2418, %v2415
        %v2446 = vpack.c.b16 %v2422, %v2419
        %v2447 = vpack.c.b16 %v2423, %v2420
        %v2448 = vpack.c.b16 %v2424, %v2421
        %v2501 = vunpack.c.l.b16 %v2155
        %v2502 = vunpack.c.l.b16 %v2156
        %v2503 = vunpack.c.l.b16 %v2157
        %v2504 = vunpack.c.l.b16 %v2158
        %v2505 = vunpack.c.l.b16 %v2159
        %v2506 = vunpack.c.l.b16 %v2160
        %v2507 = vunpack.c.l.b16 %v2161
        %v2508 = vunpack.c.l.b16 %v2162
        %v2509 = vunpack.c.l.b16 %v2163
        %v2510 = vunpack.c.l.b16 %v2164
        %v2511 = vunpack.c.l.b16 %v2165
        %v2512 = vunpack.c.l.b16 %v2166
        %v2513 = vunpack.c.l.b16 %v2167
        %v2514 = vunpack.c.l.b16 %v2168
        %v2515 = vunpack.c.l.b16 %v2169
        %v2516 = vunpack.c.l.b16 %v2170
        %v2517 = vunpack.c.l.b16 %v2171
        %v2518 = vunpack.c.l.b16 %v2172
        %v2519 = vunpack.c.l.b16 %v2173
        %v2520 = vunpack.c.l.b16 %v2174
        %v2521 = vunpack.c.l.b16 %v2175
        %v2522 = vunpack.c.l.b16 %v2176
        %v2523 = vunpack.c.l.b16 %v2177
        %v2524 = vunpack.c.l.b16 %v2178
        %v2525 = vunpack.c.l.b16 %v2179
        %v2526 = vunpack.c.l.b16 %v2180
        %v2527 = vunpack.c.l.b16 %v2181
        %v2528 = vunpack.c.l.b16 %v2182
        %v2529 = vunpack.c.l.b16 %v2183
        %v2530 = vunpack.c.l.b16 %v2184
        %v2531 = vunpack.c.l.b16 %v2185
        %v2532 = vunpack.c.l.b16 %v2186
        %v2533 = vunpack.c.l.b16 %v2187
        %v2534 = vunpack.c.l.b16 %v2188
        %v2535 = vunpack.c.l.b16 %v2189
        %v2536 = vunpack.c.l.b16 %v2190
        %v2537 = vpack.c.b16 %v2502, %v2501
        %v2538 = vpack.c.b16 %v2504, %v2503
        %v2539 = vpack.c.b16 %v2506, %v2505
        %v2540 = vpack.c.b16 %v2508, %v2507
        %v2541 = vpack.c.b16 %v2510, %v2509
        %v2542 = vpack.c.b16 %v2512, %v2511
        %v2543 = vpack.c.b16 %v2514, %v2513
        %v2544 = vpack.c.b16 %v2516, %v2515
        %v2545 = vpack.c.b16 %v2518, %v2517
        %v2546 = vpack.c.b16 %v2520, %v2519
        %v2547 = vpack.c.b16 %v2522, %v2521
        %v2548 = vpack.c.b16 %v2524, %v2523
        %v2549 = vpack.c.b16 %v2526, %v2525
        %v2550 = vpack.c.b16 %v2528, %v2527
        %v2551 = vpack.c.b16 %v2530, %v2529
        %v2552 = vpack.c.b16 %v2532, %v2531
        %v2553 = vpack.c.b16 %v2534, %v2533
        %v2554 = vpack.c.b16 %v2536, %v2535
        %v2574 = vsel %vm961, %v2427, 0
        %v2577 = vsel %vm961, %v2430, 0
        %v2580 = vsel %vm961, %v2433, 0
        %v2583 = vsel %vm961, %v2436, 0
        %v2586 = vsel %vm961, %v2439, 0
        %v2589 = vsel %vm961, %v2442, 0
        %v2592 = vsel %vm961, %v2445, 0
        %v2595 = vsel %vm961, %v2448, 0
        %2597 = vmatprep.subr.bf16.mxu0 0
        %2598 = vmatpush1.bf16.msra.mxu0 %v2544
        %2599 = vmatprep.subr.bf16.mxu0 0
        %2600 = vmatpush1.bf16.msra.mxu0 %v2543
        %2601 = vmatprep.subr.bf16.mxu0 0
        %2602 = vmatpush1.bf16.msra.mxu0 %v2542
        %2603 = vmatprep.subr.bf16.mxu0 0
        %2604 = vmatpush1.bf16.msra.mxu0 %v2541
        %2605 = vmatprep.subr.bf16.mxu0 0
        %2606 = vmatpush1.bf16.msra.mxu0 %v2540
        %2607 = vmatprep.subr.bf16.mxu0 0
        %2608 = vmatpush1.bf16.msra.mxu0 %v2539
        %2609 = vmatprep.subr.bf16.mxu0 0
        %2610 = vmatpush1.bf16.msra.mxu0 %v2538
        %2611 = vmatprep.subr.bf16.mxu0 0
        %2612 = vmatpush1.bf16.msra.mxu0 %v2537
        %2613 = vmatprep.subr.bf16.mxu0 0
        %2614 = vmatpush2.bf16.msra.mxu0 %v2552
        %2615 = vmatprep.subr.bf16.mxu0 0
        %2616 = vmatpush2.bf16.msra.mxu0 %v2551
        %2617 = vmatprep.subr.bf16.mxu0 0
        %2618 = vmatpush2.bf16.msra.mxu0 %v2550
        %2619 = vmatprep.subr.bf16.mxu0 0
        %2620 = vmatpush2.bf16.msra.mxu0 %v2549
        %2621 = vmatprep.subr.bf16.mxu0 0
        %2622 = vmatpush2.bf16.msra.mxu0 %v2548
        %2623 = vmatprep.subr.bf16.mxu0 0
        %2624 = vmatpush2.bf16.msra.mxu0 %v2547
        %2625 = vmatprep.subr.bf16.mxu0 0
        %2626 = vmatpush2.bf16.msra.mxu0 %v2546
        %2627 = vmatprep.subr.bf16.mxu0 0
        %2628 = vmatpush2.bf16.msra.mxu0 %v2545
        %2629 = vmatprep.mubr.bf16.mxu0 %v2426
        %2630 = vmatmul.mubr.bf16.gmra.mxu0 %v2425
        %v2631 = vpop.f32.mrf.mxu0
        %v2632 = vadd.f32 %v2343, %v2631
        %v2633 = vpop.f32.mrf.mxu0
        %v2634 = vpop.f32.mrf.mxu0
        %v2635 = vadd.f32 %v2343, %v2634
        %v2636 = vpop.f32.mrf.mxu0
        %2637 = vmatprep.mubr.bf16.mxu0 %v2429
        %2638 = vmatmul.mubr.bf16.gmra.mxu0 %v2428
        %v2639 = vpop.f32.mrf.mxu0
        %v2640 = vadd.f32 %v2343, %v2639
        %v2641 = vpop.f32.mrf.mxu0
        %v2642 = vpop.f32.mrf.mxu0
        %v2643 = vadd.f32 %v2343, %v2642
        %v2644 = vpop.f32.mrf.mxu0
        %2645 = vmatprep.mubr.bf16.mxu0 %v2432
        %2646 = vmatmul.mubr.bf16.gmra.mxu0 %v2431
        %v2647 = vpop.f32.mrf.mxu0
        %v2648 = vadd.f32 %v2343, %v2647
        %v2649 = vpop.f32.mrf.mxu0
        %v2650 = vpop.f32.mrf.mxu0
        %v2651 = vadd.f32 %v2343, %v2650
        %v2652 = vpop.f32.mrf.mxu0
        %2653 = vmatprep.mubr.bf16.mxu0 %v2435
        %2654 = vmatmul.mubr.bf16.gmra.mxu0 %v2434
        %v2655 = vpop.f32.mrf.mxu0
        %v2656 = vadd.f32 %v2343, %v2655
        %v2657 = vpop.f32.mrf.mxu0
        %v2658 = vpop.f32.mrf.mxu0
        %v2659 = vadd.f32 %v2343, %v2658
        %v2660 = vpop.f32.mrf.mxu0
        %2661 = vmatprep.mubr.bf16.mxu0 %v2438
        %2662 = vmatmul.mubr.bf16.gmra.mxu0 %v2437
        %v2663 = vpop.f32.mrf.mxu0
        %v2664 = vadd.f32 %v2343, %v2663
        %v2665 = vpop.f32.mrf.mxu0
        %v2666 = vpop.f32.mrf.mxu0
        %v2667 = vadd.f32 %v2343, %v2666
        %v2668 = vpop.f32.mrf.mxu0
        %2669 = vmatprep.mubr.bf16.mxu0 %v2441
        %2670 = vmatmul.mubr.bf16.gmra.mxu0 %v2440
        %v2671 = vpop.f32.mrf.mxu0
        %v2672 = vadd.f32 %v2343, %v2671
        %v2673 = vpop.f32.mrf.mxu0
        %v2674 = vpop.f32.mrf.mxu0
        %v2675 = vadd.f32 %v2343, %v2674
        %v2676 = vpop.f32.mrf.mxu0
        %2677 = vmatprep.mubr.bf16.mxu0 %v2444
        %2678 = vmatmul.mubr.bf16.gmra.mxu0 %v2443
        %v2679 = vpop.f32.mrf.mxu0
        %v2680 = vadd.f32 %v2343, %v2679
        %v2681 = vpop.f32.mrf.mxu0
        %v2682 = vpop.f32.mrf.mxu0
        %v2683 = vadd.f32 %v2343, %v2682
        %v2684 = vpop.f32.mrf.mxu0
        %2685 = vmatprep.mubr.bf16.mxu0 %v2447
        %2686 = vmatmul.mubr.bf16.gmra.mxu0 %v2446
        %v2687 = vpop.f32.mrf.mxu0
        %v2688 = vadd.f32 %v2343, %v2687
        %v2689 = vpop.f32.mrf.mxu0
        %v2690 = vpop.f32.mrf.mxu0
        %v2691 = vadd.f32 %v2343, %v2690
        %v2692 = vpop.f32.mrf.mxu0
        %2693 = vdwg.mxu0
        %2694 = vmatprep.subr.bf16.mxu0 0
        %2695 = vmatpush1.bf16.msra.mxu0 0
        %2696 = vmatprep.subr.bf16.mxu0 0
        %2697 = vmatpush1.bf16.msra.mxu0 0
        %2698 = vmatprep.subr.bf16.mxu0 0
        %2699 = vmatpush1.bf16.msra.mxu0 0
        %2700 = vmatprep.subr.bf16.mxu0 0
        %2701 = vmatpush1.bf16.msra.mxu0 0
        %2702 = vmatprep.subr.bf16.mxu0 0
        %2703 = vmatpush1.bf16.msra.mxu0 0
        %2704 = vmatprep.subr.bf16.mxu0 0
        %2705 = vmatpush1.bf16.msra.mxu0 0
        %2706 = vmatprep.subr.bf16.mxu0 0
        %2707 = vmatpush1.bf16.msra.mxu0 %v2554
        %2708 = vmatprep.subr.bf16.mxu0 0
        %2709 = vmatpush1.bf16.msra.mxu0 %v2553
        %2710 = vmatprep.subr.bf16.mxu0 0
        %2711 = vmatpush2.bf16.msra.mxu0 0
        %2712 = vmatprep.subr.bf16.mxu0 0
        %2713 = vmatpush2.bf16.msra.mxu0 0
        %2714 = vmatprep.subr.bf16.mxu0 0
        %2715 = vmatpush2.bf16.msra.mxu0 0
        %2716 = vmatprep.subr.bf16.mxu0 0
        %2717 = vmatpush2.bf16.msra.mxu0 0
        %2718 = vmatprep.subr.bf16.mxu0 0
        %2719 = vmatpush2.bf16.msra.mxu0 0
        %2720 = vmatprep.subr.bf16.mxu0 0
        %2721 = vmatpush2.bf16.msra.mxu0 0
        %2722 = vmatprep.subr.bf16.mxu0 0
        %2723 = vmatpush2.bf16.msra.mxu0 0
        %2724 = vmatprep.subr.bf16.mxu0 0
        %2725 = vmatpush2.bf16.msra.mxu0 0
        %2726 = vmatprep.mubr.bf16.mxu0 0
        %2727 = vmatmul.mubr.bf16.gmra.mxu0 %v2574
        %v2728 = vpop.f32.mrf.mxu0
        %v2729 = vadd.f32 %v2632, %v2728
        %v2730 = vpop.f32.mrf.mxu0
        %v2731 = vpop.f32.mrf.mxu0
        %v2732 = vadd.f32 %v2635, %v2731
        %v2733 = vpop.f32.mrf.mxu0
        %2734 = vmatprep.mubr.bf16.mxu0 0
        %2735 = vmatmul.mubr.bf16.gmra.mxu0 %v2577
        %v2736 = vpop.f32.mrf.mxu0
        %v2737 = vadd.f32 %v2640, %v2736
        %v2738 = vpop.f32.mrf.mxu0
        %v2739 = vpop.f32.mrf.mxu0
        %v2740 = vadd.f32 %v2643, %v2739
        %v2741 = vpop.f32.mrf.mxu0
        %2742 = vmatprep.mubr.bf16.mxu0 0
        %2743 = vmatmul.mubr.bf16.gmra.mxu0 %v2580
        %v2744 = vpop.f32.mrf.mxu0
        %v2745 = vadd.f32 %v2648, %v2744
        %v2746 = vpop.f32.mrf.mxu0
        %v2747 = vpop.f32.mrf.mxu0
        %v2748 = vadd.f32 %v2651, %v2747
        %v2749 = vpop.f32.mrf.mxu0
        %2750 = vmatprep.mubr.bf16.mxu0 0
        %2751 = vmatmul.mubr.bf16.gmra.mxu0 %v2583
        %v2752 = vpop.f32.mrf.mxu0
        %v2753 = vadd.f32 %v2656, %v2752
        %v2754 = vpop.f32.mrf.mxu0
        %v2755 = vpop.f32.mrf.mxu0
        %v2756 = vadd.f32 %v2659, %v2755
        %v2757 = vpop.f32.mrf.mxu0
        %2758 = vmatprep.mubr.bf16.mxu0 0
        %2759 = vmatmul.mubr.bf16.gmra.mxu0 %v2586
        %v2760 = vpop.f32.mrf.mxu0
        %v2761 = vadd.f32 %v2664, %v2760
        %v2762 = vpop.f32.mrf.mxu0
        %v2763 = vpop.f32.mrf.mxu0
        %v2764 = vadd.f32 %v2667, %v2763
        %v2765 = vpop.f32.mrf.mxu0
        %2766 = vmatprep.mubr.bf16.mxu0 0
        %2767 = vmatmul.mubr.bf16.gmra.mxu0 %v2589
        %v2768 = vpop.f32.mrf.mxu0
        %v2769 = vadd.f32 %v2672, %v2768
        %v2770 = vpop.f32.mrf.mxu0
        %v2771 = vpop.f32.mrf.mxu0
        %v2772 = vadd.f32 %v2675, %v2771
        %v2773 = vpop.f32.mrf.mxu0
        %2774 = vmatprep.mubr.bf16.mxu0 0
        %2775 = vmatmul.mubr.bf16.gmra.mxu0 %v2592
        %v2776 = vpop.f32.mrf.mxu0
        %v2777 = vadd.f32 %v2680, %v2776
        %v2778 = vpop.f32.mrf.mxu0
        %v2779 = vpop.f32.mrf.mxu0
        %v2780 = vadd.f32 %v2683, %v2779
        %v2781 = vpop.f32.mrf.mxu0
        %2782 = vmatprep.mubr.bf16.mxu0 0
        %2783 = vmatmul.mubr.bf16.gmra.mxu0 %v2595
        %v2784 = vpop.f32.mrf.mxu0
        %v2785 = vadd.f32 %v2688, %v2784
        %v2786 = vpop.f32.mrf.mxu0
        %v2787 = vpop.f32.mrf.mxu0
        %v2788 = vadd.f32 %v2691, %v2787
        %v2789 = vpop.f32.mrf.mxu0
        %2790 = vdwg.mxu0
        %v2791 = vmax.f32 %v2729, 0.0
        %v2792 = vmax.f32 %v2732, 0.0
        %v2793 = vmax.f32 %v2737, 0.0
        %v2794 = vmax.f32 %v2740, 0.0
        %v2795 = vmax.f32 %v2745, 0.0
        %v2796 = vmax.f32 %v2748, 0.0
        %v2797 = vmax.f32 %v2753, 0.0
        %v2798 = vmax.f32 %v2756, 0.0
        %v2799 = vmax.f32 %v2761, 0.0
        %v2800 = vmax.f32 %v2764, 0.0
        %v2801 = vmax.f32 %v2769, 0.0
        %v2802 = vmax.f32 %v2772, 0.0
        %v2803 = vmax.f32 %v2777, 0.0
        %v2804 = vmax.f32 %v2780, 0.0
        %v2805 = vmax.f32 %v2785, 0.0
        %v2806 = vmax.f32 %v2788, 0.0
        %v2807 = vpack.c.bf16 %v2792, %v2791
        %v2808 = vpack.c.bf16 %v2794, %v2793
        %v2809 = vpack.c.bf16 %v2796, %v2795
        %v2810 = vpack.c.bf16 %v2798, %v2797
        %v2811 = vpack.c.bf16 %v2800, %v2799
        %v2812 = vpack.c.bf16 %v2802, %v2801
        %v2813 = vpack.c.bf16 %v2804, %v2803
        %v2814 = vpack.c.bf16 %v2806, %v2805
        %v2823 = vunpack.c.l.b16 %v2807
        %v2824 = vunpack.c.h.b16 %v2807
        %v2825 = vunpack.c.l.b16 %v2808
        %v2826 = vunpack.c.h.b16 %v2808
        %v2827 = vunpack.c.l.b16 %v2809
        %v2828 = vunpack.c.h.b16 %v2809
        %v2829 = vunpack.c.l.b16 %v2810
        %v2830 = vunpack.c.h.b16 %v2810
        %v2831 = vunpack.c.l.b16 %v2811
        %v2832 = vunpack.c.h.b16 %v2811
        %v2833 = vunpack.c.l.b16 %v2812
        %v2834 = vunpack.c.h.b16 %v2812
        %v2835 = vunpack.c.l.b16 %v2813
        %v2836 = vunpack.c.h.b16 %v2813
        %v2837 = vunpack.c.l.b16 %v2814
        %v2838 = vunpack.c.h.b16 %v2814
        %v2839 = vpack.c.b16 %v2823, %v2823
        %v2840 = vpack.c.b16 %v2824, %v2824
        %v2841 = vpack.c.b16 %v2825, %v2825
        %v2842 = vpack.c.b16 %v2826, %v2826
        %v2843 = vpack.c.b16 %v2827, %v2827
        %v2844 = vpack.c.b16 %v2828, %v2828
        %v2845 = vpack.c.b16 %v2829, %v2829
        %v2846 = vpack.c.b16 %v2830, %v2830
        %v2847 = vpack.c.b16 %v2831, %v2831
        %v2848 = vpack.c.b16 %v2832, %v2832
        %v2849 = vpack.c.b16 %v2833, %v2833
        %v2850 = vpack.c.b16 %v2834, %v2834
        %v2851 = vpack.c.b16 %v2835, %v2835
        %v2852 = vpack.c.b16 %v2836, %v2836
        %v2853 = vpack.c.b16 %v2837, %v2837
        %v2854 = vpack.c.b16 %v2838, %v2838
        %2871 = vst [vmem:[%s242 + $0x8] sm:$0xf] %v2839
        %2872 = vst [vmem:[%s242 + $0x1c] sm:$0xf] %v2840
        %2873 = vst [vmem:[%s242 + $0x30] sm:$0xf] %v2841
        %2874 = vst [vmem:[%s242 + $0x44] sm:$0xf] %v2842
        %2875 = vst [vmem:[%s242 + $0x58] sm:$0xf] %v2843
        %2876 = vst [vmem:[%s242 + $0x6c] sm:$0xf] %v2844
        %2877 = vst [vmem:[%s242 + $0x80] sm:$0xf] %v2845
        %2878 = vst [vmem:[%s242 + $0x94] sm:$0xf] %v2846
        %2879 = vst [vmem:[%s242 + $0xa8] sm:$0xf] %v2847
        %2880 = vst [vmem:[%s242 + $0xbc] sm:$0xf] %v2848
        %2881 = vst [vmem:[%s242 + $0xd0] sm:$0xf] %v2849
        %2882 = vst [vmem:[%s242 + $0xe4] sm:$0xf] %v2850
        %2883 = vst [vmem:[%s242 + $0xf8] sm:$0xf] %v2851
        %2884 = vst [vmem:[%s242 + $0x10c] sm:$0xf] %v2852
        %2885 = vst [vmem:[%s242 + $0x120] sm:$0xf] %v2853
        %2886 = vst [vmem:[%s242 + $0x134] sm:$0xf] %v2854
        %v2887 = vld [vmem:[%s4 + $0x2] sm:$0x1]
        %v2889 = vlaneseq
        %v2890 = vshrl.u32 %v2889, 7
        %v2891 = vsub.s32 0, %v2890
        %v2892 = vrot.slane %v2887, %v2891
        %v2894 = vadd.f32 %v1023, %v2892
        %v2895 = vadd.f32 %v1027, %v2892
        %v2896 = vadd.f32 %v1033, %v2892
        %v2897 = vadd.f32 %v1037, %v2892
        %v2898 = vadd.f32 %v1043, %v2892
        %v2899 = vadd.f32 %v1047, %v2892
        %v2900 = vadd.f32 %v1053, %v2892
        %v2901 = vadd.f32 %v1057, %v2892
        %v2902 = vadd.f32 %v1063, %v2892
        %v2903 = vadd.f32 %v1067, %v2892
        %v2904 = vadd.f32 %v1073, %v2892
        %v2905 = vadd.f32 %v1077, %v2892
        %v2906 = vadd.f32 %v1083, %v2892
        %v2907 = vadd.f32 %v1087, %v2892
        %v2908 = vadd.f32 %v1093, %v2892
        %v2909 = vadd.f32 %v1097, %v2892
        %v2910 = vmax.f32 %v2894, 0.0
        %v2911 = vmax.f32 %v2895, 0.0
        %v2912 = vmax.f32 %v2896, 0.0
        %v2913 = vmax.f32 %v2897, 0.0
        %v2914 = vmax.f32 %v2898, 0.0
        %v2915 = vmax.f32 %v2899, 0.0
        %v2916 = vmax.f32 %v2900, 0.0
        %v2917 = vmax.f32 %v2901, 0.0
        %v2918 = vmax.f32 %v2902, 0.0
        %v2919 = vmax.f32 %v2903, 0.0
        %v2920 = vmax.f32 %v2904, 0.0
        %v2921 = vmax.f32 %v2905, 0.0
        %v2922 = vmax.f32 %v2906, 0.0
        %v2923 = vmax.f32 %v2907, 0.0
        %v2924 = vmax.f32 %v2908, 0.0
        %v2925 = vmax.f32 %v2909, 0.0
        %v2926 = vpack.c.bf16 %v2911, %v2910
        %v2927 = vpack.c.bf16 %v2913, %v2912
        %v2928 = vpack.c.bf16 %v2915, %v2914
        %v2929 = vpack.c.bf16 %v2917, %v2916
        %v2930 = vpack.c.bf16 %v2919, %v2918
        %v2931 = vpack.c.bf16 %v2921, %v2920
        %v2932 = vpack.c.bf16 %v2923, %v2922
        %v2933 = vpack.c.bf16 %v2925, %v2924
        %v2942 = vunpack.c.l.b16 %v2926
        %v2943 = vunpack.c.h.b16 %v2926
        %v2944 = vunpack.c.l.b16 %v2927
        %v2945 = vunpack.c.h.b16 %v2927
        %v2946 = vunpack.c.l.b16 %v2928
        %v2947 = vunpack.c.h.b16 %v2928
        %v2948 = vunpack.c.l.b16 %v2929
        %v2949 = vunpack.c.h.b16 %v2929
        %v2950 = vunpack.c.l.b16 %v2930
        %v2951 = vunpack.c.h.b16 %v2930
        %v2952 = vunpack.c.l.b16 %v2931
        %v2953 = vunpack.c.h.b16 %v2931
        %v2954 = vunpack.c.l.b16 %v2932
        %v2955 = vunpack.c.h.b16 %v2932
        %v2956 = vunpack.c.l.b16 %v2933
        %v2957 = vunpack.c.h.b16 %v2933
        %v2958 = vpack.c.b16 %v2942, %v2942
        %v2959 = vpack.c.b16 %v2943, %v2943
        %v2960 = vpack.c.b16 %v2944, %v2944
        %v2961 = vpack.c.b16 %v2945, %v2945
        %v2962 = vpack.c.b16 %v2946, %v2946
        %v2963 = vpack.c.b16 %v2947, %v2947
        %v2964 = vpack.c.b16 %v2948, %v2948
        %v2965 = vpack.c.b16 %v2949, %v2949
        %v2966 = vpack.c.b16 %v2950, %v2950
        %v2967 = vpack.c.b16 %v2951, %v2951
        %v2968 = vpack.c.b16 %v2952, %v2952
        %v2969 = vpack.c.b16 %v2953, %v2953
        %v2970 = vpack.c.b16 %v2954, %v2954
        %v2971 = vpack.c.b16 %v2955, %v2955
        %v2972 = vpack.c.b16 %v2956, %v2956
        %v2973 = vpack.c.b16 %v2957, %v2957
        %2990 = vst [vmem:[%s242 + $0xc] sm:$0xf] %v2958
        %2991 = vst [vmem:[%s242 + $0x20] sm:$0xf] %v2959
        %2992 = vst [vmem:[%s242 + $0x34] sm:$0xf] %v2960
        %2993 = vst [vmem:[%s242 + $0x48] sm:$0xf] %v2961
        %2994 = vst [vmem:[%s242 + $0x5c] sm:$0xf] %v2962
        %2995 = vst [vmem:[%s242 + $0x70] sm:$0xf] %v2963
        %2996 = vst [vmem:[%s242 + $0x84] sm:$0xf] %v2964
        %2997 = vst [vmem:[%s242 + $0x98] sm:$0xf] %v2965
        %2998 = vst [vmem:[%s242 + $0xac] sm:$0xf] %v2966
        %2999 = vst [vmem:[%s242 + $0xc0] sm:$0xf] %v2967
        %3000 = vst [vmem:[%s242 + $0xd4] sm:$0xf] %v2968
        %3001 = vst [vmem:[%s242 + $0xe8] sm:$0xf] %v2969
        %3002 = vst [vmem:[%s242 + $0xfc] sm:$0xf] %v2970
        %3003 = vst [vmem:[%s242 + $0x110] sm:$0xf] %v2971
        %3004 = vst [vmem:[%s242 + $0x124] sm:$0xf] %v2972
        %3005 = vst [vmem:[%s242 + $0x138] sm:$0xf] %v2973
        %v3006 = vld [vmem:[%s4 + $0x3] sm:$0x1]
        %v3008 = vlaneseq
        %v3009 = vshrl.u32 %v3008, 7
        %v3010 = vsub.s32 0, %v3009
        %v3011 = vrot.slane %v3006, %v3010
        %v3013 = vadd.f32 %v1134, %v3011
        %v3014 = vadd.f32 %v1137, %v3011
        %v3015 = vadd.f32 %v1142, %v3011
        %v3016 = vadd.f32 %v1145, %v3011
        %v3017 = vadd.f32 %v1150, %v3011
        %v3018 = vadd.f32 %v1153, %v3011
        %v3019 = vadd.f32 %v1158, %v3011
        %v3020 = vadd.f32 %v1161, %v3011
        %v3021 = vadd.f32 %v1166, %v3011
        %v3022 = vadd.f32 %v1169, %v3011
        %v3023 = vadd.f32 %v1174, %v3011
        %v3024 = vadd.f32 %v1177, %v3011
        %v3025 = vadd.f32 %v1182, %v3011
        %v3026 = vadd.f32 %v1185, %v3011
        %v3027 = vadd.f32 %v1190, %v3011
        %v3028 = vadd.f32 %v1193, %v3011
        %v3029 = vmax.f32 %v3013, 0.0
        %v3030 = vmax.f32 %v3014, 0.0
        %v3031 = vmax.f32 %v3015, 0.0
        %v3032 = vmax.f32 %v3016, 0.0
        %v3033 = vmax.f32 %v3017, 0.0
        %v3034 = vmax.f32 %v3018, 0.0
        %v3035 = vmax.f32 %v3019, 0.0
        %v3036 = vmax.f32 %v3020, 0.0
        %v3037 = vmax.f32 %v3021, 0.0
        %v3038 = vmax.f32 %v3022, 0.0
        %v3039 = vmax.f32 %v3023, 0.0
        %v3040 = vmax.f32 %v3024, 0.0
        %v3041 = vmax.f32 %v3025, 0.0
        %v3042 = vmax.f32 %v3026, 0.0
        %v3043 = vmax.f32 %v3027, 0.0
        %v3044 = vmax.f32 %v3028, 0.0
        %v3045 = vpack.c.bf16 %v3030, %v3029
        %v3046 = vpack.c.bf16 %v3032, %v3031
        %v3047 = vpack.c.bf16 %v3034, %v3033
        %v3048 = vpack.c.bf16 %v3036, %v3035
        %v3049 = vpack.c.bf16 %v3038, %v3037
        %v3050 = vpack.c.bf16 %v3040, %v3039
        %v3051 = vpack.c.bf16 %v3042, %v3041
        %v3052 = vpack.c.bf16 %v3044, %v3043
        %v3061 = vunpack.c.l.b16 %v3045
        %v3062 = vunpack.c.h.b16 %v3045
        %v3063 = vunpack.c.l.b16 %v3046
        %v3064 = vunpack.c.h.b16 %v3046
        %v3065 = vunpack.c.l.b16 %v3047
        %v3066 = vunpack.c.h.b16 %v3047
        %v3067 = vunpack.c.l.b16 %v3048
        %v3068 = vunpack.c.h.b16 %v3048
        %v3069 = vunpack.c.l.b16 %v3049
        %v3070 = vunpack.c.h.b16 %v3049
        %v3071 = vunpack.c.l.b16 %v3050
        %v3072 = vunpack.c.h.b16 %v3050
        %v3073 = vunpack.c.l.b16 %v3051
        %v3074 = vunpack.c.h.b16 %v3051
        %v3075 = vunpack.c.l.b16 %v3052
        %v3076 = vunpack.c.h.b16 %v3052
        %v3077 = vpack.c.b16 %v3061, %v3061
        %v3078 = vpack.c.b16 %v3062, %v3062
        %v3079 = vpack.c.b16 %v3063, %v3063
        %v3080 = vpack.c.b16 %v3064, %v3064
        %v3081 = vpack.c.b16 %v3065, %v3065
        %v3082 = vpack.c.b16 %v3066, %v3066
        %v3083 = vpack.c.b16 %v3067, %v3067
        %v3084 = vpack.c.b16 %v3068, %v3068
        %v3085 = vpack.c.b16 %v3069, %v3069
        %v3086 = vpack.c.b16 %v3070, %v3070
        %v3087 = vpack.c.b16 %v3071, %v3071
        %v3088 = vpack.c.b16 %v3072, %v3072
        %v3089 = vpack.c.b16 %v3073, %v3073
        %v3090 = vpack.c.b16 %v3074, %v3074
        %v3091 = vpack.c.b16 %v3075, %v3075
        %v3092 = vpack.c.b16 %v3076, %v3076
        %3109 = vst [vmem:[%s242 + $0x10] sm:$0xf] %v3077
        %3110 = vst [vmem:[%s242 + $0x24] sm:$0xf] %v3078
        %3111 = vst [vmem:[%s242 + $0x38] sm:$0xf] %v3079
        %3112 = vst [vmem:[%s242 + $0x4c] sm:$0xf] %v3080
        %3113 = vst [vmem:[%s242 + $0x60] sm:$0xf] %v3081
        %3114 = vst [vmem:[%s242 + $0x74] sm:$0xf] %v3082
        %3115 = vst [vmem:[%s242 + $0x88] sm:$0xf] %v3083
        %3116 = vst [vmem:[%s242 + $0x9c] sm:$0xf] %v3084
        %3117 = vst [vmem:[%s242 + $0xb0] sm:$0xf] %v3085
        %3118 = vst [vmem:[%s242 + $0xc4] sm:$0xf] %v3086
        %3119 = vst [vmem:[%s242 + $0xd8] sm:$0xf] %v3087
        %3120 = vst [vmem:[%s242 + $0xec] sm:$0xf] %v3088
        %3121 = vst [vmem:[%s242 + $0x100] sm:$0xf] %v3089
        %3122 = vst [vmem:[%s242 + $0x114] sm:$0xf] %v3090
        %3123 = vst [vmem:[%s242 + $0x128] sm:$0xf] %v3091
        %3124 = vst [vmem:[%s242 + $0x13c] sm:$0xf] %v3092
        %s3125 = sand.u32 %s156, 1
        %s3126 = scalar_lea.sflag [#allocation5], %s3125
        %s3127 = sand.u32 %s156, 1
        %s3128 = smul.addr %s3127, 320
        %s3129 = scalar_lea.vmem [#allocation4], %s3128
        // Predicated region
        $region45: #{_lambda_.1} parent=39 // pred_check
          %p3130 = pneg %p166
        $region46: #{_lambda_.1} parent=39 // pred_check_branch
          %3132 = sbr.rel (%p3130) target = $region48
        $region47: #{_lambda_.1} parent=39 // pred_region
          %s3133 = smul.u32 8, %s24
          %s3135 = ssub.s32 5120, 5120
          %3136 = vsyncadd %s3126, %s3135
          %s3137 = smul.addr %s3133, 10
          %s3138 = smul.addr %s23, 160
          %s3139 = sadd.s32 %s3137, %s3138
          %s3140 = smul.addr %s3139, 64
          %s3141 = scalar_lea.hbm %s5, %s3140
          %s3142 = sshll.u32 %s3129, 4
          %s3143 = int_to_ptr.vmem [resolvable:$true] %s3142
          %3148 = dma.vmem_to_hbm [thread:$0]  %s3143, 5120, %s3141, %s3126, 320, 320, 20
        $region48: #{_lambda_.1} parent=39 // pred_fallthru
          _
      $region40: #{_lambda_.1} parent=5 // pred_fallthru
        _
      %p3149 = scmp.le.s32.totalorder 2, %s14
      // Predicated region
      $region49: #{_lambda_.1} parent=5 // pred_check
        %p3150 = pneg %p3149
      $region50: #{_lambda_.1} parent=5 // pred_check_branch
        %3152 = sbr.rel (%p3150) target = $region52
      $region51: #{_lambda_.1} parent=5 // pred_region
        %s3153 = ssub.s32 %s14, 2
        // Predicated region
        $region53: #{_lambda_.1} parent=51 // pred_check
          %p3154 = pneg %p172
        $region54: #{_lambda_.1} parent=51 // pred_check_branch
          %3156 = sbr.rel (%p3154) target = $region56
        $region55: #{_lambda_.1} parent=51 // pred_region
          %s3157 = sand.u32 %s157, 1
          %s3158 = scalar_lea.sflag [#allocation5], %s3157
          %s3159 = sand.u32 %s157, 1
          %s3160 = smul.addr %s3159, 320
          %s3161 = scalar_lea.vmem [#allocation4], %s3160
          %3162 = dma.done %s3158, 5120
        $region56: #{_lambda_.1} parent=51 // pred_fallthru
          _
      $region52: #{_lambda_.1} parent=5 // pred_fallthru
        _
    $region6: #{_lambda_.1} parent=1 // loop_footer
      %s18 = sadd.s32 1, %s14
    $region7: #{_lambda_.1} parent=1 // loop_footer_branch
      %13 = sbr.rel target = $region3
    $region8: #{_lambda_.1} parent=1 // loop_exit
      _
    %3163 = vsyncpa [#allocation5], 1
    %s3164 = scalar_lea.sflag [#allocation5], 1
    %3165 = vsyncpa %s3164, 1

</llo_original>
